<compile_context>
chip_gen: v7x
topology: tpu7x:2x2x1
jax: 0.10.0
libtpu: 0.0.40
codegen_flags: <defaults>
</compile_context>

<pallas_src>
import numpy as np
import jax
import jax.numpy as jnp
from jax import lax
from jax.experimental import pallas as pl
from jax.experimental.pallas import tpu as pltpu


def _ceil_to(v, m):
    return -(-v // m) * m


def _pick_row_group(ch, w, target_lanes=128):
    """Smallest divisor g of ch with g*w >= target_lanes (lane-dense blocks)."""
    if w >= target_lanes:
        return 1
    want = -(-target_lanes // w)
    for d in range(1, ch + 1):
        if ch % d == 0 and d >= want:
            return d
    return ch  # fold everything (always divides); only hit for tiny/awkward ch


def _build_scatter_matrix(g, w):
    """S[(2k+l)*gW + q*W + j, q*4W + k*2W + 2j + l] = 0.5; exactly one nonzero per col.

    Folds the /2 Haar scaling and the 2x2 pixel-shuffle column interleave into a
    single matrix so the kernel needs exactly one MXU dot per block.
    """
    n = 4 * g * w
    s = np.zeros((n, n), dtype=np.float32)
    for t in range(4):                       # t = 2*k + l
        k, l = divmod(t, 2)
        for q in range(g):
            for j in range(w):
                s[t * g * w + q * w + j, q * 4 * w + k * 2 * w + 2 * j + l] = 0.5
    return s


def _iwt_kernel(x_ref, s_ref, o_ref, cat_ref):
    # x_ref : (1, 4, R, gW)  four subbands of R grouped rows (native dtype)
    # s_ref : (4gW, 4gW)     constant scatter/scale matrix (resident across steps)
    # o_ref : (1, R, 4gW)    pixel-shuffled output rows (f32)
    # cat_ref: (R, 4gW)      f32 scratch holding [a00 | a01 | a10 | a11]
    gw = x_ref.shape[3]
    x1 = x_ref[0, 0].astype(jnp.float32)
    x2 = x_ref[0, 1].astype(jnp.float32)
    x3 = x_ref[0, 2].astype(jnp.float32)
    x4 = x_ref[0, 3].astype(jnp.float32)

    # 8 VPU adds; the /2 is folded into the matrix.
    s12 = x1 + x2
    d12 = x1 - x2
    s34 = x3 + x4
    d34 = x3 - x4
    cat_ref[:, 0 * gw:1 * gw] = d12 - d34    # (k=0,l=0): x1-x2-x3+x4
    cat_ref[:, 1 * gw:2 * gw] = s12 - s34    # (k=0,l=1): x1+x2-x3-x4
    cat_ref[:, 2 * gw:3 * gw] = d12 + d34    # (k=1,l=0): x1-x2+x3-x4
    cat_ref[:, 3 * gw:4 * gw] = s12 + s34    # (k=1,l=1): x1+x2+x3+x4

    # Single MXU dot does the column interleave + scaling.  One nonzero per output
    # column, so HIGHEST precision keeps the f32 result exact.
    o_ref[0] = jnp.dot(cat_ref[...], s_ref[...],
                       precision=lax.Precision.HIGHEST,
                       preferred_element_type=jnp.float32)


def iwt(x, *, max_block_bytes=12 << 20, vmem_limit_bytes=48 << 20):
    """x: (B, 4*C, H, W) -> (B, C, 2H, 2W) float32; matches the PyTorch iwt_init."""
    B, C4, H, W = x.shape
    assert C4 % 4 == 0, "channel count must be a multiple of 4"
    C = C4 // 4
    CH = C * H

    # Row-grouping so both input (g*W lanes) and output (4*g*W lanes) are lane-dense.
    g = _pick_row_group(CH, W)
    CHg = CH // g
    gw = g * W

    # Free views (no HBM pass): subband gather via the leading "4" dim, g image rows
    # folded into lanes.  Input keeps its native dtype (cast happens in-kernel).
    xv = x.reshape(B, 4, CHg, gw)
    s_mat = jnp.asarray(_build_scatter_matrix(g, W))

    # Block sizing: biggest R (multiple of 8, or full extent) such that
    #   in-block <= max_block_bytes  and  2*(in+out) + scratch + matrix <= vmem limit.
    itemsize = x.dtype.itemsize
    lane_in = _ceil_to(gw, 128)
    lane_out = _ceil_to(4 * gw, 128)
    s_bytes = _ceil_to(4 * gw, 8) * lane_out * 4
    per_row_blk = 4 * lane_in * itemsize + lane_out * 4          # in + out per padded row
    per_row_all = 2 * per_row_blk + lane_out * 4                 # + double-buffer + scratch
    avail = vmem_limit_bytes - s_bytes - (2 << 20)
    r_cap = min(max_block_bytes // per_row_blk,
                max(avail, per_row_all) // per_row_all)
    R = min(CHg, max(8, (r_cap // 8) * 8))
    NR = pl.cdiv(CHg, R)                                         # ragged last block is OK

    out_elems = B * CH * 4 * W
    cost = pl.CostEstimate(
        flops=2 * out_elems * 4 * gw + 8 * out_elems,
        transcendentals=0,
        bytes_accessed=x.size * itemsize + out_elems * 4)

    out = pl.pallas_call(
        _iwt_kernel,
        out_shape=jax.ShapeDtypeStruct((B, CHg, 4 * gw), jnp.float32),
        grid=(B, NR),
        in_specs=[
            pl.BlockSpec((1, 4, R, gw), lambda b, n: (b, 0, n, 0)),
            # Constant block index -> DMA'd once, stays resident in VMEM.
            pl.BlockSpec((4 * gw, 4 * gw), lambda b, n: (0, 0)),
        ],
        out_specs=pl.BlockSpec((1, R, 4 * gw), lambda b, n: (b, n, 0)),
        scratch_shapes=[pltpu.VMEM((R, 4 * gw), jnp.float32)],
        compiler_params=pltpu.CompilerParams(
            dimension_semantics=("parallel", "parallel"),
            vmem_limit_bytes=vmem_limit_bytes),
        cost_estimate=cost,
    )(xv, s_mat)

    # (B, CHg, 4gW) has exactly the memory layout of (B, C, 2H, 2W): free reshape.
    return out.reshape(B, C, 2 * H, 2 * W)


def iwt_reference(x):
    """Pure-JAX transcription of the PyTorch iwt_init for verification."""
    B, C4, H, W = x.shape
    C = C4 // 4
    x = x.astype(jnp.float32)
    x1 = x[:, 0 * C:1 * C] / 2
    x2 = x[:, 1 * C:2 * C] / 2
    x3 = x[:, 2 * C:3 * C] / 2
    x4 = x[:, 3 * C:4 * C] / 2
    h = jnp.zeros((B, C, 2 * H, 2 * W), jnp.float32)
    h = h.at[:, :, 0::2, 0::2].set(x1 - x2 - x3 + x4)
    h = h.at[:, :, 1::2, 0::2].set(x1 - x2 + x3 - x4)
    h = h.at[:, :, 0::2, 1::2].set(x1 + x2 - x3 - x4)
    h = h.at[:, :, 1::2, 1::2].set(x1 + x2 + x3 + x4)
    return h


if __name__ == "__main__":
    key = jax.random.PRNGKey(0)
    # B=2, in_channel=16 (= 4*C with C=4), 16x16 spatial (output: 2, 4, 32, 32)
    x = jax.random.normal(key, (2, 16, 16, 16), dtype=jnp.float32)

    h = iwt(x)
    h = jax.block_until_ready(h)

    ref = iwt_reference(x)
    assert h.shape == (2, 4, 32, 32), h.shape
    err = float(jnp.max(jnp.abs(h - ref)))
    assert jnp.allclose(h, ref, atol=1e-5, rtol=1e-5), f"mismatch vs reference, max abs err={err}"

    print("KERNEL_OK")
</pallas_src>

<mosaic_0001>
module attributes {stable_mosaic.version = 11 : i64} {
  func.func @_iwt_kernel(%arg0: i32, %arg1: i32, %arg2: memref<1x4x8x128xf32, #tpu.memory_space<vmem>>, %arg3: memref<512x512xf32, #tpu.memory_space<vmem>>, %arg4: memref<1x8x512xf32, #tpu.memory_space<vmem>>, %arg5: memref<8x512xf32, #tpu.memory_space<vmem>>) attributes {dimension_semantics = [#tpu.dimension_semantics<parallel>, #tpu.dimension_semantics<parallel>], iteration_bounds = array<i64: 2, 1>, scalar_prefetch = 0 : i64, scratch_operands = 1 : i64, tpu.core_type = #tpu.core_type<tc>, window_params = [{transform_indices = @transform_0, window_bounds = array<i64: 1, 4, 8, 128>}, {pipeline_mode = #tpu.pipeline_mode<synchronous>, transform_indices = @transform_1, window_bounds = array<i64: 512, 512>}, {transform_indices = @transform_2, window_bounds = array<i64: 1, 8, 512>}]} {
    %c0 = arith.constant 0 : index
    %c0_0 = arith.constant 0 : index
    %c0_1 = arith.constant 0 : index
    %c0_2 = arith.constant 0 : index
    %0 = vector.load %arg2[%c0, %c0_0, %c0_1, %c0_2] : memref<1x4x8x128xf32, #tpu.memory_space<vmem>>, vector<1x1x8x128xf32>
    %1 = vector.shape_cast %0 : vector<1x1x8x128xf32> to vector<8x128xf32>
    %c0_3 = arith.constant 0 : index
    %c1 = arith.constant 1 : index
    %c0_4 = arith.constant 0 : index
    %c0_5 = arith.constant 0 : index
    %2 = vector.load %arg2[%c0_3, %c1, %c0_4, %c0_5] : memref<1x4x8x128xf32, #tpu.memory_space<vmem>>, vector<1x1x8x128xf32>
    %3 = vector.shape_cast %2 : vector<1x1x8x128xf32> to vector<8x128xf32>
    %c0_6 = arith.constant 0 : index
    %c2 = arith.constant 2 : index
    %c0_7 = arith.constant 0 : index
    %c0_8 = arith.constant 0 : index
    %4 = vector.load %arg2[%c0_6, %c2, %c0_7, %c0_8] : memref<1x4x8x128xf32, #tpu.memory_space<vmem>>, vector<1x1x8x128xf32>
    %5 = vector.shape_cast %4 : vector<1x1x8x128xf32> to vector<8x128xf32>
    %c0_9 = arith.constant 0 : index
    %c3 = arith.constant 3 : index
    %c0_10 = arith.constant 0 : index
    %c0_11 = arith.constant 0 : index
    %6 = vector.load %arg2[%c0_9, %c3, %c0_10, %c0_11] : memref<1x4x8x128xf32, #tpu.memory_space<vmem>>, vector<1x1x8x128xf32>
    %7 = vector.shape_cast %6 : vector<1x1x8x128xf32> to vector<8x128xf32>
    %8 = arith.addf %1, %3 : vector<8x128xf32>
    %9 = arith.subf %1, %3 : vector<8x128xf32>
    %10 = arith.addf %5, %7 : vector<8x128xf32>
    %11 = arith.subf %5, %7 : vector<8x128xf32>
    %12 = arith.subf %9, %11 : vector<8x128xf32>
    %c0_12 = arith.constant 0 : index
    %c0_13 = arith.constant 0 : index
    %13 = vector.load %arg5[%c0_12, %c0_13] : memref<8x512xf32, #tpu.memory_space<vmem>>, vector<8x128xf32>
    tpu.vector_store %arg5[%c0_12, %c0_13], %12 {strides = array<i32>} : memref<8x512xf32, #tpu.memory_space<vmem>>, vector<8x128xf32>,
    %14 = arith.subf %8, %10 : vector<8x128xf32>
    %c0_14 = arith.constant 0 : index
    %c128 = arith.constant 128 : index
    %15 = vector.load %arg5[%c0_14, %c128] : memref<8x512xf32, #tpu.memory_space<vmem>>, vector<8x128xf32>
    tpu.vector_store %arg5[%c0_14, %c128], %14 {strides = array<i32>} : memref<8x512xf32, #tpu.memory_space<vmem>>, vector<8x128xf32>,
    %16 = arith.addf %9, %11 : vector<8x128xf32>
    %c0_15 = arith.constant 0 : index
    %c256 = arith.constant 256 : index
    %17 = vector.load %arg5[%c0_15, %c256] : memref<8x512xf32, #tpu.memory_space<vmem>>, vector<8x128xf32>
    tpu.vector_store %arg5[%c0_15, %c256], %16 {strides = array<i32>} : memref<8x512xf32, #tpu.memory_space<vmem>>, vector<8x128xf32>,
    %18 = arith.addf %8, %10 : vector<8x128xf32>
    %c0_16 = arith.constant 0 : index
    %c384 = arith.constant 384 : index
    %19 = vector.load %arg5[%c0_16, %c384] : memref<8x512xf32, #tpu.memory_space<vmem>>, vector<8x128xf32>
    tpu.vector_store %arg5[%c0_16, %c384], %18 {strides = array<i32>} : memref<8x512xf32, #tpu.memory_space<vmem>>, vector<8x128xf32>,
    %c0_17 = arith.constant 0 : index
    %c0_18 = arith.constant 0 : index
    %20 = vector.load %arg5[%c0_17, %c0_18] : memref<8x512xf32, #tpu.memory_space<vmem>>, vector<8x512xf32>
    %c0_19 = arith.constant 0 : index
    %c0_20 = arith.constant 0 : index
    %21 = vector.load %arg3[%c0_19, %c0_20] : memref<512x512xf32, #tpu.memory_space<vmem>>, vector<512x512xf32>
    %cst = arith.constant dense<0.000000e+00> : vector<8x512xf32>
    %22 = tpu.matmul %20, %21, %cst {dimension_numbers = #tpu.dot_dimension_numbers<[1], [0], [0], [1], [0, 0, 1, 1], [], []>, precision = #tpu.contract_precision<fp32>} : vector<8x512xf32>, vector<512x512xf32>, vector<8x512xf32> -> vector<8x512xf32>
    %c0_21 = arith.constant 0 : index
    %c0_22 = arith.constant 0 : index
    %c0_23 = arith.constant 0 : index
    %23 = vector.load %arg4[%c0_21, %c0_22, %c0_23] : memref<1x8x512xf32, #tpu.memory_space<vmem>>, vector<1x8x512xf32>
    %24 = vector.shape_cast %23 : vector<1x8x512xf32> to vector<8x512xf32>
    %25 = vector.shape_cast %22 : vector<8x512xf32> to vector<1x8x512xf32>
    tpu.vector_store %arg4[%c0_21, %c0_22, %c0_23], %25 {strides = array<i32>} : memref<1x8x512xf32, #tpu.memory_space<vmem>>, vector<1x8x512xf32>,
    return
  }
  func.func @transform_0(%arg0: i32, %arg1: i32) -> (i32, i32, i32, i32) {
    %c0_i32 = arith.constant 0 : i32
    %c0_i32_0 = arith.constant 0 : i32
    %c0_i32_1 = arith.constant 0 : i32
    return %arg0, %c0_i32, %arg1, %c0_i32_0 : i32, i32, i32, i32
  }
  func.func @transform_1(%arg0: i32, %arg1: i32) -> (i32, i32) {
    %c0_i32 = arith.constant 0 : i32
    %c0_i32_0 = arith.constant 0 : i32
    %c0_i32_1 = arith.constant 0 : i32
    return %c0_i32, %c0_i32_0 : i32, i32
  }
  func.func @transform_2(%arg0: i32, %arg1: i32) -> (i32, i32, i32) {
    %c0_i32 = arith.constant 0 : i32
    %c0_i32_0 = arith.constant 0 : i32
    return %arg0, %arg1, %c0_i32 : i32, i32, i32
  }
}

</mosaic_0001>

<llo_original>
// kernel: tpu_custom_call.1
$region0: #{tpu_custom_call.1}
  #allocation0 [shape = 'u32[]', space=smem, size = 0x4, offset = 0x4, fixed_abs, tag = 'smem constant byte address 0x4 - core index']
  #allocation1 [shape = 'u32[144,128]{1,0:T(1,128)}', space=vmem, size = 0x12000, scoped, tag = 'internal scratch']
  #allocation2 [shape = 'f32[8,512]{1,0:T(8,128)}', space=vmem, size = 0x4000, scoped, tag = 'scratch operand']
  %s0 = inlined_call_operand.hbm [shape: f32[2,4,8,128], index: 0, kind: input, shape index: {}]
  %s1 = inlined_call_operand.hbm [shape: f32[512,512], index: 1, kind: input, shape index: {}]
  %s2 = inlined_call_operand.hbm [shape: f32[2,8,512], index: 2, kind: output, shape index: {}]
  %s3 = sld [smem:[#allocation0]]
  $region49: #{tpu_custom_call.1} parent=0
    _
  %s5 = ssub.s32 1, %s3
  %s6 = scalar_select 0, %s5, %s3
  $region1: #{tpu_custom_call.1} parent=0
    #allocation3 [shape = 'u8[32768]{0}', space=vmem, size = 0x8000, scoped, tag = 'input window, operand 0']
    #allocation4 [shape = 's32[2]{0}', space=sflag, size = 0x8, scoped, tag = 'scoped memory for tpu_custom_call.1']
    #allocation5 [shape = 's32[2]{0}', space=sflag, size = 0x8, scoped, tag = 'scoped memory for tpu_custom_call.1']
    #allocation6 [shape = 'u8[1048576]{0}', space=vmem, size = 0x100000, scoped, tag = 'input window, operand 1, single buffered']
    #allocation7 [shape = 's32[1]{0}', space=sflag, size = 0x4, scoped, tag = 'scoped memory for tpu_custom_call.1']
    #allocation8 [shape = 'u8[32768]{0}', space=vmem, size = 0x8000, scoped, tag = 'output window, operand 0']
    %7 = vsyncpa [#allocation4], 0
    %s8 = scalar_lea.sflag [#allocation4], 1
    %9 = vsyncpa %s8, 0
    %10 = vsyncpa [#allocation7], 0
    %11 = vsyncpa [#allocation5], 0
    %s12 = scalar_lea.sflag [#allocation5], 1
    %13 = vsyncpa %s12, 0
    loop: start=0, step=1, limit=4
    $region2: #{tpu_custom_call.1} parent=1 // loop_pre_header
      _
    $region3: #{tpu_custom_call.1} parent=1 // loop_header
      %s15 = sphi 0, %s19
      %p16 = scmp.ge.s32.totalorder %s15, 4
      %s22 = sphi 0, %s34
      %s23 = sphi 0, %s30
      %s24 = sphi 0, %s22
      %s25 = sphi 0, %s23
      %s26 = sphi 0, %s24
      %s27 = sphi 0, %s25
      %s39 = sphi 0, %s41
      %s42 = sphi 0, %s39
      %s43 = sphi 0, %s42
      %s59 = sphi 0, %s43
      %s63 = sphi 0, %s63
      %s65 = sphi 0, %s63
      %s66 = sphi 0, %s65
      %s80 = sphi 0, %s66
      %s88 = sphi 0, %s90
      %s91 = sphi 0, %s88
      %s92 = sphi 0, %s91
      %s108 = sphi 0, %s92
    $region4: #{tpu_custom_call.1} parent=1 // loop_header_branch
      %18 = sbr.rel (%p16) target = $region8
    $region5: #{tpu_custom_call.1} parent=1 // loop_body
      %s20 = ssub.s32 %s15, 1
      %s21 = ssub.s32 %s15, 2
      %s28 = sadd.s32 1, %s23
      %p29 = scmp.ge.s32.totalorder %s28, 1
      %s30 = scalar_select %p29, 0, %s28
      %s31 = sadd.s32 1, %s22
      %s32 = scalar_select %p29, %s31, %s22
      %p33 = scmp.ge.s32.totalorder %s32, 2
      %s34 = scalar_select %p33, 0, %s32
      %s35 = ssub.s32 %s22, %s34
      %s36 = ssub.s32 %s23, %s30
      %s37 = sor.u32 %s35, %s36
      %p38 = scmp.eq.s32.totalorder %s37, 0
      %s40 = sadd.s32 %s39, 1
      %s41 = scalar_select %p38, %s39, %s40
      %p44 = pneg %p38
      %p45 = scmp.eq.s32.totalorder %s15, 1
      %p46 = por %p44, %p45
      %p47 = scmp.ne.s32.totalorder %s39, %s42
      %p48 = scmp.eq.s32.totalorder %s15, 0
      %p49 = por %p47, %p48
      %p50 = scmp.ne.s32.totalorder %s39, %s42
      %p51 = scmp.eq.s32.totalorder %s20, 1
      %p52 = por %p50, %p51
      %p53 = scmp.ne.s32.totalorder %s42, %s43
      %p54 = scmp.eq.s32.totalorder %s20, 0
      %p55 = por %p53, %p54
      %p56 = scmp.ne.s32.totalorder %s42, %s43
      %p57 = scmp.eq.s32.totalorder %s21, 1
      %p58 = por %p56, %p57
      %p60 = scmp.ne.s32.totalorder %s43, %s59
      %p61 = scmp.eq.s32.totalorder %s21, 0
      %p62 = por %p60, %p61
      %s64 = sadd.s32 %s63, 1
      %p67 = scmp.eq.s32.totalorder %s15, 1
      %p68 = scmp.ne.s32.totalorder %s63, %s65
      %p69 = scmp.eq.s32.totalorder %s15, 0
      %p70 = por %p68, %p69
      %p71 = scmp.ne.s32.totalorder %s63, %s65
      %p72 = scmp.eq.s32.totalorder %s20, 1
      %p73 = por %p71, %p72
      %p74 = scmp.ne.s32.totalorder %s65, %s66
      %p75 = scmp.eq.s32.totalorder %s20, 0
      %p76 = por %p74, %p75
      %p77 = scmp.ne.s32.totalorder %s65, %s66
      %p78 = scmp.eq.s32.totalorder %s21, 1
      %p79 = por %p77, %p78
      %p81 = scmp.ne.s32.totalorder %s66, %s80
      %p82 = scmp.eq.s32.totalorder %s21, 0
      %p83 = por %p81, %p82
      %s84 = ssub.s32 %s22, %s34
      %s85 = ssub.s32 %s23, %s30
      %s86 = sor.u32 %s84, %s85
      %p87 = scmp.eq.s32.totalorder %s86, 0
      %s89 = sadd.s32 %s88, 1
      %s90 = scalar_select %p87, %s88, %s89
      %p93 = pneg %p87
      %p94 = scmp.eq.s32.totalorder %s15, 1
      %p95 = por %p93, %p94
      %p96 = scmp.ne.s32.totalorder %s88, %s91
      %p97 = scmp.eq.s32.totalorder %s15, 0
      %p98 = por %p96, %p97
      %p99 = scmp.ne.s32.totalorder %s88, %s91
      %p100 = scmp.eq.s32.totalorder %s20, 1
      %p101 = por %p99, %p100
      %p102 = scmp.ne.s32.totalorder %s91, %s92
      %p103 = scmp.eq.s32.totalorder %s20, 0
      %p104 = por %p102, %p103
      %p105 = scmp.ne.s32.totalorder %s91, %s92
      %p106 = scmp.eq.s32.totalorder %s21, 1
      %p107 = por %p105, %p106
      %p109 = scmp.ne.s32.totalorder %s92, %s108
      %p110 = scmp.eq.s32.totalorder %s21, 0
      %p111 = por %p109, %p110
      %p112 = scmp.le.s32.totalorder 1, %s15
      %p113 = scmp.lt.s32.totalorder %s15, 3
      %p114 = pnand %p112, %p113
      %p115 = pneg %p114
      // Predicated region
      $region9: #{tpu_custom_call.1} parent=5 // pred_check
        _
      $region10: #{tpu_custom_call.1} parent=5 // pred_check_branch
        %117 = sbr.rel (%p114) target = $region12
      $region11: #{tpu_custom_call.1} parent=5 // pred_region
        %s118 = ssub.s32 %s15, 1
        // Predicated region
        $region13: #{tpu_custom_call.1} parent=11 // pred_check
          %p119 = pneg %p76
        $region14: #{tpu_custom_call.1} parent=11 // pred_check_branch
          %121 = sbr.rel (%p119) target = $region16
        $region15: #{tpu_custom_call.1} parent=11 // pred_region
          %s123 = ssub.s32 32768, 32768
          %124 = vsyncadd [#allocation7], %s123
          %s125 = sshll.u32 [#allocation6], 4
          %s126 = int_to_ptr.vmem [resolvable:$true] %s125
          %131 = dma.hbm_to_vmem [thread:$0]  %s1, 32768, %s126, [#allocation7], 512, 512, 32
        $region16: #{tpu_custom_call.1} parent=11 // pred_fallthru
          _
      $region12: #{tpu_custom_call.1} parent=5 // pred_fallthru
        _
      %p132 = scmp.lt.s32.totalorder %s15, 2
      // Predicated region
      $region17: #{tpu_custom_call.1} parent=5 // pred_check
        %p133 = pneg %p132
      $region18: #{tpu_custom_call.1} parent=5 // pred_check_branch
        %135 = sbr.rel (%p133) target = $region20
      $region19: #{tpu_custom_call.1} parent=5 // pred_region
        // Predicated region
        $region21: #{tpu_custom_call.1} parent=19 // pred_check
          %p136 = pneg %p49
        $region22: #{tpu_custom_call.1} parent=19 // pred_check_branch
          %138 = sbr.rel (%p136) target = $region24
        $region23: #{tpu_custom_call.1} parent=19 // pred_region
          %s139 = sand.u32 %s39, 1
          %s140 = scalar_lea.sflag [#allocation4], %s139
          %s141 = sand.u32 %s39, 1
          %s142 = smul.addr %s141, 32
          %s143 = scalar_lea.vmem [#allocation3], %s142
          %s145 = ssub.s32 512, 512
          %146 = vsyncadd %s140, %s145
          %s147 = smul.addr %s22, 4
          %s148 = sadd.s32 %s23, %s147
          %s149 = smul.addr %s148, 128
          %s150 = scalar_lea.hbm %s0, %s149
          %s151 = sshll.u32 %s143, 4
          %s152 = int_to_ptr.vmem [resolvable:$true] %s151
          %157 = dma.hbm_to_vmem [thread:$0]  %s150, 512, %s152, %s140, 128, 128, 8
        $region24: #{tpu_custom_call.1} parent=19 // pred_fallthru
          _
      $region20: #{tpu_custom_call.1} parent=5 // pred_fallthru
        _
      %p158 = scmp.le.s32.totalorder 1, %s15
      %p159 = scmp.lt.s32.totalorder %s15, 3
      %p160 = pnand %p158, %p159
      %p161 = pneg %p160
      // Predicated region
      $region25: #{tpu_custom_call.1} parent=5 // pred_check
        _
      $region26: #{tpu_custom_call.1} parent=5 // pred_check_branch
        %163 = sbr.rel (%p160) target = $region28
      $region27: #{tpu_custom_call.1} parent=5 // pred_region
        %s164 = ssub.s32 %s15, 1
        %s165 = sand.u32 %s42, 1
        %s166 = scalar_lea.sflag [#allocation4], %s165
        %s167 = sand.u32 %s42, 1
        %s168 = smul.addr %s167, 32
        %s169 = scalar_lea.vmem [#allocation3], %s168
        // Predicated region
        $region29: #{tpu_custom_call.1} parent=27 // pred_check
          %p170 = pneg %p55
        $region30: #{tpu_custom_call.1} parent=27 // pred_check_branch
          %172 = sbr.rel (%p170) target = $region32
        $region31: #{tpu_custom_call.1} parent=27 // pred_region
          %173 = dma.done %s166, 512
        $region32: #{tpu_custom_call.1} parent=27 // pred_fallthru
          _
        // Predicated region
        $region33: #{tpu_custom_call.1} parent=27 // pred_check
          %p174 = pneg %p76
        $region34: #{tpu_custom_call.1} parent=27 // pred_check_branch
          %176 = sbr.rel (%p174) target = $region36
        $region35: #{tpu_custom_call.1} parent=27 // pred_region
          %177 = dma.done [#allocation7], 32768
        $region36: #{tpu_custom_call.1} parent=27 // pred_fallthru
          _
        %s178 = sand.u32 %s42, 1
        %s179 = scalar_lea.sflag [#allocation4], %s178
        %s180 = sand.u32 %s42, 1
        %s181 = smul.addr %s180, 32
        %s182 = scalar_lea.vmem [#allocation3], %s181
        %p183 = pneg %p55
        %p184 = pneg %p52
        %p185 = pneg %p76
        %p186 = pneg %p73
        %p187 = pneg %p104
        %p188 = pneg %p101
        %s189 = sand.u32 %s91, 1
        %s190 = scalar_lea.sflag [#allocation5], %s189
        %s191 = sand.u32 %s91, 1
        %s192 = smul.addr %s191, 32
        %s193 = scalar_lea.vmem [#allocation8], %s192
        %v194 = vld [vmem:[%s169] sm:$0xff]
        %s195 = scalar_lea.vmem %s169, 8 [#allocation3]
        %v196 = vld [vmem:[%s195] sm:$0xff]
        %s197 = scalar_lea.vmem %s169, 16 [#allocation3]
        %v198 = vld [vmem:[%s197] sm:$0xff]
        %s199 = scalar_lea.vmem %s169, 24 [#allocation3]
        %v200 = vld [vmem:[%s199] sm:$0xff]
        %v201 = vadd.f32 %v194, %v196
        %v202 = vsub.f32 %v194, %v196
        %v203 = vadd.f32 %v198, %v200
        %v204 = vsub.f32 %v198, %v200
        %v205 = vsub.f32 %v202, %v204
        %206 = vst [vmem:[#allocation2] sm:$0xff] %v205
        %v207 = vsub.f32 %v201, %v203
        %208 = vst [vmem:[#allocation2 + $0x8] sm:$0xff] %v207
        %v209 = vadd.f32 %v202, %v204
        %210 = vst [vmem:[#allocation2 + $0x10] sm:$0xff] %v209
        %v211 = vadd.f32 %v201, %v203
        %212 = vst [vmem:[#allocation2 + $0x18] sm:$0xff] %v211
        %v213 = vld [vmem:[#allocation2] sm:$0xff]
        %v214 = vld [vmem:[#allocation2 + $0x8] sm:$0xff]
        %v215 = vld [vmem:[#allocation2 + $0x10] sm:$0xff]
        %v216 = vld [vmem:[#allocation2 + $0x18] sm:$0xff]
        %v217 = vld [vmem:[#allocation6] sm:$0xff]
        %v218 = vld [vmem:[#allocation6 + $0x8] sm:$0xff]
        %v219 = vld [vmem:[#allocation6 + $0x10] sm:$0xff]
        %v220 = vld [vmem:[#allocation6 + $0x18] sm:$0xff]
        %v221 = vld [vmem:[#allocation6 + $0x20] sm:$0xff]
        %v222 = vld [vmem:[#allocation6 + $0x28] sm:$0xff]
        %v223 = vld [vmem:[#allocation6 + $0x30] sm:$0xff]
        %v224 = vld [vmem:[#allocation6 + $0x38] sm:$0xff]
        %v225 = vld [vmem:[#allocation6 + $0x40] sm:$0xff]
        %v226 = vld [vmem:[#allocation6 + $0x48] sm:$0xff]
        %v227 = vld [vmem:[#allocation6 + $0x50] sm:$0xff]
        %v228 = vld [vmem:[#allocation6 + $0x58] sm:$0xff]
        %v229 = vld [vmem:[#allocation6 + $0x60] sm:$0xff]
        %v230 = vld [vmem:[#allocation6 + $0x68] sm:$0xff]
        %v231 = vld [vmem:[#allocation6 + $0x70] sm:$0xff]
        %v232 = vld [vmem:[#allocation6 + $0x78] sm:$0xff]
        %v233 = vld [vmem:[#allocation6 + $0x80] sm:$0xff]
        %v234 = vld [vmem:[#allocation6 + $0x88] sm:$0xff]
        %v235 = vld [vmem:[#allocation6 + $0x90] sm:$0xff]
        %v236 = vld [vmem:[#allocation6 + $0x98] sm:$0xff]
        %v237 = vld [vmem:[#allocation6 + $0xa0] sm:$0xff]
        %v238 = vld [vmem:[#allocation6 + $0xa8] sm:$0xff]
        %v239 = vld [vmem:[#allocation6 + $0xb0] sm:$0xff]
        %v240 = vld [vmem:[#allocation6 + $0xb8] sm:$0xff]
        %v241 = vld [vmem:[#allocation6 + $0xc0] sm:$0xff]
        %v242 = vld [vmem:[#allocation6 + $0xc8] sm:$0xff]
        %v243 = vld [vmem:[#allocation6 + $0xd0] sm:$0xff]
        %v244 = vld [vmem:[#allocation6 + $0xd8] sm:$0xff]
        %v245 = vld [vmem:[#allocation6 + $0xe0] sm:$0xff]
        %v246 = vld [vmem:[#allocation6 + $0xe8] sm:$0xff]
        %v247 = vld [vmem:[#allocation6 + $0xf0] sm:$0xff]
        %v248 = vld [vmem:[#allocation6 + $0xf8] sm:$0xff]
        %v249 = vld [vmem:[#allocation6 + $0x100] sm:$0xff]
        %v250 = vld [vmem:[#allocation6 + $0x108] sm:$0xff]
        %v251 = vld [vmem:[#allocation6 + $0x110] sm:$0xff]
        %v252 = vld [vmem:[#allocation6 + $0x118] sm:$0xff]
        %v253 = vld [vmem:[#allocation6 + $0x120] sm:$0xff]
        %v254 = vld [vmem:[#allocation6 + $0x128] sm:$0xff]
        %v255 = vld [vmem:[#allocation6 + $0x130] sm:$0xff]
        %v256 = vld [vmem:[#allocation6 + $0x138] sm:$0xff]
        %v257 = vld [vmem:[#allocation6 + $0x140] sm:$0xff]
        %v258 = vld [vmem:[#allocation6 + $0x148] sm:$0xff]
        %v259 = vld [vmem:[#allocation6 + $0x150] sm:$0xff]
        %v260 = vld [vmem:[#allocation6 + $0x158] sm:$0xff]
        %v261 = vld [vmem:[#allocation6 + $0x160] sm:$0xff]
        %v262 = vld [vmem:[#allocation6 + $0x168] sm:$0xff]
        %v263 = vld [vmem:[#allocation6 + $0x170] sm:$0xff]
        %v264 = vld [vmem:[#allocation6 + $0x178] sm:$0xff]
        %v265 = vld [vmem:[#allocation6 + $0x180] sm:$0xff]
        %v266 = vld [vmem:[#allocation6 + $0x188] sm:$0xff]
        %v267 = vld [vmem:[#allocation6 + $0x190] sm:$0xff]
        %v268 = vld [vmem:[#allocation6 + $0x198] sm:$0xff]
        %v269 = vld [vmem:[#allocation6 + $0x1a0] sm:$0xff]
        %v270 = vld [vmem:[#allocation6 + $0x1a8] sm:$0xff]
        %v271 = vld [vmem:[#allocation6 + $0x1b0] sm:$0xff]
        %v272 = vld [vmem:[#allocation6 + $0x1b8] sm:$0xff]
        %v273 = vld [vmem:[#allocation6 + $0x1c0] sm:$0xff]
        %v274 = vld [vmem:[#allocation6 + $0x1c8] sm:$0xff]
        %v275 = vld [vmem:[#allocation6 + $0x1d0] sm:$0xff]
        %v276 = vld [vmem:[#allocation6 + $0x1d8] sm:$0xff]
        %v277 = vld [vmem:[#allocation6 + $0x1e0] sm:$0xff]
        %v278 = vld [vmem:[#allocation6 + $0x1e8] sm:$0xff]
        %v279 = vld [vmem:[#allocation6 + $0x1f0] sm:$0xff]
        %v280 = vld [vmem:[#allocation6 + $0x1f8] sm:$0xff]
        %v281 = vld [vmem:[#allocation6 + $0x200] sm:$0xff]
        %v282 = vld [vmem:[#allocation6 + $0x208] sm:$0xff]
        %v283 = vld [vmem:[#allocation6 + $0x210] sm:$0xff]
        %v284 = vld [vmem:[#allocation6 + $0x218] sm:$0xff]
        %v285 = vld [vmem:[#allocation6 + $0x220] sm:$0xff]
        %v286 = vld [vmem:[#allocation6 + $0x228] sm:$0xff]
        %v287 = vld [vmem:[#allocation6 + $0x230] sm:$0xff]
        %v288 = vld [vmem:[#allocation6 + $0x238] sm:$0xff]
        %v289 = vld [vmem:[#allocation6 + $0x240] sm:$0xff]
        %v290 = vld [vmem:[#allocation6 + $0x248] sm:$0xff]
        %v291 = vld [vmem:[#allocation6 + $0x250] sm:$0xff]
        %v292 = vld [vmem:[#allocation6 + $0x258] sm:$0xff]
        %v293 = vld [vmem:[#allocation6 + $0x260] sm:$0xff]
        %v294 = vld [vmem:[#allocation6 + $0x268] sm:$0xff]
        %v295 = vld [vmem:[#allocation6 + $0x270] sm:$0xff]
        %v296 = vld [vmem:[#allocation6 + $0x278] sm:$0xff]
        %v297 = vld [vmem:[#allocation6 + $0x280] sm:$0xff]
        %v298 = vld [vmem:[#allocation6 + $0x288] sm:$0xff]
        %v299 = vld [vmem:[#allocation6 + $0x290] sm:$0xff]
        %v300 = vld [vmem:[#allocation6 + $0x298] sm:$0xff]
        %v301 = vld [vmem:[#allocation6 + $0x2a0] sm:$0xff]
        %v302 = vld [vmem:[#allocation6 + $0x2a8] sm:$0xff]
        %v303 = vld [vmem:[#allocation6 + $0x2b0] sm:$0xff]
        %v304 = vld [vmem:[#allocation6 + $0x2b8] sm:$0xff]
        %v305 = vld [vmem:[#allocation6 + $0x2c0] sm:$0xff]
        %v306 = vld [vmem:[#allocation6 + $0x2c8] sm:$0xff]
        %v307 = vld [vmem:[#allocation6 + $0x2d0] sm:$0xff]
        %v308 = vld [vmem:[#allocation6 + $0x2d8] sm:$0xff]
        %v309 = vld [vmem:[#allocation6 + $0x2e0] sm:$0xff]
        %v310 = vld [vmem:[#allocation6 + $0x2e8] sm:$0xff]
        %v311 = vld [vmem:[#allocation6 + $0x2f0] sm:$0xff]
        %v312 = vld [vmem:[#allocation6 + $0x2f8] sm:$0xff]
        %v313 = vld [vmem:[#allocation6 + $0x300] sm:$0xff]
        %v314 = vld [vmem:[#allocation6 + $0x308] sm:$0xff]
        %v315 = vld [vmem:[#allocation6 + $0x310] sm:$0xff]
        %v316 = vld [vmem:[#allocation6 + $0x318] sm:$0xff]
        %v317 = vld [vmem:[#allocation6 + $0x320] sm:$0xff]
        %v318 = vld [vmem:[#allocation6 + $0x328] sm:$0xff]
        %v319 = vld [vmem:[#allocation6 + $0x330] sm:$0xff]
        %v320 = vld [vmem:[#allocation6 + $0x338] sm:$0xff]
        %v321 = vld [vmem:[#allocation6 + $0x340] sm:$0xff]
        %v322 = vld [vmem:[#allocation6 + $0x348] sm:$0xff]
        %v323 = vld [vmem:[#allocation6 + $0x350] sm:$0xff]
        %v324 = vld [vmem:[#allocation6 + $0x358] sm:$0xff]
        %v325 = vld [vmem:[#allocation6 + $0x360] sm:$0xff]
        %v326 = vld [vmem:[#allocation6 + $0x368] sm:$0xff]
        %v327 = vld [vmem:[#allocation6 + $0x370] sm:$0xff]
        %v328 = vld [vmem:[#allocation6 + $0x378] sm:$0xff]
        %v329 = vld [vmem:[#allocation6 + $0x380] sm:$0xff]
        %v330 = vld [vmem:[#allocation6 + $0x388] sm:$0xff]
        %v331 = vld [vmem:[#allocation6 + $0x390] sm:$0xff]
        %v332 = vld [vmem:[#allocation6 + $0x398] sm:$0xff]
        %v333 = vld [vmem:[#allocation6 + $0x3a0] sm:$0xff]
        %v334 = vld [vmem:[#allocation6 + $0x3a8] sm:$0xff]
        %v335 = vld [vmem:[#allocation6 + $0x3b0] sm:$0xff]
        %v336 = vld [vmem:[#allocation6 + $0x3b8] sm:$0xff]
        %v337 = vld [vmem:[#allocation6 + $0x3c0] sm:$0xff]
        %v338 = vld [vmem:[#allocation6 + $0x3c8] sm:$0xff]
        %v339 = vld [vmem:[#allocation6 + $0x3d0] sm:$0xff]
        %v340 = vld [vmem:[#allocation6 + $0x3d8] sm:$0xff]
        %v341 = vld [vmem:[#allocation6 + $0x3e0] sm:$0xff]
        %v342 = vld [vmem:[#allocation6 + $0x3e8] sm:$0xff]
        %v343 = vld [vmem:[#allocation6 + $0x3f0] sm:$0xff]
        %v344 = vld [vmem:[#allocation6 + $0x3f8] sm:$0xff]
        %v345 = vld [vmem:[#allocation6 + $0x400] sm:$0xff]
        %v346 = vld [vmem:[#allocation6 + $0x408] sm:$0xff]
        %v347 = vld [vmem:[#allocation6 + $0x410] sm:$0xff]
        %v348 = vld [vmem:[#allocation6 + $0x418] sm:$0xff]
        %v349 = vld [vmem:[#allocation6 + $0x420] sm:$0xff]
        %v350 = vld [vmem:[#allocation6 + $0x428] sm:$0xff]
        %v351 = vld [vmem:[#allocation6 + $0x430] sm:$0xff]
        %v352 = vld [vmem:[#allocation6 + $0x438] sm:$0xff]
        %v353 = vld [vmem:[#allocation6 + $0x440] sm:$0xff]
        %v354 = vld [vmem:[#allocation6 + $0x448] sm:$0xff]
        %v355 = vld [vmem:[#allocation6 + $0x450] sm:$0xff]
        %v356 = vld [vmem:[#allocation6 + $0x458] sm:$0xff]
        %v357 = vld [vmem:[#allocation6 + $0x460] sm:$0xff]
        %v358 = vld [vmem:[#allocation6 + $0x468] sm:$0xff]
        %v359 = vld [vmem:[#allocation6 + $0x470] sm:$0xff]
        %v360 = vld [vmem:[#allocation6 + $0x478] sm:$0xff]
        %v361 = vld [vmem:[#allocation6 + $0x480] sm:$0xff]
        %v362 = vld [vmem:[#allocation6 + $0x488] sm:$0xff]
        %v363 = vld [vmem:[#allocation6 + $0x490] sm:$0xff]
        %v364 = vld [vmem:[#allocation6 + $0x498] sm:$0xff]
        %v365 = vld [vmem:[#allocation6 + $0x4a0] sm:$0xff]
        %v366 = vld [vmem:[#allocation6 + $0x4a8] sm:$0xff]
        %v367 = vld [vmem:[#allocation6 + $0x4b0] sm:$0xff]
        %v368 = vld [vmem:[#allocation6 + $0x4b8] sm:$0xff]
        %v369 = vld [vmem:[#allocation6 + $0x4c0] sm:$0xff]
        %v370 = vld [vmem:[#allocation6 + $0x4c8] sm:$0xff]
        %v371 = vld [vmem:[#allocation6 + $0x4d0] sm:$0xff]
        %v372 = vld [vmem:[#allocation6 + $0x4d8] sm:$0xff]
        %v373 = vld [vmem:[#allocation6 + $0x4e0] sm:$0xff]
        %v374 = vld [vmem:[#allocation6 + $0x4e8] sm:$0xff]
        %v375 = vld [vmem:[#allocation6 + $0x4f0] sm:$0xff]
        %v376 = vld [vmem:[#allocation6 + $0x4f8] sm:$0xff]
        %v377 = vld [vmem:[#allocation6 + $0x500] sm:$0xff]
        %v378 = vld [vmem:[#allocation6 + $0x508] sm:$0xff]
        %v379 = vld [vmem:[#allocation6 + $0x510] sm:$0xff]
        %v380 = vld [vmem:[#allocation6 + $0x518] sm:$0xff]
        %v381 = vld [vmem:[#allocation6 + $0x520] sm:$0xff]
        %v382 = vld [vmem:[#allocation6 + $0x528] sm:$0xff]
        %v383 = vld [vmem:[#allocation6 + $0x530] sm:$0xff]
        %v384 = vld [vmem:[#allocation6 + $0x538] sm:$0xff]
        %v385 = vld [vmem:[#allocation6 + $0x540] sm:$0xff]
        %v386 = vld [vmem:[#allocation6 + $0x548] sm:$0xff]
        %v387 = vld [vmem:[#allocation6 + $0x550] sm:$0xff]
        %v388 = vld [vmem:[#allocation6 + $0x558] sm:$0xff]
        %v389 = vld [vmem:[#allocation6 + $0x560] sm:$0xff]
        %v390 = vld [vmem:[#allocation6 + $0x568] sm:$0xff]
        %v391 = vld [vmem:[#allocation6 + $0x570] sm:$0xff]
        %v392 = vld [vmem:[#allocation6 + $0x578] sm:$0xff]
        %v393 = vld [vmem:[#allocation6 + $0x580] sm:$0xff]
        %v394 = vld [vmem:[#allocation6 + $0x588] sm:$0xff]
        %v395 = vld [vmem:[#allocation6 + $0x590] sm:$0xff]
        %v396 = vld [vmem:[#allocation6 + $0x598] sm:$0xff]
        %v397 = vld [vmem:[#allocation6 + $0x5a0] sm:$0xff]
        %v398 = vld [vmem:[#allocation6 + $0x5a8] sm:$0xff]
        %v399 = vld [vmem:[#allocation6 + $0x5b0] sm:$0xff]
        %v400 = vld [vmem:[#allocation6 + $0x5b8] sm:$0xff]
        %v401 = vld [vmem:[#allocation6 + $0x5c0] sm:$0xff]
        %v402 = vld [vmem:[#allocation6 + $0x5c8] sm:$0xff]
        %v403 = vld [vmem:[#allocation6 + $0x5d0] sm:$0xff]
        %v404 = vld [vmem:[#allocation6 + $0x5d8] sm:$0xff]
        %v405 = vld [vmem:[#allocation6 + $0x5e0] sm:$0xff]
        %v406 = vld [vmem:[#allocation6 + $0x5e8] sm:$0xff]
        %v407 = vld [vmem:[#allocation6 + $0x5f0] sm:$0xff]
        %v408 = vld [vmem:[#allocation6 + $0x5f8] sm:$0xff]
        %v409 = vld [vmem:[#allocation6 + $0x600] sm:$0xff]
        %v410 = vld [vmem:[#allocation6 + $0x608] sm:$0xff]
        %v411 = vld [vmem:[#allocation6 + $0x610] sm:$0xff]
        %v412 = vld [vmem:[#allocation6 + $0x618] sm:$0xff]
        %v413 = vld [vmem:[#allocation6 + $0x620] sm:$0xff]
        %v414 = vld [vmem:[#allocation6 + $0x628] sm:$0xff]
        %v415 = vld [vmem:[#allocation6 + $0x630] sm:$0xff]
        %v416 = vld [vmem:[#allocation6 + $0x638] sm:$0xff]
        %v417 = vld [vmem:[#allocation6 + $0x640] sm:$0xff]
        %v418 = vld [vmem:[#allocation6 + $0x648] sm:$0xff]
        %v419 = vld [vmem:[#allocation6 + $0x650] sm:$0xff]
        %v420 = vld [vmem:[#allocation6 + $0x658] sm:$0xff]
        %v421 = vld [vmem:[#allocation6 + $0x660] sm:$0xff]
        %v422 = vld [vmem:[#allocation6 + $0x668] sm:$0xff]
        %v423 = vld [vmem:[#allocation6 + $0x670] sm:$0xff]
        %v424 = vld [vmem:[#allocation6 + $0x678] sm:$0xff]
        %v425 = vld [vmem:[#allocation6 + $0x680] sm:$0xff]
        %v426 = vld [vmem:[#allocation6 + $0x688] sm:$0xff]
        %v427 = vld [vmem:[#allocation6 + $0x690] sm:$0xff]
        %v428 = vld [vmem:[#allocation6 + $0x698] sm:$0xff]
        %v429 = vld [vmem:[#allocation6 + $0x6a0] sm:$0xff]
        %v430 = vld [vmem:[#allocation6 + $0x6a8] sm:$0xff]
        %v431 = vld [vmem:[#allocation6 + $0x6b0] sm:$0xff]
        %v432 = vld [vmem:[#allocation6 + $0x6b8] sm:$0xff]
        %v433 = vld [vmem:[#allocation6 + $0x6c0] sm:$0xff]
        %v434 = vld [vmem:[#allocation6 + $0x6c8] sm:$0xff]
        %v435 = vld [vmem:[#allocation6 + $0x6d0] sm:$0xff]
        %v436 = vld [vmem:[#allocation6 + $0x6d8] sm:$0xff]
        %v437 = vld [vmem:[#allocation6 + $0x6e0] sm:$0xff]
        %v438 = vld [vmem:[#allocation6 + $0x6e8] sm:$0xff]
        %v439 = vld [vmem:[#allocation6 + $0x6f0] sm:$0xff]
        %v440 = vld [vmem:[#allocation6 + $0x6f8] sm:$0xff]
        %v441 = vld [vmem:[#allocation6 + $0x700] sm:$0xff]
        %v442 = vld [vmem:[#allocation6 + $0x708] sm:$0xff]
        %v443 = vld [vmem:[#allocation6 + $0x710] sm:$0xff]
        %v444 = vld [vmem:[#allocation6 + $0x718] sm:$0xff]
        %v445 = vld [vmem:[#allocation6 + $0x720] sm:$0xff]
        %v446 = vld [vmem:[#allocation6 + $0x728] sm:$0xff]
        %v447 = vld [vmem:[#allocation6 + $0x730] sm:$0xff]
        %v448 = vld [vmem:[#allocation6 + $0x738] sm:$0xff]
        %v449 = vld [vmem:[#allocation6 + $0x740] sm:$0xff]
        %v450 = vld [vmem:[#allocation6 + $0x748] sm:$0xff]
        %v451 = vld [vmem:[#allocation6 + $0x750] sm:$0xff]
        %v452 = vld [vmem:[#allocation6 + $0x758] sm:$0xff]
        %v453 = vld [vmem:[#allocation6 + $0x760] sm:$0xff]
        %v454 = vld [vmem:[#allocation6 + $0x768] sm:$0xff]
        %v455 = vld [vmem:[#allocation6 + $0x770] sm:$0xff]
        %v456 = vld [vmem:[#allocation6 + $0x778] sm:$0xff]
        %v457 = vld [vmem:[#allocation6 + $0x780] sm:$0xff]
        %v458 = vld [vmem:[#allocation6 + $0x788] sm:$0xff]
        %v459 = vld [vmem:[#allocation6 + $0x790] sm:$0xff]
        %v460 = vld [vmem:[#allocation6 + $0x798] sm:$0xff]
        %v461 = vld [vmem:[#allocation6 + $0x7a0] sm:$0xff]
        %v462 = vld [vmem:[#allocation6 + $0x7a8] sm:$0xff]
        %v463 = vld [vmem:[#allocation6 + $0x7b0] sm:$0xff]
        %v464 = vld [vmem:[#allocation6 + $0x7b8] sm:$0xff]
        %v465 = vld [vmem:[#allocation6 + $0x7c0] sm:$0xff]
        %v466 = vld [vmem:[#allocation6 + $0x7c8] sm:$0xff]
        %v467 = vld [vmem:[#allocation6 + $0x7d0] sm:$0xff]
        %v468 = vld [vmem:[#allocation6 + $0x7d8] sm:$0xff]
        %v469 = vld [vmem:[#allocation6 + $0x7e0] sm:$0xff]
        %v470 = vld [vmem:[#allocation6 + $0x7e8] sm:$0xff]
        %v471 = vld [vmem:[#allocation6 + $0x7f0] sm:$0xff]
        %v472 = vld [vmem:[#allocation6 + $0x7f8] sm:$0xff]
        %v473 = vand.u32 %v218, 4294901760
        %474 = vmatprep.subr.mxu0 %v473
        %v475 = vand.u32 %v217, 4294901760
        %476 = vmatpush1.msra.mxu0 %v475
        %v477 = vand.u32 %v222, 4294901760
        %478 = vmatprep.subr.mxu0 %v477
        %v479 = vand.u32 %v221, 4294901760
        %480 = vmatpush1.msra.mxu0 %v479
        %v481 = vand.u32 %v226, 4294901760
        %482 = vmatprep.subr.mxu0 %v481
        %v483 = vand.u32 %v225, 4294901760
        %484 = vmatpush1.msra.mxu0 %v483
        %v485 = vand.u32 %v230, 4294901760
        %486 = vmatprep.subr.mxu0 %v485
        %v487 = vand.u32 %v229, 4294901760
        %488 = vmatpush1.msra.mxu0 %v487
        %v489 = vand.u32 %v234, 4294901760
        %490 = vmatprep.subr.mxu0 %v489
        %v491 = vand.u32 %v233, 4294901760
        %492 = vmatpush1.msra.mxu0 %v491
        %v493 = vand.u32 %v238, 4294901760
        %494 = vmatprep.subr.mxu0 %v493
        %v495 = vand.u32 %v237, 4294901760
        %496 = vmatpush1.msra.mxu0 %v495
        %v497 = vand.u32 %v242, 4294901760
        %498 = vmatprep.subr.mxu0 %v497
        %v499 = vand.u32 %v241, 4294901760
        %500 = vmatpush1.msra.mxu0 %v499
        %v501 = vand.u32 %v246, 4294901760
        %502 = vmatprep.subr.mxu0 %v501
        %v503 = vand.u32 %v245, 4294901760
        %504 = vmatpush1.msra.mxu0 %v503
        %v505 = vand.u32 %v250, 4294901760
        %506 = vmatprep.subr.mxu0 %v505
        %v507 = vand.u32 %v249, 4294901760
        %508 = vmatpush1.msra.mxu0 %v507
        %v509 = vand.u32 %v254, 4294901760
        %510 = vmatprep.subr.mxu0 %v509
        %v511 = vand.u32 %v253, 4294901760
        %512 = vmatpush1.msra.mxu0 %v511
        %v513 = vand.u32 %v258, 4294901760
        %514 = vmatprep.subr.mxu0 %v513
        %v515 = vand.u32 %v257, 4294901760
        %516 = vmatpush1.msra.mxu0 %v515
        %v517 = vand.u32 %v262, 4294901760
        %518 = vmatprep.subr.mxu0 %v517
        %v519 = vand.u32 %v261, 4294901760
        %520 = vmatpush1.msra.mxu0 %v519
        %v521 = vand.u32 %v266, 4294901760
        %522 = vmatprep.subr.mxu0 %v521
        %v523 = vand.u32 %v265, 4294901760
        %524 = vmatpush1.msra.mxu0 %v523
        %v525 = vand.u32 %v270, 4294901760
        %526 = vmatprep.subr.mxu0 %v525
        %v527 = vand.u32 %v269, 4294901760
        %528 = vmatpush1.msra.mxu0 %v527
        %v529 = vand.u32 %v274, 4294901760
        %530 = vmatprep.subr.mxu0 %v529
        %v531 = vand.u32 %v273, 4294901760
        %532 = vmatpush1.msra.mxu0 %v531
        %v533 = vand.u32 %v278, 4294901760
        %534 = vmatprep.subr.mxu0 %v533
        %v535 = vand.u32 %v277, 4294901760
        %536 = vmatpush1.msra.mxu0 %v535
        %v537 = vand.u32 %v282, 4294901760
        %538 = vmatprep.subr.mxu0 %v537
        %v539 = vand.u32 %v281, 4294901760
        %540 = vmatpush1.msra.mxu0 %v539
        %v541 = vand.u32 %v286, 4294901760
        %542 = vmatprep.subr.mxu0 %v541
        %v543 = vand.u32 %v285, 4294901760
        %544 = vmatpush1.msra.mxu0 %v543
        %v545 = vand.u32 %v290, 4294901760
        %546 = vmatprep.subr.mxu0 %v545
        %v547 = vand.u32 %v289, 4294901760
        %548 = vmatpush1.msra.mxu0 %v547
        %v549 = vand.u32 %v294, 4294901760
        %550 = vmatprep.subr.mxu0 %v549
        %v551 = vand.u32 %v293, 4294901760
        %552 = vmatpush1.msra.mxu0 %v551
        %v553 = vand.u32 %v298, 4294901760
        %554 = vmatprep.subr.mxu0 %v553
        %v555 = vand.u32 %v297, 4294901760
        %556 = vmatpush1.msra.mxu0 %v555
        %v557 = vand.u32 %v302, 4294901760
        %558 = vmatprep.subr.mxu0 %v557
        %v559 = vand.u32 %v301, 4294901760
        %560 = vmatpush1.msra.mxu0 %v559
        %v561 = vand.u32 %v306, 4294901760
        %562 = vmatprep.subr.mxu0 %v561
        %v563 = vand.u32 %v305, 4294901760
        %564 = vmatpush1.msra.mxu0 %v563
        %v565 = vand.u32 %v310, 4294901760
        %566 = vmatprep.subr.mxu0 %v565
        %v567 = vand.u32 %v309, 4294901760
        %568 = vmatpush1.msra.mxu0 %v567
        %v569 = vand.u32 %v314, 4294901760
        %570 = vmatprep.subr.mxu0 %v569
        %v571 = vand.u32 %v313, 4294901760
        %572 = vmatpush1.msra.mxu0 %v571
        %v573 = vand.u32 %v318, 4294901760
        %574 = vmatprep.subr.mxu0 %v573
        %v575 = vand.u32 %v317, 4294901760
        %576 = vmatpush1.msra.mxu0 %v575
        %v577 = vand.u32 %v322, 4294901760
        %578 = vmatprep.subr.mxu0 %v577
        %v579 = vand.u32 %v321, 4294901760
        %580 = vmatpush1.msra.mxu0 %v579
        %v581 = vand.u32 %v326, 4294901760
        %582 = vmatprep.subr.mxu0 %v581
        %v583 = vand.u32 %v325, 4294901760
        %584 = vmatpush1.msra.mxu0 %v583
        %v585 = vand.u32 %v330, 4294901760
        %586 = vmatprep.subr.mxu0 %v585
        %v587 = vand.u32 %v329, 4294901760
        %588 = vmatpush1.msra.mxu0 %v587
        %v589 = vand.u32 %v334, 4294901760
        %590 = vmatprep.subr.mxu0 %v589
        %v591 = vand.u32 %v333, 4294901760
        %592 = vmatpush1.msra.mxu0 %v591
        %v593 = vand.u32 %v338, 4294901760
        %594 = vmatprep.subr.mxu0 %v593
        %v595 = vand.u32 %v337, 4294901760
        %596 = vmatpush1.msra.mxu0 %v595
        %v597 = vand.u32 %v342, 4294901760
        %598 = vmatprep.subr.mxu0 %v597
        %v599 = vand.u32 %v341, 4294901760
        %600 = vmatpush1.msra.mxu0 %v599
        %v601 = vand.u32 %v214, 4294901760
        %v602 = vsub.f32 %v214, %v601
        %v603 = vand.u32 %v602, 4294901760
        %v604 = vsub.f32 %v602, %v603
        %v605 = vand.u32 %v604, 4294901760
        %606 = vmatprep.mubr.f32.mxu0 %v605
        %v607 = vand.u32 %v213, 4294901760
        %v608 = vsub.f32 %v213, %v607
        %v609 = vand.u32 %v608, 4294901760
        %v610 = vsub.f32 %v608, %v609
        %v611 = vand.u32 %v610, 4294901760
        %612 = vmatmul.mubr.f32.gmra.mrb[0].mxu0 %v611
        %v613 = vpop.f32.mrb[0].mxu0
        %v614 = vadd.f32 0.0, %v613
        %v615 = vpop.f32.mrb[0].mxu0
        %v616 = vadd.f32 0.0, %v615
        %617 = vdwg.mxu0
        %v618 = vand.u32 %v218, 4294901760
        %v619 = vsub.f32 %v218, %v618
        %v620 = vand.u32 %v619, 4294901760
        %v621 = vsub.f32 %v619, %v620
        %v622 = vand.u32 %v621, 4294901760
        %623 = vmatprep.subr.mxu0 %v622
        %v624 = vand.u32 %v217, 4294901760
        %v625 = vsub.f32 %v217, %v624
        %v626 = vand.u32 %v625, 4294901760
        %v627 = vsub.f32 %v625, %v626
        %v628 = vand.u32 %v627, 4294901760
        %629 = vmatpush1.msra.mxu0 %v628
        %v630 = vand.u32 %v222, 4294901760
        %v631 = vsub.f32 %v222, %v630
        %v632 = vand.u32 %v631, 4294901760
        %v633 = vsub.f32 %v631, %v632
        %v634 = vand.u32 %v633, 4294901760
        %635 = vmatprep.subr.mxu0 %v634
        %v636 = vand.u32 %v221, 4294901760
        %v637 = vsub.f32 %v221, %v636
        %v638 = vand.u32 %v637, 4294901760
        %v639 = vsub.f32 %v637, %v638
        %v640 = vand.u32 %v639, 4294901760
        %641 = vmatpush1.msra.mxu0 %v640
        %v642 = vand.u32 %v226, 4294901760
        %v643 = vsub.f32 %v226, %v642
        %v644 = vand.u32 %v643, 4294901760
        %v645 = vsub.f32 %v643, %v644
        %v646 = vand.u32 %v645, 4294901760
        %647 = vmatprep.subr.mxu0 %v646
        %v648 = vand.u32 %v225, 4294901760
        %v649 = vsub.f32 %v225, %v648
        %v650 = vand.u32 %v649, 4294901760
        %v651 = vsub.f32 %v649, %v650
        %v652 = vand.u32 %v651, 4294901760
        %653 = vmatpush1.msra.mxu0 %v652
        %v654 = vand.u32 %v230, 4294901760
        %v655 = vsub.f32 %v230, %v654
        %v656 = vand.u32 %v655, 4294901760
        %v657 = vsub.f32 %v655, %v656
        %v658 = vand.u32 %v657, 4294901760
        %659 = vmatprep.subr.mxu0 %v658
        %v660 = vand.u32 %v229, 4294901760
        %v661 = vsub.f32 %v229, %v660
        %v662 = vand.u32 %v661, 4294901760
        %v663 = vsub.f32 %v661, %v662
        %v664 = vand.u32 %v663, 4294901760
        %665 = vmatpush1.msra.mxu0 %v664
        %v666 = vand.u32 %v234, 4294901760
        %v667 = vsub.f32 %v234, %v666
        %v668 = vand.u32 %v667, 4294901760
        %v669 = vsub.f32 %v667, %v668
        %v670 = vand.u32 %v669, 4294901760
        %671 = vmatprep.subr.mxu0 %v670
        %v672 = vand.u32 %v233, 4294901760
        %v673 = vsub.f32 %v233, %v672
        %v674 = vand.u32 %v673, 4294901760
        %v675 = vsub.f32 %v673, %v674
        %v676 = vand.u32 %v675, 4294901760
        %677 = vmatpush1.msra.mxu0 %v676
        %v678 = vand.u32 %v238, 4294901760
        %v679 = vsub.f32 %v238, %v678
        %v680 = vand.u32 %v679, 4294901760
        %v681 = vsub.f32 %v679, %v680
        %v682 = vand.u32 %v681, 4294901760
        %683 = vmatprep.subr.mxu0 %v682
        %v684 = vand.u32 %v237, 4294901760
        %v685 = vsub.f32 %v237, %v684
        %v686 = vand.u32 %v685, 4294901760
        %v687 = vsub.f32 %v685, %v686
        %v688 = vand.u32 %v687, 4294901760
        %689 = vmatpush1.msra.mxu0 %v688
        %v690 = vand.u32 %v242, 4294901760
        %v691 = vsub.f32 %v242, %v690
        %v692 = vand.u32 %v691, 4294901760
        %v693 = vsub.f32 %v691, %v692
        %v694 = vand.u32 %v693, 4294901760
        %695 = vmatprep.subr.mxu0 %v694
        %v696 = vand.u32 %v241, 4294901760
        %v697 = vsub.f32 %v241, %v696
        %v698 = vand.u32 %v697, 4294901760
        %v699 = vsub.f32 %v697, %v698
        %v700 = vand.u32 %v699, 4294901760
        %701 = vmatpush1.msra.mxu0 %v700
        %v702 = vand.u32 %v246, 4294901760
        %v703 = vsub.f32 %v246, %v702
        %v704 = vand.u32 %v703, 4294901760
        %v705 = vsub.f32 %v703, %v704
        %v706 = vand.u32 %v705, 4294901760
        %707 = vmatprep.subr.mxu0 %v706
        %v708 = vand.u32 %v245, 4294901760
        %v709 = vsub.f32 %v245, %v708
        %v710 = vand.u32 %v709, 4294901760
        %v711 = vsub.f32 %v709, %v710
        %v712 = vand.u32 %v711, 4294901760
        %713 = vmatpush1.msra.mxu0 %v712
        %v714 = vand.u32 %v250, 4294901760
        %v715 = vsub.f32 %v250, %v714
        %v716 = vand.u32 %v715, 4294901760
        %v717 = vsub.f32 %v715, %v716
        %v718 = vand.u32 %v717, 4294901760
        %719 = vmatprep.subr.mxu0 %v718
        %v720 = vand.u32 %v249, 4294901760
        %v721 = vsub.f32 %v249, %v720
        %v722 = vand.u32 %v721, 4294901760
        %v723 = vsub.f32 %v721, %v722
        %v724 = vand.u32 %v723, 4294901760
        %725 = vmatpush1.msra.mxu0 %v724
        %v726 = vand.u32 %v254, 4294901760
        %v727 = vsub.f32 %v254, %v726
        %v728 = vand.u32 %v727, 4294901760
        %v729 = vsub.f32 %v727, %v728
        %v730 = vand.u32 %v729, 4294901760
        %731 = vmatprep.subr.mxu0 %v730
        %v732 = vand.u32 %v253, 4294901760
        %v733 = vsub.f32 %v253, %v732
        %v734 = vand.u32 %v733, 4294901760
        %v735 = vsub.f32 %v733, %v734
        %v736 = vand.u32 %v735, 4294901760
        %737 = vmatpush1.msra.mxu0 %v736
        %v738 = vand.u32 %v258, 4294901760
        %v739 = vsub.f32 %v258, %v738
        %v740 = vand.u32 %v739, 4294901760
        %v741 = vsub.f32 %v739, %v740
        %v742 = vand.u32 %v741, 4294901760
        %743 = vmatprep.subr.mxu0 %v742
        %v744 = vand.u32 %v257, 4294901760
        %v745 = vsub.f32 %v257, %v744
        %v746 = vand.u32 %v745, 4294901760
        %v747 = vsub.f32 %v745, %v746
        %v748 = vand.u32 %v747, 4294901760
        %749 = vmatpush1.msra.mxu0 %v748
        %v750 = vand.u32 %v262, 4294901760
        %v751 = vsub.f32 %v262, %v750
        %v752 = vand.u32 %v751, 4294901760
        %v753 = vsub.f32 %v751, %v752
        %v754 = vand.u32 %v753, 4294901760
        %755 = vmatprep.subr.mxu0 %v754
        %v756 = vand.u32 %v261, 4294901760
        %v757 = vsub.f32 %v261, %v756
        %v758 = vand.u32 %v757, 4294901760
        %v759 = vsub.f32 %v757, %v758
        %v760 = vand.u32 %v759, 4294901760
        %761 = vmatpush1.msra.mxu0 %v760
        %v762 = vand.u32 %v266, 4294901760
        %v763 = vsub.f32 %v266, %v762
        %v764 = vand.u32 %v763, 4294901760
        %v765 = vsub.f32 %v763, %v764
        %v766 = vand.u32 %v765, 4294901760
        %767 = vmatprep.subr.mxu0 %v766
        %v768 = vand.u32 %v265, 4294901760
        %v769 = vsub.f32 %v265, %v768
        %v770 = vand.u32 %v769, 4294901760
        %v771 = vsub.f32 %v769, %v770
        %v772 = vand.u32 %v771, 4294901760
        %773 = vmatpush1.msra.mxu0 %v772
        %v774 = vand.u32 %v270, 4294901760
        %v775 = vsub.f32 %v270, %v774
        %v776 = vand.u32 %v775, 4294901760
        %v777 = vsub.f32 %v775, %v776
        %v778 = vand.u32 %v777, 4294901760
        %779 = vmatprep.subr.mxu0 %v778
        %v780 = vand.u32 %v269, 4294901760
        %v781 = vsub.f32 %v269, %v780
        %v782 = vand.u32 %v781, 4294901760
        %v783 = vsub.f32 %v781, %v782
        %v784 = vand.u32 %v783, 4294901760
        %785 = vmatpush1.msra.mxu0 %v784
        %v786 = vand.u32 %v274, 4294901760
        %v787 = vsub.f32 %v274, %v786
        %v788 = vand.u32 %v787, 4294901760
        %v789 = vsub.f32 %v787, %v788
        %v790 = vand.u32 %v789, 4294901760
        %791 = vmatprep.subr.mxu0 %v790
        %v792 = vand.u32 %v273, 4294901760
        %v793 = vsub.f32 %v273, %v792
        %v794 = vand.u32 %v793, 4294901760
        %v795 = vsub.f32 %v793, %v794
        %v796 = vand.u32 %v795, 4294901760
        %797 = vmatpush1.msra.mxu0 %v796
        %v798 = vand.u32 %v278, 4294901760
        %v799 = vsub.f32 %v278, %v798
        %v800 = vand.u32 %v799, 4294901760
        %v801 = vsub.f32 %v799, %v800
        %v802 = vand.u32 %v801, 4294901760
        %803 = vmatprep.subr.mxu0 %v802
        %v804 = vand.u32 %v277, 4294901760
        %v805 = vsub.f32 %v277, %v804
        %v806 = vand.u32 %v805, 4294901760
        %v807 = vsub.f32 %v805, %v806
        %v808 = vand.u32 %v807, 4294901760
        %809 = vmatpush1.msra.mxu0 %v808
        %v810 = vand.u32 %v282, 4294901760
        %v811 = vsub.f32 %v282, %v810
        %v812 = vand.u32 %v811, 4294901760
        %v813 = vsub.f32 %v811, %v812
        %v814 = vand.u32 %v813, 4294901760
        %815 = vmatprep.subr.mxu0 %v814
        %v816 = vand.u32 %v281, 4294901760
        %v817 = vsub.f32 %v281, %v816
        %v818 = vand.u32 %v817, 4294901760
        %v819 = vsub.f32 %v817, %v818
        %v820 = vand.u32 %v819, 4294901760
        %821 = vmatpush1.msra.mxu0 %v820
        %v822 = vand.u32 %v286, 4294901760
        %v823 = vsub.f32 %v286, %v822
        %v824 = vand.u32 %v823, 4294901760
        %v825 = vsub.f32 %v823, %v824
        %v826 = vand.u32 %v825, 4294901760
        %827 = vmatprep.subr.mxu0 %v826
        %v828 = vand.u32 %v285, 4294901760
        %v829 = vsub.f32 %v285, %v828
        %v830 = vand.u32 %v829, 4294901760
        %v831 = vsub.f32 %v829, %v830
        %v832 = vand.u32 %v831, 4294901760
        %833 = vmatpush1.msra.mxu0 %v832
        %v834 = vand.u32 %v290, 4294901760
        %v835 = vsub.f32 %v290, %v834
        %v836 = vand.u32 %v835, 4294901760
        %v837 = vsub.f32 %v835, %v836
        %v838 = vand.u32 %v837, 4294901760
        %839 = vmatprep.subr.mxu0 %v838
        %v840 = vand.u32 %v289, 4294901760
        %v841 = vsub.f32 %v289, %v840
        %v842 = vand.u32 %v841, 4294901760
        %v843 = vsub.f32 %v841, %v842
        %v844 = vand.u32 %v843, 4294901760
        %845 = vmatpush1.msra.mxu0 %v844
        %v846 = vand.u32 %v294, 4294901760
        %v847 = vsub.f32 %v294, %v846
        %v848 = vand.u32 %v847, 4294901760
        %v849 = vsub.f32 %v847, %v848
        %v850 = vand.u32 %v849, 4294901760
        %851 = vmatprep.subr.mxu0 %v850
        %v852 = vand.u32 %v293, 4294901760
        %v853 = vsub.f32 %v293, %v852
        %v854 = vand.u32 %v853, 4294901760
        %v855 = vsub.f32 %v853, %v854
        %v856 = vand.u32 %v855, 4294901760
        %857 = vmatpush1.msra.mxu0 %v856
        %v858 = vand.u32 %v298, 4294901760
        %v859 = vsub.f32 %v298, %v858
        %v860 = vand.u32 %v859, 4294901760
        %v861 = vsub.f32 %v859, %v860
        %v862 = vand.u32 %v861, 4294901760
        %863 = vmatprep.subr.mxu0 %v862
        %v864 = vand.u32 %v297, 4294901760
        %v865 = vsub.f32 %v297, %v864
        %v866 = vand.u32 %v865, 4294901760
        %v867 = vsub.f32 %v865, %v866
        %v868 = vand.u32 %v867, 4294901760
        %869 = vmatpush1.msra.mxu0 %v868
        %v870 = vand.u32 %v302, 4294901760
        %v871 = vsub.f32 %v302, %v870
        %v872 = vand.u32 %v871, 4294901760
        %v873 = vsub.f32 %v871, %v872
        %v874 = vand.u32 %v873, 4294901760
        %875 = vmatprep.subr.mxu0 %v874
        %v876 = vand.u32 %v301, 4294901760
        %v877 = vsub.f32 %v301, %v876
        %v878 = vand.u32 %v877, 4294901760
        %v879 = vsub.f32 %v877, %v878
        %v880 = vand.u32 %v879, 4294901760
        %881 = vmatpush1.msra.mxu0 %v880
        %v882 = vand.u32 %v306, 4294901760
        %v883 = vsub.f32 %v306, %v882
        %v884 = vand.u32 %v883, 4294901760
        %v885 = vsub.f32 %v883, %v884
        %v886 = vand.u32 %v885, 4294901760
        %887 = vmatprep.subr.mxu0 %v886
        %v888 = vand.u32 %v305, 4294901760
        %v889 = vsub.f32 %v305, %v888
        %v890 = vand.u32 %v889, 4294901760
        %v891 = vsub.f32 %v889, %v890
        %v892 = vand.u32 %v891, 4294901760
        %893 = vmatpush1.msra.mxu0 %v892
        %v894 = vand.u32 %v310, 4294901760
        %v895 = vsub.f32 %v310, %v894
        %v896 = vand.u32 %v895, 4294901760
        %v897 = vsub.f32 %v895, %v896
        %v898 = vand.u32 %v897, 4294901760
        %899 = vmatprep.subr.mxu0 %v898
        %v900 = vand.u32 %v309, 4294901760
        %v901 = vsub.f32 %v309, %v900
        %v902 = vand.u32 %v901, 4294901760
        %v903 = vsub.f32 %v901, %v902
        %v904 = vand.u32 %v903, 4294901760
        %905 = vmatpush1.msra.mxu0 %v904
        %v906 = vand.u32 %v314, 4294901760
        %v907 = vsub.f32 %v314, %v906
        %v908 = vand.u32 %v907, 4294901760
        %v909 = vsub.f32 %v907, %v908
        %v910 = vand.u32 %v909, 4294901760
        %911 = vmatprep.subr.mxu0 %v910
        %v912 = vand.u32 %v313, 4294901760
        %v913 = vsub.f32 %v313, %v912
        %v914 = vand.u32 %v913, 4294901760
        %v915 = vsub.f32 %v913, %v914
        %v916 = vand.u32 %v915, 4294901760
        %917 = vmatpush1.msra.mxu0 %v916
        %v918 = vand.u32 %v318, 4294901760
        %v919 = vsub.f32 %v318, %v918
        %v920 = vand.u32 %v919, 4294901760
        %v921 = vsub.f32 %v919, %v920
        %v922 = vand.u32 %v921, 4294901760
        %923 = vmatprep.subr.mxu0 %v922
        %v924 = vand.u32 %v317, 4294901760
        %v925 = vsub.f32 %v317, %v924
        %v926 = vand.u32 %v925, 4294901760
        %v927 = vsub.f32 %v925, %v926
        %v928 = vand.u32 %v927, 4294901760
        %929 = vmatpush1.msra.mxu0 %v928
        %v930 = vand.u32 %v322, 4294901760
        %v931 = vsub.f32 %v322, %v930
        %v932 = vand.u32 %v931, 4294901760
        %v933 = vsub.f32 %v931, %v932
        %v934 = vand.u32 %v933, 4294901760
        %935 = vmatprep.subr.mxu0 %v934
        %v936 = vand.u32 %v321, 4294901760
        %v937 = vsub.f32 %v321, %v936
        %v938 = vand.u32 %v937, 4294901760
        %v939 = vsub.f32 %v937, %v938
        %v940 = vand.u32 %v939, 4294901760
        %941 = vmatpush1.msra.mxu0 %v940
        %v942 = vand.u32 %v326, 4294901760
        %v943 = vsub.f32 %v326, %v942
        %v944 = vand.u32 %v943, 4294901760
        %v945 = vsub.f32 %v943, %v944
        %v946 = vand.u32 %v945, 4294901760
        %947 = vmatprep.subr.mxu0 %v946
        %v948 = vand.u32 %v325, 4294901760
        %v949 = vsub.f32 %v325, %v948
        %v950 = vand.u32 %v949, 4294901760
        %v951 = vsub.f32 %v949, %v950
        %v952 = vand.u32 %v951, 4294901760
        %953 = vmatpush1.msra.mxu0 %v952
        %v954 = vand.u32 %v330, 4294901760
        %v955 = vsub.f32 %v330, %v954
        %v956 = vand.u32 %v955, 4294901760
        %v957 = vsub.f32 %v955, %v956
        %v958 = vand.u32 %v957, 4294901760
        %959 = vmatprep.subr.mxu0 %v958
        %v960 = vand.u32 %v329, 4294901760
        %v961 = vsub.f32 %v329, %v960
        %v962 = vand.u32 %v961, 4294901760
        %v963 = vsub.f32 %v961, %v962
        %v964 = vand.u32 %v963, 4294901760
        %965 = vmatpush1.msra.mxu0 %v964
        %v966 = vand.u32 %v334, 4294901760
        %v967 = vsub.f32 %v334, %v966
        %v968 = vand.u32 %v967, 4294901760
        %v969 = vsub.f32 %v967, %v968
        %v970 = vand.u32 %v969, 4294901760
        %971 = vmatprep.subr.mxu0 %v970
        %v972 = vand.u32 %v333, 4294901760
        %v973 = vsub.f32 %v333, %v972
        %v974 = vand.u32 %v973, 4294901760
        %v975 = vsub.f32 %v973, %v974
        %v976 = vand.u32 %v975, 4294901760
        %977 = vmatpush1.msra.mxu0 %v976
        %v978 = vand.u32 %v338, 4294901760
        %v979 = vsub.f32 %v338, %v978
        %v980 = vand.u32 %v979, 4294901760
        %v981 = vsub.f32 %v979, %v980
        %v982 = vand.u32 %v981, 4294901760
        %983 = vmatprep.subr.mxu0 %v982
        %v984 = vand.u32 %v337, 4294901760
        %v985 = vsub.f32 %v337, %v984
        %v986 = vand.u32 %v985, 4294901760
        %v987 = vsub.f32 %v985, %v986
        %v988 = vand.u32 %v987, 4294901760
        %989 = vmatpush1.msra.mxu0 %v988
        %v990 = vand.u32 %v342, 4294901760
        %v991 = vsub.f32 %v342, %v990
        %v992 = vand.u32 %v991, 4294901760
        %v993 = vsub.f32 %v991, %v992
        %v994 = vand.u32 %v993, 4294901760
        %995 = vmatprep.subr.mxu0 %v994
        %v996 = vand.u32 %v341, 4294901760
        %v997 = vsub.f32 %v341, %v996
        %v998 = vand.u32 %v997, 4294901760
        %v999 = vsub.f32 %v997, %v998
        %v1000 = vand.u32 %v999, 4294901760
        %1001 = vmatpush1.msra.mxu0 %v1000
        %v1002 = vand.u32 %v214, 4294901760
        %1003 = vmatprep.mubr.f32.mxu0 %v1002
        %v1004 = vand.u32 %v213, 4294901760
        %1005 = vmatmul.mubr.f32.gmra.mrb[0].mxu0 %v1004
        %v1006 = vpop.f32.mrb[0].mxu0
        %v1007 = vadd.f32 %v614, %v1006
        %v1008 = vpop.f32.mrb[0].mxu0
        %v1009 = vadd.f32 %v616, %v1008
        %1010 = vdwg.mxu0
        %v1011 = vand.u32 %v218, 4294901760
        %v1012 = vsub.f32 %v218, %v1011
        %1013 = vmatprep.subr.mxu0 %v1012
        %v1014 = vand.u32 %v217, 4294901760
        %v1015 = vsub.f32 %v217, %v1014
        %1016 = vmatpush1.msra.mxu0 %v1015
        %v1017 = vand.u32 %v222, 4294901760
        %v1018 = vsub.f32 %v222, %v1017
        %1019 = vmatprep.subr.mxu0 %v1018
        %v1020 = vand.u32 %v221, 4294901760
        %v1021 = vsub.f32 %v221, %v1020
        %1022 = vmatpush1.msra.mxu0 %v1021
        %v1023 = vand.u32 %v226, 4294901760
        %v1024 = vsub.f32 %v226, %v1023
        %1025 = vmatprep.subr.mxu0 %v1024
        %v1026 = vand.u32 %v225, 4294901760
        %v1027 = vsub.f32 %v225, %v1026
        %1028 = vmatpush1.msra.mxu0 %v1027
        %v1029 = vand.u32 %v230, 4294901760
        %v1030 = vsub.f32 %v230, %v1029
        %1031 = vmatprep.subr.mxu0 %v1030
        %v1032 = vand.u32 %v229, 4294901760
        %v1033 = vsub.f32 %v229, %v1032
        %1034 = vmatpush1.msra.mxu0 %v1033
        %v1035 = vand.u32 %v234, 4294901760
        %v1036 = vsub.f32 %v234, %v1035
        %1037 = vmatprep.subr.mxu0 %v1036
        %v1038 = vand.u32 %v233, 4294901760
        %v1039 = vsub.f32 %v233, %v1038
        %1040 = vmatpush1.msra.mxu0 %v1039
        %v1041 = vand.u32 %v238, 4294901760
        %v1042 = vsub.f32 %v238, %v1041
        %1043 = vmatprep.subr.mxu0 %v1042
        %v1044 = vand.u32 %v237, 4294901760
        %v1045 = vsub.f32 %v237, %v1044
        %1046 = vmatpush1.msra.mxu0 %v1045
        %v1047 = vand.u32 %v242, 4294901760
        %v1048 = vsub.f32 %v242, %v1047
        %1049 = vmatprep.subr.mxu0 %v1048
        %v1050 = vand.u32 %v241, 4294901760
        %v1051 = vsub.f32 %v241, %v1050
        %1052 = vmatpush1.msra.mxu0 %v1051
        %v1053 = vand.u32 %v246, 4294901760
        %v1054 = vsub.f32 %v246, %v1053
        %1055 = vmatprep.subr.mxu0 %v1054
        %v1056 = vand.u32 %v245, 4294901760
        %v1057 = vsub.f32 %v245, %v1056
        %1058 = vmatpush1.msra.mxu0 %v1057
        %v1059 = vand.u32 %v250, 4294901760
        %v1060 = vsub.f32 %v250, %v1059
        %1061 = vmatprep.subr.mxu0 %v1060
        %v1062 = vand.u32 %v249, 4294901760
        %v1063 = vsub.f32 %v249, %v1062
        %1064 = vmatpush1.msra.mxu0 %v1063
        %v1065 = vand.u32 %v254, 4294901760
        %v1066 = vsub.f32 %v254, %v1065
        %1067 = vmatprep.subr.mxu0 %v1066
        %v1068 = vand.u32 %v253, 4294901760
        %v1069 = vsub.f32 %v253, %v1068
        %1070 = vmatpush1.msra.mxu0 %v1069
        %v1071 = vand.u32 %v258, 4294901760
        %v1072 = vsub.f32 %v258, %v1071
        %1073 = vmatprep.subr.mxu0 %v1072
        %v1074 = vand.u32 %v257, 4294901760
        %v1075 = vsub.f32 %v257, %v1074
        %1076 = vmatpush1.msra.mxu0 %v1075
        %v1077 = vand.u32 %v262, 4294901760
        %v1078 = vsub.f32 %v262, %v1077
        %1079 = vmatprep.subr.mxu0 %v1078
        %v1080 = vand.u32 %v261, 4294901760
        %v1081 = vsub.f32 %v261, %v1080
        %1082 = vmatpush1.msra.mxu0 %v1081
        %v1083 = vand.u32 %v266, 4294901760
        %v1084 = vsub.f32 %v266, %v1083
        %1085 = vmatprep.subr.mxu0 %v1084
        %v1086 = vand.u32 %v265, 4294901760
        %v1087 = vsub.f32 %v265, %v1086
        %1088 = vmatpush1.msra.mxu0 %v1087
        %v1089 = vand.u32 %v270, 4294901760
        %v1090 = vsub.f32 %v270, %v1089
        %1091 = vmatprep.subr.mxu0 %v1090
        %v1092 = vand.u32 %v269, 4294901760
        %v1093 = vsub.f32 %v269, %v1092
        %1094 = vmatpush1.msra.mxu0 %v1093
        %v1095 = vand.u32 %v274, 4294901760
        %v1096 = vsub.f32 %v274, %v1095
        %1097 = vmatprep.subr.mxu0 %v1096
        %v1098 = vand.u32 %v273, 4294901760
        %v1099 = vsub.f32 %v273, %v1098
        %1100 = vmatpush1.msra.mxu0 %v1099
        %v1101 = vand.u32 %v278, 4294901760
        %v1102 = vsub.f32 %v278, %v1101
        %1103 = vmatprep.subr.mxu0 %v1102
        %v1104 = vand.u32 %v277, 4294901760
        %v1105 = vsub.f32 %v277, %v1104
        %1106 = vmatpush1.msra.mxu0 %v1105
        %v1107 = vand.u32 %v282, 4294901760
        %v1108 = vsub.f32 %v282, %v1107
        %1109 = vmatprep.subr.mxu0 %v1108
        %v1110 = vand.u32 %v281, 4294901760
        %v1111 = vsub.f32 %v281, %v1110
        %1112 = vmatpush1.msra.mxu0 %v1111
        %v1113 = vand.u32 %v286, 4294901760
        %v1114 = vsub.f32 %v286, %v1113
        %1115 = vmatprep.subr.mxu0 %v1114
        %v1116 = vand.u32 %v285, 4294901760
        %v1117 = vsub.f32 %v285, %v1116
        %1118 = vmatpush1.msra.mxu0 %v1117
        %v1119 = vand.u32 %v290, 4294901760
        %v1120 = vsub.f32 %v290, %v1119
        %1121 = vmatprep.subr.mxu0 %v1120
        %v1122 = vand.u32 %v289, 4294901760
        %v1123 = vsub.f32 %v289, %v1122
        %1124 = vmatpush1.msra.mxu0 %v1123
        %v1125 = vand.u32 %v294, 4294901760
        %v1126 = vsub.f32 %v294, %v1125
        %1127 = vmatprep.subr.mxu0 %v1126
        %v1128 = vand.u32 %v293, 4294901760
        %v1129 = vsub.f32 %v293, %v1128
        %1130 = vmatpush1.msra.mxu0 %v1129
        %v1131 = vand.u32 %v298, 4294901760
        %v1132 = vsub.f32 %v298, %v1131
        %1133 = vmatprep.subr.mxu0 %v1132
        %v1134 = vand.u32 %v297, 4294901760
        %v1135 = vsub.f32 %v297, %v1134
        %1136 = vmatpush1.msra.mxu0 %v1135
        %v1137 = vand.u32 %v302, 4294901760
        %v1138 = vsub.f32 %v302, %v1137
        %1139 = vmatprep.subr.mxu0 %v1138
        %v1140 = vand.u32 %v301, 4294901760
        %v1141 = vsub.f32 %v301, %v1140
        %1142 = vmatpush1.msra.mxu0 %v1141
        %v1143 = vand.u32 %v306, 4294901760
        %v1144 = vsub.f32 %v306, %v1143
        %1145 = vmatprep.subr.mxu0 %v1144
        %v1146 = vand.u32 %v305, 4294901760
        %v1147 = vsub.f32 %v305, %v1146
        %1148 = vmatpush1.msra.mxu0 %v1147
        %v1149 = vand.u32 %v310, 4294901760
        %v1150 = vsub.f32 %v310, %v1149
        %1151 = vmatprep.subr.mxu0 %v1150
        %v1152 = vand.u32 %v309, 4294901760
        %v1153 = vsub.f32 %v309, %v1152
        %1154 = vmatpush1.msra.mxu0 %v1153
        %v1155 = vand.u32 %v314, 4294901760
        %v1156 = vsub.f32 %v314, %v1155
        %1157 = vmatprep.subr.mxu0 %v1156
        %v1158 = vand.u32 %v313, 4294901760
        %v1159 = vsub.f32 %v313, %v1158
        %1160 = vmatpush1.msra.mxu0 %v1159
        %v1161 = vand.u32 %v318, 4294901760
        %v1162 = vsub.f32 %v318, %v1161
        %1163 = vmatprep.subr.mxu0 %v1162
        %v1164 = vand.u32 %v317, 4294901760
        %v1165 = vsub.f32 %v317, %v1164
        %1166 = vmatpush1.msra.mxu0 %v1165
        %v1167 = vand.u32 %v322, 4294901760
        %v1168 = vsub.f32 %v322, %v1167
        %1169 = vmatprep.subr.mxu0 %v1168
        %v1170 = vand.u32 %v321, 4294901760
        %v1171 = vsub.f32 %v321, %v1170
        %1172 = vmatpush1.msra.mxu0 %v1171
        %v1173 = vand.u32 %v326, 4294901760
        %v1174 = vsub.f32 %v326, %v1173
        %1175 = vmatprep.subr.mxu0 %v1174
        %v1176 = vand.u32 %v325, 4294901760
        %v1177 = vsub.f32 %v325, %v1176
        %1178 = vmatpush1.msra.mxu0 %v1177
        %v1179 = vand.u32 %v330, 4294901760
        %v1180 = vsub.f32 %v330, %v1179
        %1181 = vmatprep.subr.mxu0 %v1180
        %v1182 = vand.u32 %v329, 4294901760
        %v1183 = vsub.f32 %v329, %v1182
        %1184 = vmatpush1.msra.mxu0 %v1183
        %v1185 = vand.u32 %v334, 4294901760
        %v1186 = vsub.f32 %v334, %v1185
        %1187 = vmatprep.subr.mxu0 %v1186
        %v1188 = vand.u32 %v333, 4294901760
        %v1189 = vsub.f32 %v333, %v1188
        %1190 = vmatpush1.msra.mxu0 %v1189
        %v1191 = vand.u32 %v338, 4294901760
        %v1192 = vsub.f32 %v338, %v1191
        %1193 = vmatprep.subr.mxu0 %v1192
        %v1194 = vand.u32 %v337, 4294901760
        %v1195 = vsub.f32 %v337, %v1194
        %1196 = vmatpush1.msra.mxu0 %v1195
        %v1197 = vand.u32 %v342, 4294901760
        %v1198 = vsub.f32 %v342, %v1197
        %1199 = vmatprep.subr.mxu0 %v1198
        %v1200 = vand.u32 %v341, 4294901760
        %v1201 = vsub.f32 %v341, %v1200
        %1202 = vmatpush1.msra.mxu0 %v1201
        %v1203 = vand.u32 %v214, 4294901760
        %v1204 = vsub.f32 %v214, %v1203
        %1205 = vmatprep.mubr.f32.mxu0 %v1204
        %v1206 = vand.u32 %v213, 4294901760
        %v1207 = vsub.f32 %v213, %v1206
        %1208 = vmatmul.mubr.f32.gmra.mrb[0].mxu0 %v1207
        %v1209 = vpop.f32.mrb[0].mxu0
        %v1210 = vadd.f32 %v1007, %v1209
        %v1211 = vpop.f32.mrb[0].mxu0
        %v1212 = vadd.f32 %v1009, %v1211
        %1213 = vdwg.mxu0
        %v1214 = vand.u32 %v218, 4294901760
        %1215 = vmatprep.subr.mxu0 %v1214
        %v1216 = vand.u32 %v217, 4294901760
        %1217 = vmatpush1.msra.mxu0 %v1216
        %v1218 = vand.u32 %v222, 4294901760
        %1219 = vmatprep.subr.mxu0 %v1218
        %v1220 = vand.u32 %v221, 4294901760
        %1221 = vmatpush1.msra.mxu0 %v1220
        %v1222 = vand.u32 %v226, 4294901760
        %1223 = vmatprep.subr.mxu0 %v1222
        %v1224 = vand.u32 %v225, 4294901760
        %1225 = vmatpush1.msra.mxu0 %v1224
        %v1226 = vand.u32 %v230, 4294901760
        %1227 = vmatprep.subr.mxu0 %v1226
        %v1228 = vand.u32 %v229, 4294901760
        %1229 = vmatpush1.msra.mxu0 %v1228
        %v1230 = vand.u32 %v234, 4294901760
        %1231 = vmatprep.subr.mxu0 %v1230
        %v1232 = vand.u32 %v233, 4294901760
        %1233 = vmatpush1.msra.mxu0 %v1232
        %v1234 = vand.u32 %v238, 4294901760
        %1235 = vmatprep.subr.mxu0 %v1234
        %v1236 = vand.u32 %v237, 4294901760
        %1237 = vmatpush1.msra.mxu0 %v1236
        %v1238 = vand.u32 %v242, 4294901760
        %1239 = vmatprep.subr.mxu0 %v1238
        %v1240 = vand.u32 %v241, 4294901760
        %1241 = vmatpush1.msra.mxu0 %v1240
        %v1242 = vand.u32 %v246, 4294901760
        %1243 = vmatprep.subr.mxu0 %v1242
        %v1244 = vand.u32 %v245, 4294901760
        %1245 = vmatpush1.msra.mxu0 %v1244
        %v1246 = vand.u32 %v250, 4294901760
        %1247 = vmatprep.subr.mxu0 %v1246
        %v1248 = vand.u32 %v249, 4294901760
        %1249 = vmatpush1.msra.mxu0 %v1248
        %v1250 = vand.u32 %v254, 4294901760
        %1251 = vmatprep.subr.mxu0 %v1250
        %v1252 = vand.u32 %v253, 4294901760
        %1253 = vmatpush1.msra.mxu0 %v1252
        %v1254 = vand.u32 %v258, 4294901760
        %1255 = vmatprep.subr.mxu0 %v1254
        %v1256 = vand.u32 %v257, 4294901760
        %1257 = vmatpush1.msra.mxu0 %v1256
        %v1258 = vand.u32 %v262, 4294901760
        %1259 = vmatprep.subr.mxu0 %v1258
        %v1260 = vand.u32 %v261, 4294901760
        %1261 = vmatpush1.msra.mxu0 %v1260
        %v1262 = vand.u32 %v266, 4294901760
        %1263 = vmatprep.subr.mxu0 %v1262
        %v1264 = vand.u32 %v265, 4294901760
        %1265 = vmatpush1.msra.mxu0 %v1264
        %v1266 = vand.u32 %v270, 4294901760
        %1267 = vmatprep.subr.mxu0 %v1266
        %v1268 = vand.u32 %v269, 4294901760
        %1269 = vmatpush1.msra.mxu0 %v1268
        %v1270 = vand.u32 %v274, 4294901760
        %1271 = vmatprep.subr.mxu0 %v1270
        %v1272 = vand.u32 %v273, 4294901760
        %1273 = vmatpush1.msra.mxu0 %v1272
        %v1274 = vand.u32 %v278, 4294901760
        %1275 = vmatprep.subr.mxu0 %v1274
        %v1276 = vand.u32 %v277, 4294901760
        %1277 = vmatpush1.msra.mxu0 %v1276
        %v1278 = vand.u32 %v282, 4294901760
        %1279 = vmatprep.subr.mxu0 %v1278
        %v1280 = vand.u32 %v281, 4294901760
        %1281 = vmatpush1.msra.mxu0 %v1280
        %v1282 = vand.u32 %v286, 4294901760
        %1283 = vmatprep.subr.mxu0 %v1282
        %v1284 = vand.u32 %v285, 4294901760
        %1285 = vmatpush1.msra.mxu0 %v1284
        %v1286 = vand.u32 %v290, 4294901760
        %1287 = vmatprep.subr.mxu0 %v1286
        %v1288 = vand.u32 %v289, 4294901760
        %1289 = vmatpush1.msra.mxu0 %v1288
        %v1290 = vand.u32 %v294, 4294901760
        %1291 = vmatprep.subr.mxu0 %v1290
        %v1292 = vand.u32 %v293, 4294901760
        %1293 = vmatpush1.msra.mxu0 %v1292
        %v1294 = vand.u32 %v298, 4294901760
        %1295 = vmatprep.subr.mxu0 %v1294
        %v1296 = vand.u32 %v297, 4294901760
        %1297 = vmatpush1.msra.mxu0 %v1296
        %v1298 = vand.u32 %v302, 4294901760
        %1299 = vmatprep.subr.mxu0 %v1298
        %v1300 = vand.u32 %v301, 4294901760
        %1301 = vmatpush1.msra.mxu0 %v1300
        %v1302 = vand.u32 %v306, 4294901760
        %1303 = vmatprep.subr.mxu0 %v1302
        %v1304 = vand.u32 %v305, 4294901760
        %1305 = vmatpush1.msra.mxu0 %v1304
        %v1306 = vand.u32 %v310, 4294901760
        %1307 = vmatprep.subr.mxu0 %v1306
        %v1308 = vand.u32 %v309, 4294901760
        %1309 = vmatpush1.msra.mxu0 %v1308
        %v1310 = vand.u32 %v314, 4294901760
        %1311 = vmatprep.subr.mxu0 %v1310
        %v1312 = vand.u32 %v313, 4294901760
        %1313 = vmatpush1.msra.mxu0 %v1312
        %v1314 = vand.u32 %v318, 4294901760
        %1315 = vmatprep.subr.mxu0 %v1314
        %v1316 = vand.u32 %v317, 4294901760
        %1317 = vmatpush1.msra.mxu0 %v1316
        %v1318 = vand.u32 %v322, 4294901760
        %1319 = vmatprep.subr.mxu0 %v1318
        %v1320 = vand.u32 %v321, 4294901760
        %1321 = vmatpush1.msra.mxu0 %v1320
        %v1322 = vand.u32 %v326, 4294901760
        %1323 = vmatprep.subr.mxu0 %v1322
        %v1324 = vand.u32 %v325, 4294901760
        %1325 = vmatpush1.msra.mxu0 %v1324
        %v1326 = vand.u32 %v330, 4294901760
        %1327 = vmatprep.subr.mxu0 %v1326
        %v1328 = vand.u32 %v329, 4294901760
        %1329 = vmatpush1.msra.mxu0 %v1328
        %v1330 = vand.u32 %v334, 4294901760
        %1331 = vmatprep.subr.mxu0 %v1330
        %v1332 = vand.u32 %v333, 4294901760
        %1333 = vmatpush1.msra.mxu0 %v1332
        %v1334 = vand.u32 %v338, 4294901760
        %1335 = vmatprep.subr.mxu0 %v1334
        %v1336 = vand.u32 %v337, 4294901760
        %1337 = vmatpush1.msra.mxu0 %v1336
        %v1338 = vand.u32 %v342, 4294901760
        %1339 = vmatprep.subr.mxu0 %v1338
        %v1340 = vand.u32 %v341, 4294901760
        %1341 = vmatpush1.msra.mxu0 %v1340
        %v1342 = vand.u32 %v214, 4294901760
        %v1343 = vsub.f32 %v214, %v1342
        %v1344 = vand.u32 %v1343, 4294901760
        %1345 = vmatprep.mubr.f32.mxu0 %v1344
        %v1346 = vand.u32 %v213, 4294901760
        %v1347 = vsub.f32 %v213, %v1346
        %v1348 = vand.u32 %v1347, 4294901760
        %1349 = vmatmul.mubr.f32.gmra.mrb[0].mxu0 %v1348
        %v1350 = vpop.f32.mrb[0].mxu0
        %v1351 = vadd.f32 %v1210, %v1350
        %v1352 = vpop.f32.mrb[0].mxu0
        %v1353 = vadd.f32 %v1212, %v1352
        %1354 = vdwg.mxu0
        %v1355 = vand.u32 %v218, 4294901760
        %v1356 = vsub.f32 %v218, %v1355
        %v1357 = vand.u32 %v1356, 4294901760
        %1358 = vmatprep.subr.mxu0 %v1357
        %v1359 = vand.u32 %v217, 4294901760
        %v1360 = vsub.f32 %v217, %v1359
        %v1361 = vand.u32 %v1360, 4294901760
        %1362 = vmatpush1.msra.mxu0 %v1361
        %v1363 = vand.u32 %v222, 4294901760
        %v1364 = vsub.f32 %v222, %v1363
        %v1365 = vand.u32 %v1364, 4294901760
        %1366 = vmatprep.subr.mxu0 %v1365
        %v1367 = vand.u32 %v221, 4294901760
        %v1368 = vsub.f32 %v221, %v1367
        %v1369 = vand.u32 %v1368, 4294901760
        %1370 = vmatpush1.msra.mxu0 %v1369
        %v1371 = vand.u32 %v226, 4294901760
        %v1372 = vsub.f32 %v226, %v1371
        %v1373 = vand.u32 %v1372, 4294901760
        %1374 = vmatprep.subr.mxu0 %v1373
        %v1375 = vand.u32 %v225, 4294901760
        %v1376 = vsub.f32 %v225, %v1375
        %v1377 = vand.u32 %v1376, 4294901760
        %1378 = vmatpush1.msra.mxu0 %v1377
        %v1379 = vand.u32 %v230, 4294901760
        %v1380 = vsub.f32 %v230, %v1379
        %v1381 = vand.u32 %v1380, 4294901760
        %1382 = vmatprep.subr.mxu0 %v1381
        %v1383 = vand.u32 %v229, 4294901760
        %v1384 = vsub.f32 %v229, %v1383
        %v1385 = vand.u32 %v1384, 4294901760
        %1386 = vmatpush1.msra.mxu0 %v1385
        %v1387 = vand.u32 %v234, 4294901760
        %v1388 = vsub.f32 %v234, %v1387
        %v1389 = vand.u32 %v1388, 4294901760
        %1390 = vmatprep.subr.mxu0 %v1389
        %v1391 = vand.u32 %v233, 4294901760
        %v1392 = vsub.f32 %v233, %v1391
        %v1393 = vand.u32 %v1392, 4294901760
        %1394 = vmatpush1.msra.mxu0 %v1393
        %v1395 = vand.u32 %v238, 4294901760
        %v1396 = vsub.f32 %v238, %v1395
        %v1397 = vand.u32 %v1396, 4294901760
        %1398 = vmatprep.subr.mxu0 %v1397
        %v1399 = vand.u32 %v237, 4294901760
        %v1400 = vsub.f32 %v237, %v1399
        %v1401 = vand.u32 %v1400, 4294901760
        %1402 = vmatpush1.msra.mxu0 %v1401
        %v1403 = vand.u32 %v242, 4294901760
        %v1404 = vsub.f32 %v242, %v1403
        %v1405 = vand.u32 %v1404, 4294901760
        %1406 = vmatprep.subr.mxu0 %v1405
        %v1407 = vand.u32 %v241, 4294901760
        %v1408 = vsub.f32 %v241, %v1407
        %v1409 = vand.u32 %v1408, 4294901760
        %1410 = vmatpush1.msra.mxu0 %v1409
        %v1411 = vand.u32 %v246, 4294901760
        %v1412 = vsub.f32 %v246, %v1411
        %v1413 = vand.u32 %v1412, 4294901760
        %1414 = vmatprep.subr.mxu0 %v1413
        %v1415 = vand.u32 %v245, 4294901760
        %v1416 = vsub.f32 %v245, %v1415
        %v1417 = vand.u32 %v1416, 4294901760
        %1418 = vmatpush1.msra.mxu0 %v1417
        %v1419 = vand.u32 %v250, 4294901760
        %v1420 = vsub.f32 %v250, %v1419
        %v1421 = vand.u32 %v1420, 4294901760
        %1422 = vmatprep.subr.mxu0 %v1421
        %v1423 = vand.u32 %v249, 4294901760
        %v1424 = vsub.f32 %v249, %v1423
        %v1425 = vand.u32 %v1424, 4294901760
        %1426 = vmatpush1.msra.mxu0 %v1425
        %v1427 = vand.u32 %v254, 4294901760
        %v1428 = vsub.f32 %v254, %v1427
        %v1429 = vand.u32 %v1428, 4294901760
        %1430 = vmatprep.subr.mxu0 %v1429
        %v1431 = vand.u32 %v253, 4294901760
        %v1432 = vsub.f32 %v253, %v1431
        %v1433 = vand.u32 %v1432, 4294901760
        %1434 = vmatpush1.msra.mxu0 %v1433
        %v1435 = vand.u32 %v258, 4294901760
        %v1436 = vsub.f32 %v258, %v1435
        %v1437 = vand.u32 %v1436, 4294901760
        %1438 = vmatprep.subr.mxu0 %v1437
        %v1439 = vand.u32 %v257, 4294901760
        %v1440 = vsub.f32 %v257, %v1439
        %v1441 = vand.u32 %v1440, 4294901760
        %1442 = vmatpush1.msra.mxu0 %v1441
        %v1443 = vand.u32 %v262, 4294901760
        %v1444 = vsub.f32 %v262, %v1443
        %v1445 = vand.u32 %v1444, 4294901760
        %1446 = vmatprep.subr.mxu0 %v1445
        %v1447 = vand.u32 %v261, 4294901760
        %v1448 = vsub.f32 %v261, %v1447
        %v1449 = vand.u32 %v1448, 4294901760
        %1450 = vmatpush1.msra.mxu0 %v1449
        %v1451 = vand.u32 %v266, 4294901760
        %v1452 = vsub.f32 %v266, %v1451
        %v1453 = vand.u32 %v1452, 4294901760
        %1454 = vmatprep.subr.mxu0 %v1453
        %v1455 = vand.u32 %v265, 4294901760
        %v1456 = vsub.f32 %v265, %v1455
        %v1457 = vand.u32 %v1456, 4294901760
        %1458 = vmatpush1.msra.mxu0 %v1457
        %v1459 = vand.u32 %v270, 4294901760
        %v1460 = vsub.f32 %v270, %v1459
        %v1461 = vand.u32 %v1460, 4294901760
        %1462 = vmatprep.subr.mxu0 %v1461
        %v1463 = vand.u32 %v269, 4294901760
        %v1464 = vsub.f32 %v269, %v1463
        %v1465 = vand.u32 %v1464, 4294901760
        %1466 = vmatpush1.msra.mxu0 %v1465
        %v1467 = vand.u32 %v274, 4294901760
        %v1468 = vsub.f32 %v274, %v1467
        %v1469 = vand.u32 %v1468, 4294901760
        %1470 = vmatprep.subr.mxu0 %v1469
        %v1471 = vand.u32 %v273, 4294901760
        %v1472 = vsub.f32 %v273, %v1471
        %v1473 = vand.u32 %v1472, 4294901760
        %1474 = vmatpush1.msra.mxu0 %v1473
        %v1475 = vand.u32 %v278, 4294901760
        %v1476 = vsub.f32 %v278, %v1475
        %v1477 = vand.u32 %v1476, 4294901760
        %1478 = vmatprep.subr.mxu0 %v1477
        %v1479 = vand.u32 %v277, 4294901760
        %v1480 = vsub.f32 %v277, %v1479
        %v1481 = vand.u32 %v1480, 4294901760
        %1482 = vmatpush1.msra.mxu0 %v1481
        %v1483 = vand.u32 %v282, 4294901760
        %v1484 = vsub.f32 %v282, %v1483
        %v1485 = vand.u32 %v1484, 4294901760
        %1486 = vmatprep.subr.mxu0 %v1485
        %v1487 = vand.u32 %v281, 4294901760
        %v1488 = vsub.f32 %v281, %v1487
        %v1489 = vand.u32 %v1488, 4294901760
        %1490 = vmatpush1.msra.mxu0 %v1489
        %v1491 = vand.u32 %v286, 4294901760
        %v1492 = vsub.f32 %v286, %v1491
        %v1493 = vand.u32 %v1492, 4294901760
        %1494 = vmatprep.subr.mxu0 %v1493
        %v1495 = vand.u32 %v285, 4294901760
        %v1496 = vsub.f32 %v285, %v1495
        %v1497 = vand.u32 %v1496, 4294901760
        %1498 = vmatpush1.msra.mxu0 %v1497
        %v1499 = vand.u32 %v290, 4294901760
        %v1500 = vsub.f32 %v290, %v1499
        %v1501 = vand.u32 %v1500, 4294901760
        %1502 = vmatprep.subr.mxu0 %v1501
        %v1503 = vand.u32 %v289, 4294901760
        %v1504 = vsub.f32 %v289, %v1503
        %v1505 = vand.u32 %v1504, 4294901760
        %1506 = vmatpush1.msra.mxu0 %v1505
        %v1507 = vand.u32 %v294, 4294901760
        %v1508 = vsub.f32 %v294, %v1507
        %v1509 = vand.u32 %v1508, 4294901760
        %1510 = vmatprep.subr.mxu0 %v1509
        %v1511 = vand.u32 %v293, 4294901760
        %v1512 = vsub.f32 %v293, %v1511
        %v1513 = vand.u32 %v1512, 4294901760
        %1514 = vmatpush1.msra.mxu0 %v1513
        %v1515 = vand.u32 %v298, 4294901760
        %v1516 = vsub.f32 %v298, %v1515
        %v1517 = vand.u32 %v1516, 4294901760
        %1518 = vmatprep.subr.mxu0 %v1517
        %v1519 = vand.u32 %v297, 4294901760
        %v1520 = vsub.f32 %v297, %v1519
        %v1521 = vand.u32 %v1520, 4294901760
        %1522 = vmatpush1.msra.mxu0 %v1521
        %v1523 = vand.u32 %v302, 4294901760
        %v1524 = vsub.f32 %v302, %v1523
        %v1525 = vand.u32 %v1524, 4294901760
        %1526 = vmatprep.subr.mxu0 %v1525
        %v1527 = vand.u32 %v301, 4294901760
        %v1528 = vsub.f32 %v301, %v1527
        %v1529 = vand.u32 %v1528, 4294901760
        %1530 = vmatpush1.msra.mxu0 %v1529
        %v1531 = vand.u32 %v306, 4294901760
        %v1532 = vsub.f32 %v306, %v1531
        %v1533 = vand.u32 %v1532, 4294901760
        %1534 = vmatprep.subr.mxu0 %v1533
        %v1535 = vand.u32 %v305, 4294901760
        %v1536 = vsub.f32 %v305, %v1535
        %v1537 = vand.u32 %v1536, 4294901760
        %1538 = vmatpush1.msra.mxu0 %v1537
        %v1539 = vand.u32 %v310, 4294901760
        %v1540 = vsub.f32 %v310, %v1539
        %v1541 = vand.u32 %v1540, 4294901760
        %1542 = vmatprep.subr.mxu0 %v1541
        %v1543 = vand.u32 %v309, 4294901760
        %v1544 = vsub.f32 %v309, %v1543
        %v1545 = vand.u32 %v1544, 4294901760
        %1546 = vmatpush1.msra.mxu0 %v1545
        %v1547 = vand.u32 %v314, 4294901760
        %v1548 = vsub.f32 %v314, %v1547
        %v1549 = vand.u32 %v1548, 4294901760
        %1550 = vmatprep.subr.mxu0 %v1549
        %v1551 = vand.u32 %v313, 4294901760
        %v1552 = vsub.f32 %v313, %v1551
        %v1553 = vand.u32 %v1552, 4294901760
        %1554 = vmatpush1.msra.mxu0 %v1553
        %v1555 = vand.u32 %v318, 4294901760
        %v1556 = vsub.f32 %v318, %v1555
        %v1557 = vand.u32 %v1556, 4294901760
        %1558 = vmatprep.subr.mxu0 %v1557
        %v1559 = vand.u32 %v317, 4294901760
        %v1560 = vsub.f32 %v317, %v1559
        %v1561 = vand.u32 %v1560, 4294901760
        %1562 = vmatpush1.msra.mxu0 %v1561
        %v1563 = vand.u32 %v322, 4294901760
        %v1564 = vsub.f32 %v322, %v1563
        %v1565 = vand.u32 %v1564, 4294901760
        %1566 = vmatprep.subr.mxu0 %v1565
        %v1567 = vand.u32 %v321, 4294901760
        %v1568 = vsub.f32 %v321, %v1567
        %v1569 = vand.u32 %v1568, 4294901760
        %1570 = vmatpush1.msra.mxu0 %v1569
        %v1571 = vand.u32 %v326, 4294901760
        %v1572 = vsub.f32 %v326, %v1571
        %v1573 = vand.u32 %v1572, 4294901760
        %1574 = vmatprep.subr.mxu0 %v1573
        %v1575 = vand.u32 %v325, 4294901760
        %v1576 = vsub.f32 %v325, %v1575
        %v1577 = vand.u32 %v1576, 4294901760
        %1578 = vmatpush1.msra.mxu0 %v1577
        %v1579 = vand.u32 %v330, 4294901760
        %v1580 = vsub.f32 %v330, %v1579
        %v1581 = vand.u32 %v1580, 4294901760
        %1582 = vmatprep.subr.mxu0 %v1581
        %v1583 = vand.u32 %v329, 4294901760
        %v1584 = vsub.f32 %v329, %v1583
        %v1585 = vand.u32 %v1584, 4294901760
        %1586 = vmatpush1.msra.mxu0 %v1585
        %v1587 = vand.u32 %v334, 4294901760
        %v1588 = vsub.f32 %v334, %v1587
        %v1589 = vand.u32 %v1588, 4294901760
        %1590 = vmatprep.subr.mxu0 %v1589
        %v1591 = vand.u32 %v333, 4294901760
        %v1592 = vsub.f32 %v333, %v1591
        %v1593 = vand.u32 %v1592, 4294901760
        %1594 = vmatpush1.msra.mxu0 %v1593
        %v1595 = vand.u32 %v338, 4294901760
        %v1596 = vsub.f32 %v338, %v1595
        %v1597 = vand.u32 %v1596, 4294901760
        %1598 = vmatprep.subr.mxu0 %v1597
        %v1599 = vand.u32 %v337, 4294901760
        %v1600 = vsub.f32 %v337, %v1599
        %v1601 = vand.u32 %v1600, 4294901760
        %1602 = vmatpush1.msra.mxu0 %v1601
        %v1603 = vand.u32 %v342, 4294901760
        %v1604 = vsub.f32 %v342, %v1603
        %v1605 = vand.u32 %v1604, 4294901760
        %1606 = vmatprep.subr.mxu0 %v1605
        %v1607 = vand.u32 %v341, 4294901760
        %v1608 = vsub.f32 %v341, %v1607
        %v1609 = vand.u32 %v1608, 4294901760
        %1610 = vmatpush1.msra.mxu0 %v1609
        %v1611 = vand.u32 %v214, 4294901760
        %1612 = vmatprep.mubr.f32.mxu0 %v1611
        %v1613 = vand.u32 %v213, 4294901760
        %1614 = vmatmul.mubr.f32.gmra.mrb[0].mxu0 %v1613
        %v1615 = vpop.f32.mrb[0].mxu0
        %v1616 = vadd.f32 %v1351, %v1615
        %v1617 = vpop.f32.mrb[0].mxu0
        %v1618 = vadd.f32 %v1353, %v1617
        %1619 = vdwg.mxu0
        %v1620 = vand.u32 %v218, 4294901760
        %1621 = vmatprep.subr.mxu0 %v1620
        %v1622 = vand.u32 %v217, 4294901760
        %1623 = vmatpush1.msra.mxu0 %v1622
        %v1624 = vand.u32 %v222, 4294901760
        %1625 = vmatprep.subr.mxu0 %v1624
        %v1626 = vand.u32 %v221, 4294901760
        %1627 = vmatpush1.msra.mxu0 %v1626
        %v1628 = vand.u32 %v226, 4294901760
        %1629 = vmatprep.subr.mxu0 %v1628
        %v1630 = vand.u32 %v225, 4294901760
        %1631 = vmatpush1.msra.mxu0 %v1630
        %v1632 = vand.u32 %v230, 4294901760
        %1633 = vmatprep.subr.mxu0 %v1632
        %v1634 = vand.u32 %v229, 4294901760
        %1635 = vmatpush1.msra.mxu0 %v1634
        %v1636 = vand.u32 %v234, 4294901760
        %1637 = vmatprep.subr.mxu0 %v1636
        %v1638 = vand.u32 %v233, 4294901760
        %1639 = vmatpush1.msra.mxu0 %v1638
        %v1640 = vand.u32 %v238, 4294901760
        %1641 = vmatprep.subr.mxu0 %v1640
        %v1642 = vand.u32 %v237, 4294901760
        %1643 = vmatpush1.msra.mxu0 %v1642
        %v1644 = vand.u32 %v242, 4294901760
        %1645 = vmatprep.subr.mxu0 %v1644
        %v1646 = vand.u32 %v241, 4294901760
        %1647 = vmatpush1.msra.mxu0 %v1646
        %v1648 = vand.u32 %v246, 4294901760
        %1649 = vmatprep.subr.mxu0 %v1648
        %v1650 = vand.u32 %v245, 4294901760
        %1651 = vmatpush1.msra.mxu0 %v1650
        %v1652 = vand.u32 %v250, 4294901760
        %1653 = vmatprep.subr.mxu0 %v1652
        %v1654 = vand.u32 %v249, 4294901760
        %1655 = vmatpush1.msra.mxu0 %v1654
        %v1656 = vand.u32 %v254, 4294901760
        %1657 = vmatprep.subr.mxu0 %v1656
        %v1658 = vand.u32 %v253, 4294901760
        %1659 = vmatpush1.msra.mxu0 %v1658
        %v1660 = vand.u32 %v258, 4294901760
        %1661 = vmatprep.subr.mxu0 %v1660
        %v1662 = vand.u32 %v257, 4294901760
        %1663 = vmatpush1.msra.mxu0 %v1662
        %v1664 = vand.u32 %v262, 4294901760
        %1665 = vmatprep.subr.mxu0 %v1664
        %v1666 = vand.u32 %v261, 4294901760
        %1667 = vmatpush1.msra.mxu0 %v1666
        %v1668 = vand.u32 %v266, 4294901760
        %1669 = vmatprep.subr.mxu0 %v1668
        %v1670 = vand.u32 %v265, 4294901760
        %1671 = vmatpush1.msra.mxu0 %v1670
        %v1672 = vand.u32 %v270, 4294901760
        %1673 = vmatprep.subr.mxu0 %v1672
        %v1674 = vand.u32 %v269, 4294901760
        %1675 = vmatpush1.msra.mxu0 %v1674
        %v1676 = vand.u32 %v274, 4294901760
        %1677 = vmatprep.subr.mxu0 %v1676
        %v1678 = vand.u32 %v273, 4294901760
        %1679 = vmatpush1.msra.mxu0 %v1678
        %v1680 = vand.u32 %v278, 4294901760
        %1681 = vmatprep.subr.mxu0 %v1680
        %v1682 = vand.u32 %v277, 4294901760
        %1683 = vmatpush1.msra.mxu0 %v1682
        %v1684 = vand.u32 %v282, 4294901760
        %1685 = vmatprep.subr.mxu0 %v1684
        %v1686 = vand.u32 %v281, 4294901760
        %1687 = vmatpush1.msra.mxu0 %v1686
        %v1688 = vand.u32 %v286, 4294901760
        %1689 = vmatprep.subr.mxu0 %v1688
        %v1690 = vand.u32 %v285, 4294901760
        %1691 = vmatpush1.msra.mxu0 %v1690
        %v1692 = vand.u32 %v290, 4294901760
        %1693 = vmatprep.subr.mxu0 %v1692
        %v1694 = vand.u32 %v289, 4294901760
        %1695 = vmatpush1.msra.mxu0 %v1694
        %v1696 = vand.u32 %v294, 4294901760
        %1697 = vmatprep.subr.mxu0 %v1696
        %v1698 = vand.u32 %v293, 4294901760
        %1699 = vmatpush1.msra.mxu0 %v1698
        %v1700 = vand.u32 %v298, 4294901760
        %1701 = vmatprep.subr.mxu0 %v1700
        %v1702 = vand.u32 %v297, 4294901760
        %1703 = vmatpush1.msra.mxu0 %v1702
        %v1704 = vand.u32 %v302, 4294901760
        %1705 = vmatprep.subr.mxu0 %v1704
        %v1706 = vand.u32 %v301, 4294901760
        %1707 = vmatpush1.msra.mxu0 %v1706
        %v1708 = vand.u32 %v306, 4294901760
        %1709 = vmatprep.subr.mxu0 %v1708
        %v1710 = vand.u32 %v305, 4294901760
        %1711 = vmatpush1.msra.mxu0 %v1710
        %v1712 = vand.u32 %v310, 4294901760
        %1713 = vmatprep.subr.mxu0 %v1712
        %v1714 = vand.u32 %v309, 4294901760
        %1715 = vmatpush1.msra.mxu0 %v1714
        %v1716 = vand.u32 %v314, 4294901760
        %1717 = vmatprep.subr.mxu0 %v1716
        %v1718 = vand.u32 %v313, 4294901760
        %1719 = vmatpush1.msra.mxu0 %v1718
        %v1720 = vand.u32 %v318, 4294901760
        %1721 = vmatprep.subr.mxu0 %v1720
        %v1722 = vand.u32 %v317, 4294901760
        %1723 = vmatpush1.msra.mxu0 %v1722
        %v1724 = vand.u32 %v322, 4294901760
        %1725 = vmatprep.subr.mxu0 %v1724
        %v1726 = vand.u32 %v321, 4294901760
        %1727 = vmatpush1.msra.mxu0 %v1726
        %v1728 = vand.u32 %v326, 4294901760
        %1729 = vmatprep.subr.mxu0 %v1728
        %v1730 = vand.u32 %v325, 4294901760
        %1731 = vmatpush1.msra.mxu0 %v1730
        %v1732 = vand.u32 %v330, 4294901760
        %1733 = vmatprep.subr.mxu0 %v1732
        %v1734 = vand.u32 %v329, 4294901760
        %1735 = vmatpush1.msra.mxu0 %v1734
        %v1736 = vand.u32 %v334, 4294901760
        %1737 = vmatprep.subr.mxu0 %v1736
        %v1738 = vand.u32 %v333, 4294901760
        %1739 = vmatpush1.msra.mxu0 %v1738
        %v1740 = vand.u32 %v338, 4294901760
        %1741 = vmatprep.subr.mxu0 %v1740
        %v1742 = vand.u32 %v337, 4294901760
        %1743 = vmatpush1.msra.mxu0 %v1742
        %v1744 = vand.u32 %v342, 4294901760
        %1745 = vmatprep.subr.mxu0 %v1744
        %v1746 = vand.u32 %v341, 4294901760
        %1747 = vmatpush1.msra.mxu0 %v1746
        %v1748 = vand.u32 %v214, 4294901760
        %1749 = vmatprep.mubr.f32.mxu0 %v1748
        %v1750 = vand.u32 %v213, 4294901760
        %1751 = vmatmul.mubr.f32.gmra.mrb[0].mxu0 %v1750
        %v1752 = vpop.f32.mrb[0].mxu0
        %v1753 = vadd.f32 %v1616, %v1752
        %v1754 = vpop.f32.mrb[0].mxu0
        %v1755 = vadd.f32 %v1618, %v1754
        %1756 = vdwg.mxu0
        %v1757 = vand.u32 %v346, 4294901760
        %1758 = vmatprep.subr.mxu0 %v1757
        %v1759 = vand.u32 %v345, 4294901760
        %1760 = vmatpush1.msra.mxu0 %v1759
        %v1761 = vand.u32 %v350, 4294901760
        %1762 = vmatprep.subr.mxu0 %v1761
        %v1763 = vand.u32 %v349, 4294901760
        %1764 = vmatpush1.msra.mxu0 %v1763
        %v1765 = vand.u32 %v354, 4294901760
        %1766 = vmatprep.subr.mxu0 %v1765
        %v1767 = vand.u32 %v353, 4294901760
        %1768 = vmatpush1.msra.mxu0 %v1767
        %v1769 = vand.u32 %v358, 4294901760
        %1770 = vmatprep.subr.mxu0 %v1769
        %v1771 = vand.u32 %v357, 4294901760
        %1772 = vmatpush1.msra.mxu0 %v1771
        %v1773 = vand.u32 %v362, 4294901760
        %1774 = vmatprep.subr.mxu0 %v1773
        %v1775 = vand.u32 %v361, 4294901760
        %1776 = vmatpush1.msra.mxu0 %v1775
        %v1777 = vand.u32 %v366, 4294901760
        %1778 = vmatprep.subr.mxu0 %v1777
        %v1779 = vand.u32 %v365, 4294901760
        %1780 = vmatpush1.msra.mxu0 %v1779
        %v1781 = vand.u32 %v370, 4294901760
        %1782 = vmatprep.subr.mxu0 %v1781
        %v1783 = vand.u32 %v369, 4294901760
        %1784 = vmatpush1.msra.mxu0 %v1783
        %v1785 = vand.u32 %v374, 4294901760
        %1786 = vmatprep.subr.mxu0 %v1785
        %v1787 = vand.u32 %v373, 4294901760
        %1788 = vmatpush1.msra.mxu0 %v1787
        %v1789 = vand.u32 %v378, 4294901760
        %1790 = vmatprep.subr.mxu0 %v1789
        %v1791 = vand.u32 %v377, 4294901760
        %1792 = vmatpush1.msra.mxu0 %v1791
        %v1793 = vand.u32 %v382, 4294901760
        %1794 = vmatprep.subr.mxu0 %v1793
        %v1795 = vand.u32 %v381, 4294901760
        %1796 = vmatpush1.msra.mxu0 %v1795
        %v1797 = vand.u32 %v386, 4294901760
        %1798 = vmatprep.subr.mxu0 %v1797
        %v1799 = vand.u32 %v385, 4294901760
        %1800 = vmatpush1.msra.mxu0 %v1799
        %v1801 = vand.u32 %v390, 4294901760
        %1802 = vmatprep.subr.mxu0 %v1801
        %v1803 = vand.u32 %v389, 4294901760
        %1804 = vmatpush1.msra.mxu0 %v1803
        %v1805 = vand.u32 %v394, 4294901760
        %1806 = vmatprep.subr.mxu0 %v1805
        %v1807 = vand.u32 %v393, 4294901760
        %1808 = vmatpush1.msra.mxu0 %v1807
        %v1809 = vand.u32 %v398, 4294901760
        %1810 = vmatprep.subr.mxu0 %v1809
        %v1811 = vand.u32 %v397, 4294901760
        %1812 = vmatpush1.msra.mxu0 %v1811
        %v1813 = vand.u32 %v402, 4294901760
        %1814 = vmatprep.subr.mxu0 %v1813
        %v1815 = vand.u32 %v401, 4294901760
        %1816 = vmatpush1.msra.mxu0 %v1815
        %v1817 = vand.u32 %v406, 4294901760
        %1818 = vmatprep.subr.mxu0 %v1817
        %v1819 = vand.u32 %v405, 4294901760
        %1820 = vmatpush1.msra.mxu0 %v1819
        %v1821 = vand.u32 %v410, 4294901760
        %1822 = vmatprep.subr.mxu0 %v1821
        %v1823 = vand.u32 %v409, 4294901760
        %1824 = vmatpush1.msra.mxu0 %v1823
        %v1825 = vand.u32 %v414, 4294901760
        %1826 = vmatprep.subr.mxu0 %v1825
        %v1827 = vand.u32 %v413, 4294901760
        %1828 = vmatpush1.msra.mxu0 %v1827
        %v1829 = vand.u32 %v418, 4294901760
        %1830 = vmatprep.subr.mxu0 %v1829
        %v1831 = vand.u32 %v417, 4294901760
        %1832 = vmatpush1.msra.mxu0 %v1831
        %v1833 = vand.u32 %v422, 4294901760
        %1834 = vmatprep.subr.mxu0 %v1833
        %v1835 = vand.u32 %v421, 4294901760
        %1836 = vmatpush1.msra.mxu0 %v1835
        %v1837 = vand.u32 %v426, 4294901760
        %1838 = vmatprep.subr.mxu0 %v1837
        %v1839 = vand.u32 %v425, 4294901760
        %1840 = vmatpush1.msra.mxu0 %v1839
        %v1841 = vand.u32 %v430, 4294901760
        %1842 = vmatprep.subr.mxu0 %v1841
        %v1843 = vand.u32 %v429, 4294901760
        %1844 = vmatpush1.msra.mxu0 %v1843
        %v1845 = vand.u32 %v434, 4294901760
        %1846 = vmatprep.subr.mxu0 %v1845
        %v1847 = vand.u32 %v433, 4294901760
        %1848 = vmatpush1.msra.mxu0 %v1847
        %v1849 = vand.u32 %v438, 4294901760
        %1850 = vmatprep.subr.mxu0 %v1849
        %v1851 = vand.u32 %v437, 4294901760
        %1852 = vmatpush1.msra.mxu0 %v1851
        %v1853 = vand.u32 %v442, 4294901760
        %1854 = vmatprep.subr.mxu0 %v1853
        %v1855 = vand.u32 %v441, 4294901760
        %1856 = vmatpush1.msra.mxu0 %v1855
        %v1857 = vand.u32 %v446, 4294901760
        %1858 = vmatprep.subr.mxu0 %v1857
        %v1859 = vand.u32 %v445, 4294901760
        %1860 = vmatpush1.msra.mxu0 %v1859
        %v1861 = vand.u32 %v450, 4294901760
        %1862 = vmatprep.subr.mxu0 %v1861
        %v1863 = vand.u32 %v449, 4294901760
        %1864 = vmatpush1.msra.mxu0 %v1863
        %v1865 = vand.u32 %v454, 4294901760
        %1866 = vmatprep.subr.mxu0 %v1865
        %v1867 = vand.u32 %v453, 4294901760
        %1868 = vmatpush1.msra.mxu0 %v1867
        %v1869 = vand.u32 %v458, 4294901760
        %1870 = vmatprep.subr.mxu0 %v1869
        %v1871 = vand.u32 %v457, 4294901760
        %1872 = vmatpush1.msra.mxu0 %v1871
        %v1873 = vand.u32 %v462, 4294901760
        %1874 = vmatprep.subr.mxu0 %v1873
        %v1875 = vand.u32 %v461, 4294901760
        %1876 = vmatpush1.msra.mxu0 %v1875
        %v1877 = vand.u32 %v466, 4294901760
        %1878 = vmatprep.subr.mxu0 %v1877
        %v1879 = vand.u32 %v465, 4294901760
        %1880 = vmatpush1.msra.mxu0 %v1879
        %v1881 = vand.u32 %v470, 4294901760
        %1882 = vmatprep.subr.mxu0 %v1881
        %v1883 = vand.u32 %v469, 4294901760
        %1884 = vmatpush1.msra.mxu0 %v1883
        %v1885 = vand.u32 %v216, 4294901760
        %v1886 = vsub.f32 %v216, %v1885
        %v1887 = vand.u32 %v1886, 4294901760
        %v1888 = vsub.f32 %v1886, %v1887
        %v1889 = vand.u32 %v1888, 4294901760
        %1890 = vmatprep.mubr.f32.mxu0 %v1889
        %v1891 = vand.u32 %v215, 4294901760
        %v1892 = vsub.f32 %v215, %v1891
        %v1893 = vand.u32 %v1892, 4294901760
        %v1894 = vsub.f32 %v1892, %v1893
        %v1895 = vand.u32 %v1894, 4294901760
        %1896 = vmatmul.mubr.f32.gmra.mrb[0].mxu0 %v1895
        %v1897 = vpop.f32.mrb[0].mxu0
        %v1898 = vadd.f32 %v1753, %v1897
        %v1899 = vpop.f32.mrb[0].mxu0
        %v1900 = vadd.f32 %v1755, %v1899
        %1901 = vdwg.mxu0
        %v1902 = vand.u32 %v346, 4294901760
        %v1903 = vsub.f32 %v346, %v1902
        %v1904 = vand.u32 %v1903, 4294901760
        %v1905 = vsub.f32 %v1903, %v1904
        %v1906 = vand.u32 %v1905, 4294901760
        %1907 = vmatprep.subr.mxu0 %v1906
        %v1908 = vand.u32 %v345, 4294901760
        %v1909 = vsub.f32 %v345, %v1908
        %v1910 = vand.u32 %v1909, 4294901760
        %v1911 = vsub.f32 %v1909, %v1910
        %v1912 = vand.u32 %v1911, 4294901760
        %1913 = vmatpush1.msra.mxu0 %v1912
        %v1914 = vand.u32 %v350, 4294901760
        %v1915 = vsub.f32 %v350, %v1914
        %v1916 = vand.u32 %v1915, 4294901760
        %v1917 = vsub.f32 %v1915, %v1916
        %v1918 = vand.u32 %v1917, 4294901760
        %1919 = vmatprep.subr.mxu0 %v1918
        %v1920 = vand.u32 %v349, 4294901760
        %v1921 = vsub.f32 %v349, %v1920
        %v1922 = vand.u32 %v1921, 4294901760
        %v1923 = vsub.f32 %v1921, %v1922
        %v1924 = vand.u32 %v1923, 4294901760
        %1925 = vmatpush1.msra.mxu0 %v1924
        %v1926 = vand.u32 %v354, 4294901760
        %v1927 = vsub.f32 %v354, %v1926
        %v1928 = vand.u32 %v1927, 4294901760
        %v1929 = vsub.f32 %v1927, %v1928
        %v1930 = vand.u32 %v1929, 4294901760
        %1931 = vmatprep.subr.mxu0 %v1930
        %v1932 = vand.u32 %v353, 4294901760
        %v1933 = vsub.f32 %v353, %v1932
        %v1934 = vand.u32 %v1933, 4294901760
        %v1935 = vsub.f32 %v1933, %v1934
        %v1936 = vand.u32 %v1935, 4294901760
        %1937 = vmatpush1.msra.mxu0 %v1936
        %v1938 = vand.u32 %v358, 4294901760
        %v1939 = vsub.f32 %v358, %v1938
        %v1940 = vand.u32 %v1939, 4294901760
        %v1941 = vsub.f32 %v1939, %v1940
        %v1942 = vand.u32 %v1941, 4294901760
        %1943 = vmatprep.subr.mxu0 %v1942
        %v1944 = vand.u32 %v357, 4294901760
        %v1945 = vsub.f32 %v357, %v1944
        %v1946 = vand.u32 %v1945, 4294901760
        %v1947 = vsub.f32 %v1945, %v1946
        %v1948 = vand.u32 %v1947, 4294901760
        %1949 = vmatpush1.msra.mxu0 %v1948
        %v1950 = vand.u32 %v362, 4294901760
        %v1951 = vsub.f32 %v362, %v1950
        %v1952 = vand.u32 %v1951, 4294901760
        %v1953 = vsub.f32 %v1951, %v1952
        %v1954 = vand.u32 %v1953, 4294901760
        %1955 = vmatprep.subr.mxu0 %v1954
        %v1956 = vand.u32 %v361, 4294901760
        %v1957 = vsub.f32 %v361, %v1956
        %v1958 = vand.u32 %v1957, 4294901760
        %v1959 = vsub.f32 %v1957, %v1958
        %v1960 = vand.u32 %v1959, 4294901760
        %1961 = vmatpush1.msra.mxu0 %v1960
        %v1962 = vand.u32 %v366, 4294901760
        %v1963 = vsub.f32 %v366, %v1962
        %v1964 = vand.u32 %v1963, 4294901760
        %v1965 = vsub.f32 %v1963, %v1964
        %v1966 = vand.u32 %v1965, 4294901760
        %1967 = vmatprep.subr.mxu0 %v1966
        %v1968 = vand.u32 %v365, 4294901760
        %v1969 = vsub.f32 %v365, %v1968
        %v1970 = vand.u32 %v1969, 4294901760
        %v1971 = vsub.f32 %v1969, %v1970
        %v1972 = vand.u32 %v1971, 4294901760
        %1973 = vmatpush1.msra.mxu0 %v1972
        %v1974 = vand.u32 %v370, 4294901760
        %v1975 = vsub.f32 %v370, %v1974
        %v1976 = vand.u32 %v1975, 4294901760
        %v1977 = vsub.f32 %v1975, %v1976
        %v1978 = vand.u32 %v1977, 4294901760
        %1979 = vmatprep.subr.mxu0 %v1978
        %v1980 = vand.u32 %v369, 4294901760
        %v1981 = vsub.f32 %v369, %v1980
        %v1982 = vand.u32 %v1981, 4294901760
        %v1983 = vsub.f32 %v1981, %v1982
        %v1984 = vand.u32 %v1983, 4294901760
        %1985 = vmatpush1.msra.mxu0 %v1984
        %v1986 = vand.u32 %v374, 4294901760
        %v1987 = vsub.f32 %v374, %v1986
        %v1988 = vand.u32 %v1987, 4294901760
        %v1989 = vsub.f32 %v1987, %v1988
        %v1990 = vand.u32 %v1989, 4294901760
        %1991 = vmatprep.subr.mxu0 %v1990
        %v1992 = vand.u32 %v373, 4294901760
        %v1993 = vsub.f32 %v373, %v1992
        %v1994 = vand.u32 %v1993, 4294901760
        %v1995 = vsub.f32 %v1993, %v1994
        %v1996 = vand.u32 %v1995, 4294901760
        %1997 = vmatpush1.msra.mxu0 %v1996
        %v1998 = vand.u32 %v378, 4294901760
        %v1999 = vsub.f32 %v378, %v1998
        %v2000 = vand.u32 %v1999, 4294901760
        %v2001 = vsub.f32 %v1999, %v2000
        %v2002 = vand.u32 %v2001, 4294901760
        %2003 = vmatprep.subr.mxu0 %v2002
        %v2004 = vand.u32 %v377, 4294901760
        %v2005 = vsub.f32 %v377, %v2004
        %v2006 = vand.u32 %v2005, 4294901760
        %v2007 = vsub.f32 %v2005, %v2006
        %v2008 = vand.u32 %v2007, 4294901760
        %2009 = vmatpush1.msra.mxu0 %v2008
        %v2010 = vand.u32 %v382, 4294901760
        %v2011 = vsub.f32 %v382, %v2010
        %v2012 = vand.u32 %v2011, 4294901760
        %v2013 = vsub.f32 %v2011, %v2012
        %v2014 = vand.u32 %v2013, 4294901760
        %2015 = vmatprep.subr.mxu0 %v2014
        %v2016 = vand.u32 %v381, 4294901760
        %v2017 = vsub.f32 %v381, %v2016
        %v2018 = vand.u32 %v2017, 4294901760
        %v2019 = vsub.f32 %v2017, %v2018
        %v2020 = vand.u32 %v2019, 4294901760
        %2021 = vmatpush1.msra.mxu0 %v2020
        %v2022 = vand.u32 %v386, 4294901760
        %v2023 = vsub.f32 %v386, %v2022
        %v2024 = vand.u32 %v2023, 4294901760
        %v2025 = vsub.f32 %v2023, %v2024
        %v2026 = vand.u32 %v2025, 4294901760
        %2027 = vmatprep.subr.mxu0 %v2026
        %v2028 = vand.u32 %v385, 4294901760
        %v2029 = vsub.f32 %v385, %v2028
        %v2030 = vand.u32 %v2029, 4294901760
        %v2031 = vsub.f32 %v2029, %v2030
        %v2032 = vand.u32 %v2031, 4294901760
        %2033 = vmatpush1.msra.mxu0 %v2032
        %v2034 = vand.u32 %v390, 4294901760
        %v2035 = vsub.f32 %v390, %v2034
        %v2036 = vand.u32 %v2035, 4294901760
        %v2037 = vsub.f32 %v2035, %v2036
        %v2038 = vand.u32 %v2037, 4294901760
        %2039 = vmatprep.subr.mxu0 %v2038
        %v2040 = vand.u32 %v389, 4294901760
        %v2041 = vsub.f32 %v389, %v2040
        %v2042 = vand.u32 %v2041, 4294901760
        %v2043 = vsub.f32 %v2041, %v2042
        %v2044 = vand.u32 %v2043, 4294901760
        %2045 = vmatpush1.msra.mxu0 %v2044
        %v2046 = vand.u32 %v394, 4294901760
        %v2047 = vsub.f32 %v394, %v2046
        %v2048 = vand.u32 %v2047, 4294901760
        %v2049 = vsub.f32 %v2047, %v2048
        %v2050 = vand.u32 %v2049, 4294901760
        %2051 = vmatprep.subr.mxu0 %v2050
        %v2052 = vand.u32 %v393, 4294901760
        %v2053 = vsub.f32 %v393, %v2052
        %v2054 = vand.u32 %v2053, 4294901760
        %v2055 = vsub.f32 %v2053, %v2054
        %v2056 = vand.u32 %v2055, 4294901760
        %2057 = vmatpush1.msra.mxu0 %v2056
        %v2058 = vand.u32 %v398, 4294901760
        %v2059 = vsub.f32 %v398, %v2058
        %v2060 = vand.u32 %v2059, 4294901760
        %v2061 = vsub.f32 %v2059, %v2060
        %v2062 = vand.u32 %v2061, 4294901760
        %2063 = vmatprep.subr.mxu0 %v2062
        %v2064 = vand.u32 %v397, 4294901760
        %v2065 = vsub.f32 %v397, %v2064
        %v2066 = vand.u32 %v2065, 4294901760
        %v2067 = vsub.f32 %v2065, %v2066
        %v2068 = vand.u32 %v2067, 4294901760
        %2069 = vmatpush1.msra.mxu0 %v2068
        %v2070 = vand.u32 %v402, 4294901760
        %v2071 = vsub.f32 %v402, %v2070
        %v2072 = vand.u32 %v2071, 4294901760
        %v2073 = vsub.f32 %v2071, %v2072
        %v2074 = vand.u32 %v2073, 4294901760
        %2075 = vmatprep.subr.mxu0 %v2074
        %v2076 = vand.u32 %v401, 4294901760
        %v2077 = vsub.f32 %v401, %v2076
        %v2078 = vand.u32 %v2077, 4294901760
        %v2079 = vsub.f32 %v2077, %v2078
        %v2080 = vand.u32 %v2079, 4294901760
        %2081 = vmatpush1.msra.mxu0 %v2080
        %v2082 = vand.u32 %v406, 4294901760
        %v2083 = vsub.f32 %v406, %v2082
        %v2084 = vand.u32 %v2083, 4294901760
        %v2085 = vsub.f32 %v2083, %v2084
        %v2086 = vand.u32 %v2085, 4294901760
        %2087 = vmatprep.subr.mxu0 %v2086
        %v2088 = vand.u32 %v405, 4294901760
        %v2089 = vsub.f32 %v405, %v2088
        %v2090 = vand.u32 %v2089, 4294901760
        %v2091 = vsub.f32 %v2089, %v2090
        %v2092 = vand.u32 %v2091, 4294901760
        %2093 = vmatpush1.msra.mxu0 %v2092
        %v2094 = vand.u32 %v410, 4294901760
        %v2095 = vsub.f32 %v410, %v2094
        %v2096 = vand.u32 %v2095, 4294901760
        %v2097 = vsub.f32 %v2095, %v2096
        %v2098 = vand.u32 %v2097, 4294901760
        %2099 = vmatprep.subr.mxu0 %v2098
        %v2100 = vand.u32 %v409, 4294901760
        %v2101 = vsub.f32 %v409, %v2100
        %v2102 = vand.u32 %v2101, 4294901760
        %v2103 = vsub.f32 %v2101, %v2102
        %v2104 = vand.u32 %v2103, 4294901760
        %2105 = vmatpush1.msra.mxu0 %v2104
        %v2106 = vand.u32 %v414, 4294901760
        %v2107 = vsub.f32 %v414, %v2106
        %v2108 = vand.u32 %v2107, 4294901760
        %v2109 = vsub.f32 %v2107, %v2108
        %v2110 = vand.u32 %v2109, 4294901760
        %2111 = vmatprep.subr.mxu0 %v2110
        %v2112 = vand.u32 %v413, 4294901760
        %v2113 = vsub.f32 %v413, %v2112
        %v2114 = vand.u32 %v2113, 4294901760
        %v2115 = vsub.f32 %v2113, %v2114
        %v2116 = vand.u32 %v2115, 4294901760
        %2117 = vmatpush1.msra.mxu0 %v2116
        %v2118 = vand.u32 %v418, 4294901760
        %v2119 = vsub.f32 %v418, %v2118
        %v2120 = vand.u32 %v2119, 4294901760
        %v2121 = vsub.f32 %v2119, %v2120
        %v2122 = vand.u32 %v2121, 4294901760
        %2123 = vmatprep.subr.mxu0 %v2122
        %v2124 = vand.u32 %v417, 4294901760
        %v2125 = vsub.f32 %v417, %v2124
        %v2126 = vand.u32 %v2125, 4294901760
        %v2127 = vsub.f32 %v2125, %v2126
        %v2128 = vand.u32 %v2127, 4294901760
        %2129 = vmatpush1.msra.mxu0 %v2128
        %v2130 = vand.u32 %v422, 4294901760
        %v2131 = vsub.f32 %v422, %v2130
        %v2132 = vand.u32 %v2131, 4294901760
        %v2133 = vsub.f32 %v2131, %v2132
        %v2134 = vand.u32 %v2133, 4294901760
        %2135 = vmatprep.subr.mxu0 %v2134
        %v2136 = vand.u32 %v421, 4294901760
        %v2137 = vsub.f32 %v421, %v2136
        %v2138 = vand.u32 %v2137, 4294901760
        %v2139 = vsub.f32 %v2137, %v2138
        %v2140 = vand.u32 %v2139, 4294901760
        %2141 = vmatpush1.msra.mxu0 %v2140
        %v2142 = vand.u32 %v426, 4294901760
        %v2143 = vsub.f32 %v426, %v2142
        %v2144 = vand.u32 %v2143, 4294901760
        %v2145 = vsub.f32 %v2143, %v2144
        %v2146 = vand.u32 %v2145, 4294901760
        %2147 = vmatprep.subr.mxu0 %v2146
        %v2148 = vand.u32 %v425, 4294901760
        %v2149 = vsub.f32 %v425, %v2148
        %v2150 = vand.u32 %v2149, 4294901760
        %v2151 = vsub.f32 %v2149, %v2150
        %v2152 = vand.u32 %v2151, 4294901760
        %2153 = vmatpush1.msra.mxu0 %v2152
        %v2154 = vand.u32 %v430, 4294901760
        %v2155 = vsub.f32 %v430, %v2154
        %v2156 = vand.u32 %v2155, 4294901760
        %v2157 = vsub.f32 %v2155, %v2156
        %v2158 = vand.u32 %v2157, 4294901760
        %2159 = vmatprep.subr.mxu0 %v2158
        %v2160 = vand.u32 %v429, 4294901760
        %v2161 = vsub.f32 %v429, %v2160
        %v2162 = vand.u32 %v2161, 4294901760
        %v2163 = vsub.f32 %v2161, %v2162
        %v2164 = vand.u32 %v2163, 4294901760
        %2165 = vmatpush1.msra.mxu0 %v2164
        %v2166 = vand.u32 %v434, 4294901760
        %v2167 = vsub.f32 %v434, %v2166
        %v2168 = vand.u32 %v2167, 4294901760
        %v2169 = vsub.f32 %v2167, %v2168
        %v2170 = vand.u32 %v2169, 4294901760
        %2171 = vmatprep.subr.mxu0 %v2170
        %v2172 = vand.u32 %v433, 4294901760
        %v2173 = vsub.f32 %v433, %v2172
        %v2174 = vand.u32 %v2173, 4294901760
        %v2175 = vsub.f32 %v2173, %v2174
        %v2176 = vand.u32 %v2175, 4294901760
        %2177 = vmatpush1.msra.mxu0 %v2176
        %v2178 = vand.u32 %v438, 4294901760
        %v2179 = vsub.f32 %v438, %v2178
        %v2180 = vand.u32 %v2179, 4294901760
        %v2181 = vsub.f32 %v2179, %v2180
        %v2182 = vand.u32 %v2181, 4294901760
        %2183 = vmatprep.subr.mxu0 %v2182
        %v2184 = vand.u32 %v437, 4294901760
        %v2185 = vsub.f32 %v437, %v2184
        %v2186 = vand.u32 %v2185, 4294901760
        %v2187 = vsub.f32 %v2185, %v2186
        %v2188 = vand.u32 %v2187, 4294901760
        %2189 = vmatpush1.msra.mxu0 %v2188
        %v2190 = vand.u32 %v442, 4294901760
        %v2191 = vsub.f32 %v442, %v2190
        %v2192 = vand.u32 %v2191, 4294901760
        %v2193 = vsub.f32 %v2191, %v2192
        %v2194 = vand.u32 %v2193, 4294901760
        %2195 = vmatprep.subr.mxu0 %v2194
        %v2196 = vand.u32 %v441, 4294901760
        %v2197 = vsub.f32 %v441, %v2196
        %v2198 = vand.u32 %v2197, 4294901760
        %v2199 = vsub.f32 %v2197, %v2198
        %v2200 = vand.u32 %v2199, 4294901760
        %2201 = vmatpush1.msra.mxu0 %v2200
        %v2202 = vand.u32 %v446, 4294901760
        %v2203 = vsub.f32 %v446, %v2202
        %v2204 = vand.u32 %v2203, 4294901760
        %v2205 = vsub.f32 %v2203, %v2204
        %v2206 = vand.u32 %v2205, 4294901760
        %2207 = vmatprep.subr.mxu0 %v2206
        %v2208 = vand.u32 %v445, 4294901760
        %v2209 = vsub.f32 %v445, %v2208
        %v2210 = vand.u32 %v2209, 4294901760
        %v2211 = vsub.f32 %v2209, %v2210
        %v2212 = vand.u32 %v2211, 4294901760
        %2213 = vmatpush1.msra.mxu0 %v2212
        %v2214 = vand.u32 %v450, 4294901760
        %v2215 = vsub.f32 %v450, %v2214
        %v2216 = vand.u32 %v2215, 4294901760
        %v2217 = vsub.f32 %v2215, %v2216
        %v2218 = vand.u32 %v2217, 4294901760
        %2219 = vmatprep.subr.mxu0 %v2218
        %v2220 = vand.u32 %v449, 4294901760
        %v2221 = vsub.f32 %v449, %v2220
        %v2222 = vand.u32 %v2221, 4294901760
        %v2223 = vsub.f32 %v2221, %v2222
        %v2224 = vand.u32 %v2223, 4294901760
        %2225 = vmatpush1.msra.mxu0 %v2224
        %v2226 = vand.u32 %v454, 4294901760
        %v2227 = vsub.f32 %v454, %v2226
        %v2228 = vand.u32 %v2227, 4294901760
        %v2229 = vsub.f32 %v2227, %v2228
        %v2230 = vand.u32 %v2229, 4294901760
        %2231 = vmatprep.subr.mxu0 %v2230
        %v2232 = vand.u32 %v453, 4294901760
        %v2233 = vsub.f32 %v453, %v2232
        %v2234 = vand.u32 %v2233, 4294901760
        %v2235 = vsub.f32 %v2233, %v2234
        %v2236 = vand.u32 %v2235, 4294901760
        %2237 = vmatpush1.msra.mxu0 %v2236
        %v2238 = vand.u32 %v458, 4294901760
        %v2239 = vsub.f32 %v458, %v2238
        %v2240 = vand.u32 %v2239, 4294901760
        %v2241 = vsub.f32 %v2239, %v2240
        %v2242 = vand.u32 %v2241, 4294901760
        %2243 = vmatprep.subr.mxu0 %v2242
        %v2244 = vand.u32 %v457, 4294901760
        %v2245 = vsub.f32 %v457, %v2244
        %v2246 = vand.u32 %v2245, 4294901760
        %v2247 = vsub.f32 %v2245, %v2246
        %v2248 = vand.u32 %v2247, 4294901760
        %2249 = vmatpush1.msra.mxu0 %v2248
        %v2250 = vand.u32 %v462, 4294901760
        %v2251 = vsub.f32 %v462, %v2250
        %v2252 = vand.u32 %v2251, 4294901760
        %v2253 = vsub.f32 %v2251, %v2252
        %v2254 = vand.u32 %v2253, 4294901760
        %2255 = vmatprep.subr.mxu0 %v2254
        %v2256 = vand.u32 %v461, 4294901760
        %v2257 = vsub.f32 %v461, %v2256
        %v2258 = vand.u32 %v2257, 4294901760
        %v2259 = vsub.f32 %v2257, %v2258
        %v2260 = vand.u32 %v2259, 4294901760
        %2261 = vmatpush1.msra.mxu0 %v2260
        %v2262 = vand.u32 %v466, 4294901760
        %v2263 = vsub.f32 %v466, %v2262
        %v2264 = vand.u32 %v2263, 4294901760
        %v2265 = vsub.f32 %v2263, %v2264
        %v2266 = vand.u32 %v2265, 4294901760
        %2267 = vmatprep.subr.mxu0 %v2266
        %v2268 = vand.u32 %v465, 4294901760
        %v2269 = vsub.f32 %v465, %v2268
        %v2270 = vand.u32 %v2269, 4294901760
        %v2271 = vsub.f32 %v2269, %v2270
        %v2272 = vand.u32 %v2271, 4294901760
        %2273 = vmatpush1.msra.mxu0 %v2272
        %v2274 = vand.u32 %v470, 4294901760
        %v2275 = vsub.f32 %v470, %v2274
        %v2276 = vand.u32 %v2275, 4294901760
        %v2277 = vsub.f32 %v2275, %v2276
        %v2278 = vand.u32 %v2277, 4294901760
        %2279 = vmatprep.subr.mxu0 %v2278
        %v2280 = vand.u32 %v469, 4294901760
        %v2281 = vsub.f32 %v469, %v2280
        %v2282 = vand.u32 %v2281, 4294901760
        %v2283 = vsub.f32 %v2281, %v2282
        %v2284 = vand.u32 %v2283, 4294901760
        %2285 = vmatpush1.msra.mxu0 %v2284
        %v2286 = vand.u32 %v216, 4294901760
        %2287 = vmatprep.mubr.f32.mxu0 %v2286
        %v2288 = vand.u32 %v215, 4294901760
        %2289 = vmatmul.mubr.f32.gmra.mrb[0].mxu0 %v2288
        %v2290 = vpop.f32.mrb[0].mxu0
        %v2291 = vadd.f32 %v1898, %v2290
        %v2292 = vpop.f32.mrb[0].mxu0
        %v2293 = vadd.f32 %v1900, %v2292
        %2294 = vdwg.mxu0
        %v2295 = vand.u32 %v346, 4294901760
        %v2296 = vsub.f32 %v346, %v2295
        %2297 = vmatprep.subr.mxu0 %v2296
        %v2298 = vand.u32 %v345, 4294901760
        %v2299 = vsub.f32 %v345, %v2298
        %2300 = vmatpush1.msra.mxu0 %v2299
        %v2301 = vand.u32 %v350, 4294901760
        %v2302 = vsub.f32 %v350, %v2301
        %2303 = vmatprep.subr.mxu0 %v2302
        %v2304 = vand.u32 %v349, 4294901760
        %v2305 = vsub.f32 %v349, %v2304
        %2306 = vmatpush1.msra.mxu0 %v2305
        %v2307 = vand.u32 %v354, 4294901760
        %v2308 = vsub.f32 %v354, %v2307
        %2309 = vmatprep.subr.mxu0 %v2308
        %v2310 = vand.u32 %v353, 4294901760
        %v2311 = vsub.f32 %v353, %v2310
        %2312 = vmatpush1.msra.mxu0 %v2311
        %v2313 = vand.u32 %v358, 4294901760
        %v2314 = vsub.f32 %v358, %v2313
        %2315 = vmatprep.subr.mxu0 %v2314
        %v2316 = vand.u32 %v357, 4294901760
        %v2317 = vsub.f32 %v357, %v2316
        %2318 = vmatpush1.msra.mxu0 %v2317
        %v2319 = vand.u32 %v362, 4294901760
        %v2320 = vsub.f32 %v362, %v2319
        %2321 = vmatprep.subr.mxu0 %v2320
        %v2322 = vand.u32 %v361, 4294901760
        %v2323 = vsub.f32 %v361, %v2322
        %2324 = vmatpush1.msra.mxu0 %v2323
        %v2325 = vand.u32 %v366, 4294901760
        %v2326 = vsub.f32 %v366, %v2325
        %2327 = vmatprep.subr.mxu0 %v2326
        %v2328 = vand.u32 %v365, 4294901760
        %v2329 = vsub.f32 %v365, %v2328
        %2330 = vmatpush1.msra.mxu0 %v2329
        %v2331 = vand.u32 %v370, 4294901760
        %v2332 = vsub.f32 %v370, %v2331
        %2333 = vmatprep.subr.mxu0 %v2332
        %v2334 = vand.u32 %v369, 4294901760
        %v2335 = vsub.f32 %v369, %v2334
        %2336 = vmatpush1.msra.mxu0 %v2335
        %v2337 = vand.u32 %v374, 4294901760
        %v2338 = vsub.f32 %v374, %v2337
        %2339 = vmatprep.subr.mxu0 %v2338
        %v2340 = vand.u32 %v373, 4294901760
        %v2341 = vsub.f32 %v373, %v2340
        %2342 = vmatpush1.msra.mxu0 %v2341
        %v2343 = vand.u32 %v378, 4294901760
        %v2344 = vsub.f32 %v378, %v2343
        %2345 = vmatprep.subr.mxu0 %v2344
        %v2346 = vand.u32 %v377, 4294901760
        %v2347 = vsub.f32 %v377, %v2346
        %2348 = vmatpush1.msra.mxu0 %v2347
        %v2349 = vand.u32 %v382, 4294901760
        %v2350 = vsub.f32 %v382, %v2349
        %2351 = vmatprep.subr.mxu0 %v2350
        %v2352 = vand.u32 %v381, 4294901760
        %v2353 = vsub.f32 %v381, %v2352
        %2354 = vmatpush1.msra.mxu0 %v2353
        %v2355 = vand.u32 %v386, 4294901760
        %v2356 = vsub.f32 %v386, %v2355
        %2357 = vmatprep.subr.mxu0 %v2356
        %v2358 = vand.u32 %v385, 4294901760
        %v2359 = vsub.f32 %v385, %v2358
        %2360 = vmatpush1.msra.mxu0 %v2359
        %v2361 = vand.u32 %v390, 4294901760
        %v2362 = vsub.f32 %v390, %v2361
        %2363 = vmatprep.subr.mxu0 %v2362
        %v2364 = vand.u32 %v389, 4294901760
        %v2365 = vsub.f32 %v389, %v2364
        %2366 = vmatpush1.msra.mxu0 %v2365
        %v2367 = vand.u32 %v394, 4294901760
        %v2368 = vsub.f32 %v394, %v2367
        %2369 = vmatprep.subr.mxu0 %v2368
        %v2370 = vand.u32 %v393, 4294901760
        %v2371 = vsub.f32 %v393, %v2370
        %2372 = vmatpush1.msra.mxu0 %v2371
        %v2373 = vand.u32 %v398, 4294901760
        %v2374 = vsub.f32 %v398, %v2373
        %2375 = vmatprep.subr.mxu0 %v2374
        %v2376 = vand.u32 %v397, 4294901760
        %v2377 = vsub.f32 %v397, %v2376
        %2378 = vmatpush1.msra.mxu0 %v2377
        %v2379 = vand.u32 %v402, 4294901760
        %v2380 = vsub.f32 %v402, %v2379
        %2381 = vmatprep.subr.mxu0 %v2380
        %v2382 = vand.u32 %v401, 4294901760
        %v2383 = vsub.f32 %v401, %v2382
        %2384 = vmatpush1.msra.mxu0 %v2383
        %v2385 = vand.u32 %v406, 4294901760
        %v2386 = vsub.f32 %v406, %v2385
        %2387 = vmatprep.subr.mxu0 %v2386
        %v2388 = vand.u32 %v405, 4294901760
        %v2389 = vsub.f32 %v405, %v2388
        %2390 = vmatpush1.msra.mxu0 %v2389
        %v2391 = vand.u32 %v410, 4294901760
        %v2392 = vsub.f32 %v410, %v2391
        %2393 = vmatprep.subr.mxu0 %v2392
        %v2394 = vand.u32 %v409, 4294901760
        %v2395 = vsub.f32 %v409, %v2394
        %2396 = vmatpush1.msra.mxu0 %v2395
        %v2397 = vand.u32 %v414, 4294901760
        %v2398 = vsub.f32 %v414, %v2397
        %2399 = vmatprep.subr.mxu0 %v2398
        %v2400 = vand.u32 %v413, 4294901760
        %v2401 = vsub.f32 %v413, %v2400
        %2402 = vmatpush1.msra.mxu0 %v2401
        %v2403 = vand.u32 %v418, 4294901760
        %v2404 = vsub.f32 %v418, %v2403
        %2405 = vmatprep.subr.mxu0 %v2404
        %v2406 = vand.u32 %v417, 4294901760
        %v2407 = vsub.f32 %v417, %v2406
        %2408 = vmatpush1.msra.mxu0 %v2407
        %v2409 = vand.u32 %v422, 4294901760
        %v2410 = vsub.f32 %v422, %v2409
        %2411 = vmatprep.subr.mxu0 %v2410
        %v2412 = vand.u32 %v421, 4294901760
        %v2413 = vsub.f32 %v421, %v2412
        %2414 = vmatpush1.msra.mxu0 %v2413
        %v2415 = vand.u32 %v426, 4294901760
        %v2416 = vsub.f32 %v426, %v2415
        %2417 = vmatprep.subr.mxu0 %v2416
        %v2418 = vand.u32 %v425, 4294901760
        %v2419 = vsub.f32 %v425, %v2418
        %2420 = vmatpush1.msra.mxu0 %v2419
        %v2421 = vand.u32 %v430, 4294901760
        %v2422 = vsub.f32 %v430, %v2421
        %2423 = vmatprep.subr.mxu0 %v2422
        %v2424 = vand.u32 %v429, 4294901760
        %v2425 = vsub.f32 %v429, %v2424
        %2426 = vmatpush1.msra.mxu0 %v2425
        %v2427 = vand.u32 %v434, 4294901760
        %v2428 = vsub.f32 %v434, %v2427
        %2429 = vmatprep.subr.mxu0 %v2428
        %v2430 = vand.u32 %v433, 4294901760
        %v2431 = vsub.f32 %v433, %v2430
        %2432 = vmatpush1.msra.mxu0 %v2431
        %v2433 = vand.u32 %v438, 4294901760
        %v2434 = vsub.f32 %v438, %v2433
        %2435 = vmatprep.subr.mxu0 %v2434
        %v2436 = vand.u32 %v437, 4294901760
        %v2437 = vsub.f32 %v437, %v2436
        %2438 = vmatpush1.msra.mxu0 %v2437
        %v2439 = vand.u32 %v442, 4294901760
        %v2440 = vsub.f32 %v442, %v2439
        %2441 = vmatprep.subr.mxu0 %v2440
        %v2442 = vand.u32 %v441, 4294901760
        %v2443 = vsub.f32 %v441, %v2442
        %2444 = vmatpush1.msra.mxu0 %v2443
        %v2445 = vand.u32 %v446, 4294901760
        %v2446 = vsub.f32 %v446, %v2445
        %2447 = vmatprep.subr.mxu0 %v2446
        %v2448 = vand.u32 %v445, 4294901760
        %v2449 = vsub.f32 %v445, %v2448
        %2450 = vmatpush1.msra.mxu0 %v2449
        %v2451 = vand.u32 %v450, 4294901760
        %v2452 = vsub.f32 %v450, %v2451
        %2453 = vmatprep.subr.mxu0 %v2452
        %v2454 = vand.u32 %v449, 4294901760
        %v2455 = vsub.f32 %v449, %v2454
        %2456 = vmatpush1.msra.mxu0 %v2455
        %v2457 = vand.u32 %v454, 4294901760
        %v2458 = vsub.f32 %v454, %v2457
        %2459 = vmatprep.subr.mxu0 %v2458
        %v2460 = vand.u32 %v453, 4294901760
        %v2461 = vsub.f32 %v453, %v2460
        %2462 = vmatpush1.msra.mxu0 %v2461
        %v2463 = vand.u32 %v458, 4294901760
        %v2464 = vsub.f32 %v458, %v2463
        %2465 = vmatprep.subr.mxu0 %v2464
        %v2466 = vand.u32 %v457, 4294901760
        %v2467 = vsub.f32 %v457, %v2466
        %2468 = vmatpush1.msra.mxu0 %v2467
        %v2469 = vand.u32 %v462, 4294901760
        %v2470 = vsub.f32 %v462, %v2469
        %2471 = vmatprep.subr.mxu0 %v2470
        %v2472 = vand.u32 %v461, 4294901760
        %v2473 = vsub.f32 %v461, %v2472
        %2474 = vmatpush1.msra.mxu0 %v2473
        %v2475 = vand.u32 %v466, 4294901760
        %v2476 = vsub.f32 %v466, %v2475
        %2477 = vmatprep.subr.mxu0 %v2476
        %v2478 = vand.u32 %v465, 4294901760
        %v2479 = vsub.f32 %v465, %v2478
        %2480 = vmatpush1.msra.mxu0 %v2479
        %v2481 = vand.u32 %v470, 4294901760
        %v2482 = vsub.f32 %v470, %v2481
        %2483 = vmatprep.subr.mxu0 %v2482
        %v2484 = vand.u32 %v469, 4294901760
        %v2485 = vsub.f32 %v469, %v2484
        %2486 = vmatpush1.msra.mxu0 %v2485
        %v2487 = vand.u32 %v216, 4294901760
        %v2488 = vsub.f32 %v216, %v2487
        %2489 = vmatprep.mubr.f32.mxu0 %v2488
        %v2490 = vand.u32 %v215, 4294901760
        %v2491 = vsub.f32 %v215, %v2490
        %2492 = vmatmul.mubr.f32.gmra.mrb[0].mxu0 %v2491
        %v2493 = vpop.f32.mrb[0].mxu0
        %v2494 = vadd.f32 %v2291, %v2493
        %v2495 = vpop.f32.mrb[0].mxu0
        %v2496 = vadd.f32 %v2293, %v2495
        %2497 = vdwg.mxu0
        %v2498 = vand.u32 %v346, 4294901760
        %2499 = vmatprep.subr.mxu0 %v2498
        %v2500 = vand.u32 %v345, 4294901760
        %2501 = vmatpush1.msra.mxu0 %v2500
        %v2502 = vand.u32 %v350, 4294901760
        %2503 = vmatprep.subr.mxu0 %v2502
        %v2504 = vand.u32 %v349, 4294901760
        %2505 = vmatpush1.msra.mxu0 %v2504
        %v2506 = vand.u32 %v354, 4294901760
        %2507 = vmatprep.subr.mxu0 %v2506
        %v2508 = vand.u32 %v353, 4294901760
        %2509 = vmatpush1.msra.mxu0 %v2508
        %v2510 = vand.u32 %v358, 4294901760
        %2511 = vmatprep.subr.mxu0 %v2510
        %v2512 = vand.u32 %v357, 4294901760
        %2513 = vmatpush1.msra.mxu0 %v2512
        %v2514 = vand.u32 %v362, 4294901760
        %2515 = vmatprep.subr.mxu0 %v2514
        %v2516 = vand.u32 %v361, 4294901760
        %2517 = vmatpush1.msra.mxu0 %v2516
        %v2518 = vand.u32 %v366, 4294901760
        %2519 = vmatprep.subr.mxu0 %v2518
        %v2520 = vand.u32 %v365, 4294901760
        %2521 = vmatpush1.msra.mxu0 %v2520
        %v2522 = vand.u32 %v370, 4294901760
        %2523 = vmatprep.subr.mxu0 %v2522
        %v2524 = vand.u32 %v369, 4294901760
        %2525 = vmatpush1.msra.mxu0 %v2524
        %v2526 = vand.u32 %v374, 4294901760
        %2527 = vmatprep.subr.mxu0 %v2526
        %v2528 = vand.u32 %v373, 4294901760
        %2529 = vmatpush1.msra.mxu0 %v2528
        %v2530 = vand.u32 %v378, 4294901760
        %2531 = vmatprep.subr.mxu0 %v2530
        %v2532 = vand.u32 %v377, 4294901760
        %2533 = vmatpush1.msra.mxu0 %v2532
        %v2534 = vand.u32 %v382, 4294901760
        %2535 = vmatprep.subr.mxu0 %v2534
        %v2536 = vand.u32 %v381, 4294901760
        %2537 = vmatpush1.msra.mxu0 %v2536
        %v2538 = vand.u32 %v386, 4294901760
        %2539 = vmatprep.subr.mxu0 %v2538
        %v2540 = vand.u32 %v385, 4294901760
        %2541 = vmatpush1.msra.mxu0 %v2540
        %v2542 = vand.u32 %v390, 4294901760
        %2543 = vmatprep.subr.mxu0 %v2542
        %v2544 = vand.u32 %v389, 4294901760
        %2545 = vmatpush1.msra.mxu0 %v2544
        %v2546 = vand.u32 %v394, 4294901760
        %2547 = vmatprep.subr.mxu0 %v2546
        %v2548 = vand.u32 %v393, 4294901760
        %2549 = vmatpush1.msra.mxu0 %v2548
        %v2550 = vand.u32 %v398, 4294901760
        %2551 = vmatprep.subr.mxu0 %v2550
        %v2552 = vand.u32 %v397, 4294901760
        %2553 = vmatpush1.msra.mxu0 %v2552
        %v2554 = vand.u32 %v402, 4294901760
        %2555 = vmatprep.subr.mxu0 %v2554
        %v2556 = vand.u32 %v401, 4294901760
        %2557 = vmatpush1.msra.mxu0 %v2556
        %v2558 = vand.u32 %v406, 4294901760
        %2559 = vmatprep.subr.mxu0 %v2558
        %v2560 = vand.u32 %v405, 4294901760
        %2561 = vmatpush1.msra.mxu0 %v2560
        %v2562 = vand.u32 %v410, 4294901760
        %2563 = vmatprep.subr.mxu0 %v2562
        %v2564 = vand.u32 %v409, 4294901760
        %2565 = vmatpush1.msra.mxu0 %v2564
        %v2566 = vand.u32 %v414, 4294901760
        %2567 = vmatprep.subr.mxu0 %v2566
        %v2568 = vand.u32 %v413, 4294901760
        %2569 = vmatpush1.msra.mxu0 %v2568
        %v2570 = vand.u32 %v418, 4294901760
        %2571 = vmatprep.subr.mxu0 %v2570
        %v2572 = vand.u32 %v417, 4294901760
        %2573 = vmatpush1.msra.mxu0 %v2572
        %v2574 = vand.u32 %v422, 4294901760
        %2575 = vmatprep.subr.mxu0 %v2574
        %v2576 = vand.u32 %v421, 4294901760
        %2577 = vmatpush1.msra.mxu0 %v2576
        %v2578 = vand.u32 %v426, 4294901760
        %2579 = vmatprep.subr.mxu0 %v2578
        %v2580 = vand.u32 %v425, 4294901760
        %2581 = vmatpush1.msra.mxu0 %v2580
        %v2582 = vand.u32 %v430, 4294901760
        %2583 = vmatprep.subr.mxu0 %v2582
        %v2584 = vand.u32 %v429, 4294901760
        %2585 = vmatpush1.msra.mxu0 %v2584
        %v2586 = vand.u32 %v434, 4294901760
        %2587 = vmatprep.subr.mxu0 %v2586
        %v2588 = vand.u32 %v433, 4294901760
        %2589 = vmatpush1.msra.mxu0 %v2588
        %v2590 = vand.u32 %v438, 4294901760
        %2591 = vmatprep.subr.mxu0 %v2590
        %v2592 = vand.u32 %v437, 4294901760
        %2593 = vmatpush1.msra.mxu0 %v2592
        %v2594 = vand.u32 %v442, 4294901760
        %2595 = vmatprep.subr.mxu0 %v2594
        %v2596 = vand.u32 %v441, 4294901760
        %2597 = vmatpush1.msra.mxu0 %v2596
        %v2598 = vand.u32 %v446, 4294901760
        %2599 = vmatprep.subr.mxu0 %v2598
        %v2600 = vand.u32 %v445, 4294901760
        %2601 = vmatpush1.msra.mxu0 %v2600
        %v2602 = vand.u32 %v450, 4294901760
        %2603 = vmatprep.subr.mxu0 %v2602
        %v2604 = vand.u32 %v449, 4294901760
        %2605 = vmatpush1.msra.mxu0 %v2604
        %v2606 = vand.u32 %v454, 4294901760
        %2607 = vmatprep.subr.mxu0 %v2606
        %v2608 = vand.u32 %v453, 4294901760
        %2609 = vmatpush1.msra.mxu0 %v2608
        %v2610 = vand.u32 %v458, 4294901760
        %2611 = vmatprep.subr.mxu0 %v2610
        %v2612 = vand.u32 %v457, 4294901760
        %2613 = vmatpush1.msra.mxu0 %v2612
        %v2614 = vand.u32 %v462, 4294901760
        %2615 = vmatprep.subr.mxu0 %v2614
        %v2616 = vand.u32 %v461, 4294901760
        %2617 = vmatpush1.msra.mxu0 %v2616
        %v2618 = vand.u32 %v466, 4294901760
        %2619 = vmatprep.subr.mxu0 %v2618
        %v2620 = vand.u32 %v465, 4294901760
        %2621 = vmatpush1.msra.mxu0 %v2620
        %v2622 = vand.u32 %v470, 4294901760
        %2623 = vmatprep.subr.mxu0 %v2622
        %v2624 = vand.u32 %v469, 4294901760
        %2625 = vmatpush1.msra.mxu0 %v2624
        %v2626 = vand.u32 %v216, 4294901760
        %v2627 = vsub.f32 %v216, %v2626
        %v2628 = vand.u32 %v2627, 4294901760
        %2629 = vmatprep.mubr.f32.mxu0 %v2628
        %v2630 = vand.u32 %v215, 4294901760
        %v2631 = vsub.f32 %v215, %v2630
        %v2632 = vand.u32 %v2631, 4294901760
        %2633 = vmatmul.mubr.f32.gmra.mrb[0].mxu0 %v2632
        %v2634 = vpop.f32.mrb[0].mxu0
        %v2635 = vadd.f32 %v2494, %v2634
        %v2636 = vpop.f32.mrb[0].mxu0
        %v2637 = vadd.f32 %v2496, %v2636
        %2638 = vdwg.mxu0
        %v2639 = vand.u32 %v346, 4294901760
        %v2640 = vsub.f32 %v346, %v2639
        %v2641 = vand.u32 %v2640, 4294901760
        %2642 = vmatprep.subr.mxu0 %v2641
        %v2643 = vand.u32 %v345, 4294901760
        %v2644 = vsub.f32 %v345, %v2643
        %v2645 = vand.u32 %v2644, 4294901760
        %2646 = vmatpush1.msra.mxu0 %v2645
        %v2647 = vand.u32 %v350, 4294901760
        %v2648 = vsub.f32 %v350, %v2647
        %v2649 = vand.u32 %v2648, 4294901760
        %2650 = vmatprep.subr.mxu0 %v2649
        %v2651 = vand.u32 %v349, 4294901760
        %v2652 = vsub.f32 %v349, %v2651
        %v2653 = vand.u32 %v2652, 4294901760
        %2654 = vmatpush1.msra.mxu0 %v2653
        %v2655 = vand.u32 %v354, 4294901760
        %v2656 = vsub.f32 %v354, %v2655
        %v2657 = vand.u32 %v2656, 4294901760
        %2658 = vmatprep.subr.mxu0 %v2657
        %v2659 = vand.u32 %v353, 4294901760
        %v2660 = vsub.f32 %v353, %v2659
        %v2661 = vand.u32 %v2660, 4294901760
        %2662 = vmatpush1.msra.mxu0 %v2661
        %v2663 = vand.u32 %v358, 4294901760
        %v2664 = vsub.f32 %v358, %v2663
        %v2665 = vand.u32 %v2664, 4294901760
        %2666 = vmatprep.subr.mxu0 %v2665
        %v2667 = vand.u32 %v357, 4294901760
        %v2668 = vsub.f32 %v357, %v2667
        %v2669 = vand.u32 %v2668, 4294901760
        %2670 = vmatpush1.msra.mxu0 %v2669
        %v2671 = vand.u32 %v362, 4294901760
        %v2672 = vsub.f32 %v362, %v2671
        %v2673 = vand.u32 %v2672, 4294901760
        %2674 = vmatprep.subr.mxu0 %v2673
        %v2675 = vand.u32 %v361, 4294901760
        %v2676 = vsub.f32 %v361, %v2675
        %v2677 = vand.u32 %v2676, 4294901760
        %2678 = vmatpush1.msra.mxu0 %v2677
        %v2679 = vand.u32 %v366, 4294901760
        %v2680 = vsub.f32 %v366, %v2679
        %v2681 = vand.u32 %v2680, 4294901760
        %2682 = vmatprep.subr.mxu0 %v2681
        %v2683 = vand.u32 %v365, 4294901760
        %v2684 = vsub.f32 %v365, %v2683
        %v2685 = vand.u32 %v2684, 4294901760
        %2686 = vmatpush1.msra.mxu0 %v2685
        %v2687 = vand.u32 %v370, 4294901760
        %v2688 = vsub.f32 %v370, %v2687
        %v2689 = vand.u32 %v2688, 4294901760
        %2690 = vmatprep.subr.mxu0 %v2689
        %v2691 = vand.u32 %v369, 4294901760
        %v2692 = vsub.f32 %v369, %v2691
        %v2693 = vand.u32 %v2692, 4294901760
        %2694 = vmatpush1.msra.mxu0 %v2693
        %v2695 = vand.u32 %v374, 4294901760
        %v2696 = vsub.f32 %v374, %v2695
        %v2697 = vand.u32 %v2696, 4294901760
        %2698 = vmatprep.subr.mxu0 %v2697
        %v2699 = vand.u32 %v373, 4294901760
        %v2700 = vsub.f32 %v373, %v2699
        %v2701 = vand.u32 %v2700, 4294901760
        %2702 = vmatpush1.msra.mxu0 %v2701
        %v2703 = vand.u32 %v378, 4294901760
        %v2704 = vsub.f32 %v378, %v2703
        %v2705 = vand.u32 %v2704, 4294901760
        %2706 = vmatprep.subr.mxu0 %v2705
        %v2707 = vand.u32 %v377, 4294901760
        %v2708 = vsub.f32 %v377, %v2707
        %v2709 = vand.u32 %v2708, 4294901760
        %2710 = vmatpush1.msra.mxu0 %v2709
        %v2711 = vand.u32 %v382, 4294901760
        %v2712 = vsub.f32 %v382, %v2711
        %v2713 = vand.u32 %v2712, 4294901760
        %2714 = vmatprep.subr.mxu0 %v2713
        %v2715 = vand.u32 %v381, 4294901760
        %v2716 = vsub.f32 %v381, %v2715
        %v2717 = vand.u32 %v2716, 4294901760
        %2718 = vmatpush1.msra.mxu0 %v2717
        %v2719 = vand.u32 %v386, 4294901760
        %v2720 = vsub.f32 %v386, %v2719
        %v2721 = vand.u32 %v2720, 4294901760
        %2722 = vmatprep.subr.mxu0 %v2721
        %v2723 = vand.u32 %v385, 4294901760
        %v2724 = vsub.f32 %v385, %v2723
        %v2725 = vand.u32 %v2724, 4294901760
        %2726 = vmatpush1.msra.mxu0 %v2725
        %v2727 = vand.u32 %v390, 4294901760
        %v2728 = vsub.f32 %v390, %v2727
        %v2729 = vand.u32 %v2728, 4294901760
        %2730 = vmatprep.subr.mxu0 %v2729
        %v2731 = vand.u32 %v389, 4294901760
        %v2732 = vsub.f32 %v389, %v2731
        %v2733 = vand.u32 %v2732, 4294901760
        %2734 = vmatpush1.msra.mxu0 %v2733
        %v2735 = vand.u32 %v394, 4294901760
        %v2736 = vsub.f32 %v394, %v2735
        %v2737 = vand.u32 %v2736, 4294901760
        %2738 = vmatprep.subr.mxu0 %v2737
        %v2739 = vand.u32 %v393, 4294901760
        %v2740 = vsub.f32 %v393, %v2739
        %v2741 = vand.u32 %v2740, 4294901760
        %2742 = vmatpush1.msra.mxu0 %v2741
        %v2743 = vand.u32 %v398, 4294901760
        %v2744 = vsub.f32 %v398, %v2743
        %v2745 = vand.u32 %v2744, 4294901760
        %2746 = vmatprep.subr.mxu0 %v2745
        %v2747 = vand.u32 %v397, 4294901760
        %v2748 = vsub.f32 %v397, %v2747
        %v2749 = vand.u32 %v2748, 4294901760
        %2750 = vmatpush1.msra.mxu0 %v2749
        %v2751 = vand.u32 %v402, 4294901760
        %v2752 = vsub.f32 %v402, %v2751
        %v2753 = vand.u32 %v2752, 4294901760
        %2754 = vmatprep.subr.mxu0 %v2753
        %v2755 = vand.u32 %v401, 4294901760
        %v2756 = vsub.f32 %v401, %v2755
        %v2757 = vand.u32 %v2756, 4294901760
        %2758 = vmatpush1.msra.mxu0 %v2757
        %v2759 = vand.u32 %v406, 4294901760
        %v2760 = vsub.f32 %v406, %v2759
        %v2761 = vand.u32 %v2760, 4294901760
        %2762 = vmatprep.subr.mxu0 %v2761
        %v2763 = vand.u32 %v405, 4294901760
        %v2764 = vsub.f32 %v405, %v2763
        %v2765 = vand.u32 %v2764, 4294901760
        %2766 = vmatpush1.msra.mxu0 %v2765
        %v2767 = vand.u32 %v410, 4294901760
        %v2768 = vsub.f32 %v410, %v2767
        %v2769 = vand.u32 %v2768, 4294901760
        %2770 = vmatprep.subr.mxu0 %v2769
        %v2771 = vand.u32 %v409, 4294901760
        %v2772 = vsub.f32 %v409, %v2771
        %v2773 = vand.u32 %v2772, 4294901760
        %2774 = vmatpush1.msra.mxu0 %v2773
        %v2775 = vand.u32 %v414, 4294901760
        %v2776 = vsub.f32 %v414, %v2775
        %v2777 = vand.u32 %v2776, 4294901760
        %2778 = vmatprep.subr.mxu0 %v2777
        %v2779 = vand.u32 %v413, 4294901760
        %v2780 = vsub.f32 %v413, %v2779
        %v2781 = vand.u32 %v2780, 4294901760
        %2782 = vmatpush1.msra.mxu0 %v2781
        %v2783 = vand.u32 %v418, 4294901760
        %v2784 = vsub.f32 %v418, %v2783
        %v2785 = vand.u32 %v2784, 4294901760
        %2786 = vmatprep.subr.mxu0 %v2785
        %v2787 = vand.u32 %v417, 4294901760
        %v2788 = vsub.f32 %v417, %v2787
        %v2789 = vand.u32 %v2788, 4294901760
        %2790 = vmatpush1.msra.mxu0 %v2789
        %v2791 = vand.u32 %v422, 4294901760
        %v2792 = vsub.f32 %v422, %v2791
        %v2793 = vand.u32 %v2792, 4294901760
        %2794 = vmatprep.subr.mxu0 %v2793
        %v2795 = vand.u32 %v421, 4294901760
        %v2796 = vsub.f32 %v421, %v2795
        %v2797 = vand.u32 %v2796, 4294901760
        %2798 = vmatpush1.msra.mxu0 %v2797
        %v2799 = vand.u32 %v426, 4294901760
        %v2800 = vsub.f32 %v426, %v2799
        %v2801 = vand.u32 %v2800, 4294901760
        %2802 = vmatprep.subr.mxu0 %v2801
        %v2803 = vand.u32 %v425, 4294901760
        %v2804 = vsub.f32 %v425, %v2803
        %v2805 = vand.u32 %v2804, 4294901760
        %2806 = vmatpush1.msra.mxu0 %v2805
        %v2807 = vand.u32 %v430, 4294901760
        %v2808 = vsub.f32 %v430, %v2807
        %v2809 = vand.u32 %v2808, 4294901760
        %2810 = vmatprep.subr.mxu0 %v2809
        %v2811 = vand.u32 %v429, 4294901760
        %v2812 = vsub.f32 %v429, %v2811
        %v2813 = vand.u32 %v2812, 4294901760
        %2814 = vmatpush1.msra.mxu0 %v2813
        %v2815 = vand.u32 %v434, 4294901760
        %v2816 = vsub.f32 %v434, %v2815
        %v2817 = vand.u32 %v2816, 4294901760
        %2818 = vmatprep.subr.mxu0 %v2817
        %v2819 = vand.u32 %v433, 4294901760
        %v2820 = vsub.f32 %v433, %v2819
        %v2821 = vand.u32 %v2820, 4294901760
        %2822 = vmatpush1.msra.mxu0 %v2821
        %v2823 = vand.u32 %v438, 4294901760
        %v2824 = vsub.f32 %v438, %v2823
        %v2825 = vand.u32 %v2824, 4294901760
        %2826 = vmatprep.subr.mxu0 %v2825
        %v2827 = vand.u32 %v437, 4294901760
        %v2828 = vsub.f32 %v437, %v2827
        %v2829 = vand.u32 %v2828, 4294901760
        %2830 = vmatpush1.msra.mxu0 %v2829
        %v2831 = vand.u32 %v442, 4294901760
        %v2832 = vsub.f32 %v442, %v2831
        %v2833 = vand.u32 %v2832, 4294901760
        %2834 = vmatprep.subr.mxu0 %v2833
        %v2835 = vand.u32 %v441, 4294901760
        %v2836 = vsub.f32 %v441, %v2835
        %v2837 = vand.u32 %v2836, 4294901760
        %2838 = vmatpush1.msra.mxu0 %v2837
        %v2839 = vand.u32 %v446, 4294901760
        %v2840 = vsub.f32 %v446, %v2839
        %v2841 = vand.u32 %v2840, 4294901760
        %2842 = vmatprep.subr.mxu0 %v2841
        %v2843 = vand.u32 %v445, 4294901760
        %v2844 = vsub.f32 %v445, %v2843
        %v2845 = vand.u32 %v2844, 4294901760
        %2846 = vmatpush1.msra.mxu0 %v2845
        %v2847 = vand.u32 %v450, 4294901760
        %v2848 = vsub.f32 %v450, %v2847
        %v2849 = vand.u32 %v2848, 4294901760
        %2850 = vmatprep.subr.mxu0 %v2849
        %v2851 = vand.u32 %v449, 4294901760
        %v2852 = vsub.f32 %v449, %v2851
        %v2853 = vand.u32 %v2852, 4294901760
        %2854 = vmatpush1.msra.mxu0 %v2853
        %v2855 = vand.u32 %v454, 4294901760
        %v2856 = vsub.f32 %v454, %v2855
        %v2857 = vand.u32 %v2856, 4294901760
        %2858 = vmatprep.subr.mxu0 %v2857
        %v2859 = vand.u32 %v453, 4294901760
        %v2860 = vsub.f32 %v453, %v2859
        %v2861 = vand.u32 %v2860, 4294901760
        %2862 = vmatpush1.msra.mxu0 %v2861
        %v2863 = vand.u32 %v458, 4294901760
        %v2864 = vsub.f32 %v458, %v2863
        %v2865 = vand.u32 %v2864, 4294901760
        %2866 = vmatprep.subr.mxu0 %v2865
        %v2867 = vand.u32 %v457, 4294901760
        %v2868 = vsub.f32 %v457, %v2867
        %v2869 = vand.u32 %v2868, 4294901760
        %2870 = vmatpush1.msra.mxu0 %v2869
        %v2871 = vand.u32 %v462, 4294901760
        %v2872 = vsub.f32 %v462, %v2871
        %v2873 = vand.u32 %v2872, 4294901760
        %2874 = vmatprep.subr.mxu0 %v2873
        %v2875 = vand.u32 %v461, 4294901760
        %v2876 = vsub.f32 %v461, %v2875
        %v2877 = vand.u32 %v2876, 4294901760
        %2878 = vmatpush1.msra.mxu0 %v2877
        %v2879 = vand.u32 %v466, 4294901760
        %v2880 = vsub.f32 %v466, %v2879
        %v2881 = vand.u32 %v2880, 4294901760
        %2882 = vmatprep.subr.mxu0 %v2881
        %v2883 = vand.u32 %v465, 4294901760
        %v2884 = vsub.f32 %v465, %v2883
        %v2885 = vand.u32 %v2884, 4294901760
        %2886 = vmatpush1.msra.mxu0 %v2885
        %v2887 = vand.u32 %v470, 4294901760
        %v2888 = vsub.f32 %v470, %v2887
        %v2889 = vand.u32 %v2888, 4294901760
        %2890 = vmatprep.subr.mxu0 %v2889
        %v2891 = vand.u32 %v469, 4294901760
        %v2892 = vsub.f32 %v469, %v2891
        %v2893 = vand.u32 %v2892, 4294901760
        %2894 = vmatpush1.msra.mxu0 %v2893
        %v2895 = vand.u32 %v216, 4294901760
        %2896 = vmatprep.mubr.f32.mxu0 %v2895
        %v2897 = vand.u32 %v215, 4294901760
        %2898 = vmatmul.mubr.f32.gmra.mrb[0].mxu0 %v2897
        %v2899 = vpop.f32.mrb[0].mxu0
        %v2900 = vadd.f32 %v2635, %v2899
        %v2901 = vpop.f32.mrb[0].mxu0
        %v2902 = vadd.f32 %v2637, %v2901
        %2903 = vdwg.mxu0
        %v2904 = vand.u32 %v346, 4294901760
        %2905 = vmatprep.subr.mxu0 %v2904
        %v2906 = vand.u32 %v345, 4294901760
        %2907 = vmatpush1.msra.mxu0 %v2906
        %v2908 = vand.u32 %v350, 4294901760
        %2909 = vmatprep.subr.mxu0 %v2908
        %v2910 = vand.u32 %v349, 4294901760
        %2911 = vmatpush1.msra.mxu0 %v2910
        %v2912 = vand.u32 %v354, 4294901760
        %2913 = vmatprep.subr.mxu0 %v2912
        %v2914 = vand.u32 %v353, 4294901760
        %2915 = vmatpush1.msra.mxu0 %v2914
        %v2916 = vand.u32 %v358, 4294901760
        %2917 = vmatprep.subr.mxu0 %v2916
        %v2918 = vand.u32 %v357, 4294901760
        %2919 = vmatpush1.msra.mxu0 %v2918
        %v2920 = vand.u32 %v362, 4294901760
        %2921 = vmatprep.subr.mxu0 %v2920
        %v2922 = vand.u32 %v361, 4294901760
        %2923 = vmatpush1.msra.mxu0 %v2922
        %v2924 = vand.u32 %v366, 4294901760
        %2925 = vmatprep.subr.mxu0 %v2924
        %v2926 = vand.u32 %v365, 4294901760
        %2927 = vmatpush1.msra.mxu0 %v2926
        %v2928 = vand.u32 %v370, 4294901760
        %2929 = vmatprep.subr.mxu0 %v2928
        %v2930 = vand.u32 %v369, 4294901760
        %2931 = vmatpush1.msra.mxu0 %v2930
        %v2932 = vand.u32 %v374, 4294901760
        %2933 = vmatprep.subr.mxu0 %v2932
        %v2934 = vand.u32 %v373, 4294901760
        %2935 = vmatpush1.msra.mxu0 %v2934
        %v2936 = vand.u32 %v378, 4294901760
        %2937 = vmatprep.subr.mxu0 %v2936
        %v2938 = vand.u32 %v377, 4294901760
        %2939 = vmatpush1.msra.mxu0 %v2938
        %v2940 = vand.u32 %v382, 4294901760
        %2941 = vmatprep.subr.mxu0 %v2940
        %v2942 = vand.u32 %v381, 4294901760
        %2943 = vmatpush1.msra.mxu0 %v2942
        %v2944 = vand.u32 %v386, 4294901760
        %2945 = vmatprep.subr.mxu0 %v2944
        %v2946 = vand.u32 %v385, 4294901760
        %2947 = vmatpush1.msra.mxu0 %v2946
        %v2948 = vand.u32 %v390, 4294901760
        %2949 = vmatprep.subr.mxu0 %v2948
        %v2950 = vand.u32 %v389, 4294901760
        %2951 = vmatpush1.msra.mxu0 %v2950
        %v2952 = vand.u32 %v394, 4294901760
        %2953 = vmatprep.subr.mxu0 %v2952
        %v2954 = vand.u32 %v393, 4294901760
        %2955 = vmatpush1.msra.mxu0 %v2954
        %v2956 = vand.u32 %v398, 4294901760
        %2957 = vmatprep.subr.mxu0 %v2956
        %v2958 = vand.u32 %v397, 4294901760
        %2959 = vmatpush1.msra.mxu0 %v2958
        %v2960 = vand.u32 %v402, 4294901760
        %2961 = vmatprep.subr.mxu0 %v2960
        %v2962 = vand.u32 %v401, 4294901760
        %2963 = vmatpush1.msra.mxu0 %v2962
        %v2964 = vand.u32 %v406, 4294901760
        %2965 = vmatprep.subr.mxu0 %v2964
        %v2966 = vand.u32 %v405, 4294901760
        %2967 = vmatpush1.msra.mxu0 %v2966
        %v2968 = vand.u32 %v410, 4294901760
        %2969 = vmatprep.subr.mxu0 %v2968
        %v2970 = vand.u32 %v409, 4294901760
        %2971 = vmatpush1.msra.mxu0 %v2970
        %v2972 = vand.u32 %v414, 4294901760
        %2973 = vmatprep.subr.mxu0 %v2972
        %v2974 = vand.u32 %v413, 4294901760
        %2975 = vmatpush1.msra.mxu0 %v2974
        %v2976 = vand.u32 %v418, 4294901760
        %2977 = vmatprep.subr.mxu0 %v2976
        %v2978 = vand.u32 %v417, 4294901760
        %2979 = vmatpush1.msra.mxu0 %v2978
        %v2980 = vand.u32 %v422, 4294901760
        %2981 = vmatprep.subr.mxu0 %v2980
        %v2982 = vand.u32 %v421, 4294901760
        %2983 = vmatpush1.msra.mxu0 %v2982
        %v2984 = vand.u32 %v426, 4294901760
        %2985 = vmatprep.subr.mxu0 %v2984
        %v2986 = vand.u32 %v425, 4294901760
        %2987 = vmatpush1.msra.mxu0 %v2986
        %v2988 = vand.u32 %v430, 4294901760
        %2989 = vmatprep.subr.mxu0 %v2988
        %v2990 = vand.u32 %v429, 4294901760
        %2991 = vmatpush1.msra.mxu0 %v2990
        %v2992 = vand.u32 %v434, 4294901760
        %2993 = vmatprep.subr.mxu0 %v2992
        %v2994 = vand.u32 %v433, 4294901760
        %2995 = vmatpush1.msra.mxu0 %v2994
        %v2996 = vand.u32 %v438, 4294901760
        %2997 = vmatprep.subr.mxu0 %v2996
        %v2998 = vand.u32 %v437, 4294901760
        %2999 = vmatpush1.msra.mxu0 %v2998
        %v3000 = vand.u32 %v442, 4294901760
        %3001 = vmatprep.subr.mxu0 %v3000
        %v3002 = vand.u32 %v441, 4294901760
        %3003 = vmatpush1.msra.mxu0 %v3002
        %v3004 = vand.u32 %v446, 4294901760
        %3005 = vmatprep.subr.mxu0 %v3004
        %v3006 = vand.u32 %v445, 4294901760
        %3007 = vmatpush1.msra.mxu0 %v3006
        %v3008 = vand.u32 %v450, 4294901760
        %3009 = vmatprep.subr.mxu0 %v3008
        %v3010 = vand.u32 %v449, 4294901760
        %3011 = vmatpush1.msra.mxu0 %v3010
        %v3012 = vand.u32 %v454, 4294901760
        %3013 = vmatprep.subr.mxu0 %v3012
        %v3014 = vand.u32 %v453, 4294901760
        %3015 = vmatpush1.msra.mxu0 %v3014
        %v3016 = vand.u32 %v458, 4294901760
        %3017 = vmatprep.subr.mxu0 %v3016
        %v3018 = vand.u32 %v457, 4294901760
        %3019 = vmatpush1.msra.mxu0 %v3018
        %v3020 = vand.u32 %v462, 4294901760
        %3021 = vmatprep.subr.mxu0 %v3020
        %v3022 = vand.u32 %v461, 4294901760
        %3023 = vmatpush1.msra.mxu0 %v3022
        %v3024 = vand.u32 %v466, 4294901760
        %3025 = vmatprep.subr.mxu0 %v3024
        %v3026 = vand.u32 %v465, 4294901760
        %3027 = vmatpush1.msra.mxu0 %v3026
        %v3028 = vand.u32 %v470, 4294901760
        %3029 = vmatprep.subr.mxu0 %v3028
        %v3030 = vand.u32 %v469, 4294901760
        %3031 = vmatpush1.msra.mxu0 %v3030
        %v3032 = vand.u32 %v216, 4294901760
        %3033 = vmatprep.mubr.f32.mxu0 %v3032
        %v3034 = vand.u32 %v215, 4294901760
        %3035 = vmatmul.mubr.f32.gmra.mrb[0].mxu0 %v3034
        %v3036 = vpop.f32.mrb[0].mxu0
        %v3037 = vadd.f32 %v2900, %v3036
        %v3038 = vpop.f32.mrb[0].mxu0
        %v3039 = vadd.f32 %v2902, %v3038
        %3040 = vdwg.mxu0
        %v3041 = vand.u32 %v220, 4294901760
        %3042 = vmatprep.subr.mxu0 %v3041
        %v3043 = vand.u32 %v219, 4294901760
        %3044 = vmatpush1.msra.mxu0 %v3043
        %v3045 = vand.u32 %v224, 4294901760
        %3046 = vmatprep.subr.mxu0 %v3045
        %v3047 = vand.u32 %v223, 4294901760
        %3048 = vmatpush1.msra.mxu0 %v3047
        %v3049 = vand.u32 %v228, 4294901760
        %3050 = vmatprep.subr.mxu0 %v3049
        %v3051 = vand.u32 %v227, 4294901760
        %3052 = vmatpush1.msra.mxu0 %v3051
        %v3053 = vand.u32 %v232, 4294901760
        %3054 = vmatprep.subr.mxu0 %v3053
        %v3055 = vand.u32 %v231, 4294901760
        %3056 = vmatpush1.msra.mxu0 %v3055
        %v3057 = vand.u32 %v236, 4294901760
        %3058 = vmatprep.subr.mxu0 %v3057
        %v3059 = vand.u32 %v235, 4294901760
        %3060 = vmatpush1.msra.mxu0 %v3059
        %v3061 = vand.u32 %v240, 4294901760
        %3062 = vmatprep.subr.mxu0 %v3061
        %v3063 = vand.u32 %v239, 4294901760
        %3064 = vmatpush1.msra.mxu0 %v3063
        %v3065 = vand.u32 %v244, 4294901760
        %3066 = vmatprep.subr.mxu0 %v3065
        %v3067 = vand.u32 %v243, 4294901760
        %3068 = vmatpush1.msra.mxu0 %v3067
        %v3069 = vand.u32 %v248, 4294901760
        %3070 = vmatprep.subr.mxu0 %v3069
        %v3071 = vand.u32 %v247, 4294901760
        %3072 = vmatpush1.msra.mxu0 %v3071
        %v3073 = vand.u32 %v252, 4294901760
        %3074 = vmatprep.subr.mxu0 %v3073
        %v3075 = vand.u32 %v251, 4294901760
        %3076 = vmatpush1.msra.mxu0 %v3075
        %v3077 = vand.u32 %v256, 4294901760
        %3078 = vmatprep.subr.mxu0 %v3077
        %v3079 = vand.u32 %v255, 4294901760
        %3080 = vmatpush1.msra.mxu0 %v3079
        %v3081 = vand.u32 %v260, 4294901760
        %3082 = vmatprep.subr.mxu0 %v3081
        %v3083 = vand.u32 %v259, 4294901760
        %3084 = vmatpush1.msra.mxu0 %v3083
        %v3085 = vand.u32 %v264, 4294901760
        %3086 = vmatprep.subr.mxu0 %v3085
        %v3087 = vand.u32 %v263, 4294901760
        %3088 = vmatpush1.msra.mxu0 %v3087
        %v3089 = vand.u32 %v268, 4294901760
        %3090 = vmatprep.subr.mxu0 %v3089
        %v3091 = vand.u32 %v267, 4294901760
        %3092 = vmatpush1.msra.mxu0 %v3091
        %v3093 = vand.u32 %v272, 4294901760
        %3094 = vmatprep.subr.mxu0 %v3093
        %v3095 = vand.u32 %v271, 4294901760
        %3096 = vmatpush1.msra.mxu0 %v3095
        %v3097 = vand.u32 %v276, 4294901760
        %3098 = vmatprep.subr.mxu0 %v3097
        %v3099 = vand.u32 %v275, 4294901760
        %3100 = vmatpush1.msra.mxu0 %v3099
        %v3101 = vand.u32 %v280, 4294901760
        %3102 = vmatprep.subr.mxu0 %v3101
        %v3103 = vand.u32 %v279, 4294901760
        %3104 = vmatpush1.msra.mxu0 %v3103
        %v3105 = vand.u32 %v284, 4294901760
        %3106 = vmatprep.subr.mxu0 %v3105
        %v3107 = vand.u32 %v283, 4294901760
        %3108 = vmatpush1.msra.mxu0 %v3107
        %v3109 = vand.u32 %v288, 4294901760
        %3110 = vmatprep.subr.mxu0 %v3109
        %v3111 = vand.u32 %v287, 4294901760
        %3112 = vmatpush1.msra.mxu0 %v3111
        %v3113 = vand.u32 %v292, 4294901760
        %3114 = vmatprep.subr.mxu0 %v3113
        %v3115 = vand.u32 %v291, 4294901760
        %3116 = vmatpush1.msra.mxu0 %v3115
        %v3117 = vand.u32 %v296, 4294901760
        %3118 = vmatprep.subr.mxu0 %v3117
        %v3119 = vand.u32 %v295, 4294901760
        %3120 = vmatpush1.msra.mxu0 %v3119
        %v3121 = vand.u32 %v300, 4294901760
        %3122 = vmatprep.subr.mxu0 %v3121
        %v3123 = vand.u32 %v299, 4294901760
        %3124 = vmatpush1.msra.mxu0 %v3123
        %v3125 = vand.u32 %v304, 4294901760
        %3126 = vmatprep.subr.mxu0 %v3125
        %v3127 = vand.u32 %v303, 4294901760
        %3128 = vmatpush1.msra.mxu0 %v3127
        %v3129 = vand.u32 %v308, 4294901760
        %3130 = vmatprep.subr.mxu0 %v3129
        %v3131 = vand.u32 %v307, 4294901760
        %3132 = vmatpush1.msra.mxu0 %v3131
        %v3133 = vand.u32 %v312, 4294901760
        %3134 = vmatprep.subr.mxu0 %v3133
        %v3135 = vand.u32 %v311, 4294901760
        %3136 = vmatpush1.msra.mxu0 %v3135
        %v3137 = vand.u32 %v316, 4294901760
        %3138 = vmatprep.subr.mxu0 %v3137
        %v3139 = vand.u32 %v315, 4294901760
        %3140 = vmatpush1.msra.mxu0 %v3139
        %v3141 = vand.u32 %v320, 4294901760
        %3142 = vmatprep.subr.mxu0 %v3141
        %v3143 = vand.u32 %v319, 4294901760
        %3144 = vmatpush1.msra.mxu0 %v3143
        %v3145 = vand.u32 %v324, 4294901760
        %3146 = vmatprep.subr.mxu0 %v3145
        %v3147 = vand.u32 %v323, 4294901760
        %3148 = vmatpush1.msra.mxu0 %v3147
        %v3149 = vand.u32 %v328, 4294901760
        %3150 = vmatprep.subr.mxu0 %v3149
        %v3151 = vand.u32 %v327, 4294901760
        %3152 = vmatpush1.msra.mxu0 %v3151
        %v3153 = vand.u32 %v332, 4294901760
        %3154 = vmatprep.subr.mxu0 %v3153
        %v3155 = vand.u32 %v331, 4294901760
        %3156 = vmatpush1.msra.mxu0 %v3155
        %v3157 = vand.u32 %v336, 4294901760
        %3158 = vmatprep.subr.mxu0 %v3157
        %v3159 = vand.u32 %v335, 4294901760
        %3160 = vmatpush1.msra.mxu0 %v3159
        %v3161 = vand.u32 %v340, 4294901760
        %3162 = vmatprep.subr.mxu0 %v3161
        %v3163 = vand.u32 %v339, 4294901760
        %3164 = vmatpush1.msra.mxu0 %v3163
        %v3165 = vand.u32 %v344, 4294901760
        %3166 = vmatprep.subr.mxu0 %v3165
        %v3167 = vand.u32 %v343, 4294901760
        %3168 = vmatpush1.msra.mxu0 %v3167
        %v3169 = vand.u32 %v214, 4294901760
        %v3170 = vsub.f32 %v214, %v3169
        %v3171 = vand.u32 %v3170, 4294901760
        %v3172 = vsub.f32 %v3170, %v3171
        %v3173 = vand.u32 %v3172, 4294901760
        %3174 = vmatprep.mubr.f32.mxu0 %v3173
        %v3175 = vand.u32 %v213, 4294901760
        %v3176 = vsub.f32 %v213, %v3175
        %v3177 = vand.u32 %v3176, 4294901760
        %v3178 = vsub.f32 %v3176, %v3177
        %v3179 = vand.u32 %v3178, 4294901760
        %3180 = vmatmul.mubr.f32.gmra.mrb[0].mxu0 %v3179
        %v3181 = vpop.f32.mrb[0].mxu0
        %v3182 = vadd.f32 0.0, %v3181
        %v3183 = vpop.f32.mrb[0].mxu0
        %v3184 = vadd.f32 0.0, %v3183
        %3185 = vdwg.mxu0
        %v3186 = vand.u32 %v220, 4294901760
        %v3187 = vsub.f32 %v220, %v3186
        %v3188 = vand.u32 %v3187, 4294901760
        %v3189 = vsub.f32 %v3187, %v3188
        %v3190 = vand.u32 %v3189, 4294901760
        %3191 = vmatprep.subr.mxu0 %v3190
        %v3192 = vand.u32 %v219, 4294901760
        %v3193 = vsub.f32 %v219, %v3192
        %v3194 = vand.u32 %v3193, 4294901760
        %v3195 = vsub.f32 %v3193, %v3194
        %v3196 = vand.u32 %v3195, 4294901760
        %3197 = vmatpush1.msra.mxu0 %v3196
        %v3198 = vand.u32 %v224, 4294901760
        %v3199 = vsub.f32 %v224, %v3198
        %v3200 = vand.u32 %v3199, 4294901760
        %v3201 = vsub.f32 %v3199, %v3200
        %v3202 = vand.u32 %v3201, 4294901760
        %3203 = vmatprep.subr.mxu0 %v3202
        %v3204 = vand.u32 %v223, 4294901760
        %v3205 = vsub.f32 %v223, %v3204
        %v3206 = vand.u32 %v3205, 4294901760
        %v3207 = vsub.f32 %v3205, %v3206
        %v3208 = vand.u32 %v3207, 4294901760
        %3209 = vmatpush1.msra.mxu0 %v3208
        %v3210 = vand.u32 %v228, 4294901760
        %v3211 = vsub.f32 %v228, %v3210
        %v3212 = vand.u32 %v3211, 4294901760
        %v3213 = vsub.f32 %v3211, %v3212
        %v3214 = vand.u32 %v3213, 4294901760
        %3215 = vmatprep.subr.mxu0 %v3214
        %v3216 = vand.u32 %v227, 4294901760
        %v3217 = vsub.f32 %v227, %v3216
        %v3218 = vand.u32 %v3217, 4294901760
        %v3219 = vsub.f32 %v3217, %v3218
        %v3220 = vand.u32 %v3219, 4294901760
        %3221 = vmatpush1.msra.mxu0 %v3220
        %v3222 = vand.u32 %v232, 4294901760
        %v3223 = vsub.f32 %v232, %v3222
        %v3224 = vand.u32 %v3223, 4294901760
        %v3225 = vsub.f32 %v3223, %v3224
        %v3226 = vand.u32 %v3225, 4294901760
        %3227 = vmatprep.subr.mxu0 %v3226
        %v3228 = vand.u32 %v231, 4294901760
        %v3229 = vsub.f32 %v231, %v3228
        %v3230 = vand.u32 %v3229, 4294901760
        %v3231 = vsub.f32 %v3229, %v3230
        %v3232 = vand.u32 %v3231, 4294901760
        %3233 = vmatpush1.msra.mxu0 %v3232
        %v3234 = vand.u32 %v236, 4294901760
        %v3235 = vsub.f32 %v236, %v3234
        %v3236 = vand.u32 %v3235, 4294901760
        %v3237 = vsub.f32 %v3235, %v3236
        %v3238 = vand.u32 %v3237, 4294901760
        %3239 = vmatprep.subr.mxu0 %v3238
        %v3240 = vand.u32 %v235, 4294901760
        %v3241 = vsub.f32 %v235, %v3240
        %v3242 = vand.u32 %v3241, 4294901760
        %v3243 = vsub.f32 %v3241, %v3242
        %v3244 = vand.u32 %v3243, 4294901760
        %3245 = vmatpush1.msra.mxu0 %v3244
        %v3246 = vand.u32 %v240, 4294901760
        %v3247 = vsub.f32 %v240, %v3246
        %v3248 = vand.u32 %v3247, 4294901760
        %v3249 = vsub.f32 %v3247, %v3248
        %v3250 = vand.u32 %v3249, 4294901760
        %3251 = vmatprep.subr.mxu0 %v3250
        %v3252 = vand.u32 %v239, 4294901760
        %v3253 = vsub.f32 %v239, %v3252
        %v3254 = vand.u32 %v3253, 4294901760
        %v3255 = vsub.f32 %v3253, %v3254
        %v3256 = vand.u32 %v3255, 4294901760
        %3257 = vmatpush1.msra.mxu0 %v3256
        %v3258 = vand.u32 %v244, 4294901760
        %v3259 = vsub.f32 %v244, %v3258
        %v3260 = vand.u32 %v3259, 4294901760
        %v3261 = vsub.f32 %v3259, %v3260
        %v3262 = vand.u32 %v3261, 4294901760
        %3263 = vmatprep.subr.mxu0 %v3262
        %v3264 = vand.u32 %v243, 4294901760
        %v3265 = vsub.f32 %v243, %v3264
        %v3266 = vand.u32 %v3265, 4294901760
        %v3267 = vsub.f32 %v3265, %v3266
        %v3268 = vand.u32 %v3267, 4294901760
        %3269 = vmatpush1.msra.mxu0 %v3268
        %v3270 = vand.u32 %v248, 4294901760
        %v3271 = vsub.f32 %v248, %v3270
        %v3272 = vand.u32 %v3271, 4294901760
        %v3273 = vsub.f32 %v3271, %v3272
        %v3274 = vand.u32 %v3273, 4294901760
        %3275 = vmatprep.subr.mxu0 %v3274
        %v3276 = vand.u32 %v247, 4294901760
        %v3277 = vsub.f32 %v247, %v3276
        %v3278 = vand.u32 %v3277, 4294901760
        %v3279 = vsub.f32 %v3277, %v3278
        %v3280 = vand.u32 %v3279, 4294901760
        %3281 = vmatpush1.msra.mxu0 %v3280
        %v3282 = vand.u32 %v252, 4294901760
        %v3283 = vsub.f32 %v252, %v3282
        %v3284 = vand.u32 %v3283, 4294901760
        %v3285 = vsub.f32 %v3283, %v3284
        %v3286 = vand.u32 %v3285, 4294901760
        %3287 = vmatprep.subr.mxu0 %v3286
        %v3288 = vand.u32 %v251, 4294901760
        %v3289 = vsub.f32 %v251, %v3288
        %v3290 = vand.u32 %v3289, 4294901760
        %v3291 = vsub.f32 %v3289, %v3290
        %v3292 = vand.u32 %v3291, 4294901760
        %3293 = vmatpush1.msra.mxu0 %v3292
        %v3294 = vand.u32 %v256, 4294901760
        %v3295 = vsub.f32 %v256, %v3294
        %v3296 = vand.u32 %v3295, 4294901760
        %v3297 = vsub.f32 %v3295, %v3296
        %v3298 = vand.u32 %v3297, 4294901760
        %3299 = vmatprep.subr.mxu0 %v3298
        %v3300 = vand.u32 %v255, 4294901760
        %v3301 = vsub.f32 %v255, %v3300
        %v3302 = vand.u32 %v3301, 4294901760
        %v3303 = vsub.f32 %v3301, %v3302
        %v3304 = vand.u32 %v3303, 4294901760
        %3305 = vmatpush1.msra.mxu0 %v3304
        %v3306 = vand.u32 %v260, 4294901760
        %v3307 = vsub.f32 %v260, %v3306
        %v3308 = vand.u32 %v3307, 4294901760
        %v3309 = vsub.f32 %v3307, %v3308
        %v3310 = vand.u32 %v3309, 4294901760
        %3311 = vmatprep.subr.mxu0 %v3310
        %v3312 = vand.u32 %v259, 4294901760
        %v3313 = vsub.f32 %v259, %v3312
        %v3314 = vand.u32 %v3313, 4294901760
        %v3315 = vsub.f32 %v3313, %v3314
        %v3316 = vand.u32 %v3315, 4294901760
        %3317 = vmatpush1.msra.mxu0 %v3316
        %v3318 = vand.u32 %v264, 4294901760
        %v3319 = vsub.f32 %v264, %v3318
        %v3320 = vand.u32 %v3319, 4294901760
        %v3321 = vsub.f32 %v3319, %v3320
        %v3322 = vand.u32 %v3321, 4294901760
        %3323 = vmatprep.subr.mxu0 %v3322
        %v3324 = vand.u32 %v263, 4294901760
        %v3325 = vsub.f32 %v263, %v3324
        %v3326 = vand.u32 %v3325, 4294901760
        %v3327 = vsub.f32 %v3325, %v3326
        %v3328 = vand.u32 %v3327, 4294901760
        %3329 = vmatpush1.msra.mxu0 %v3328
        %v3330 = vand.u32 %v268, 4294901760
        %v3331 = vsub.f32 %v268, %v3330
        %v3332 = vand.u32 %v3331, 4294901760
        %v3333 = vsub.f32 %v3331, %v3332
        %v3334 = vand.u32 %v3333, 4294901760
        %3335 = vmatprep.subr.mxu0 %v3334
        %v3336 = vand.u32 %v267, 4294901760
        %v3337 = vsub.f32 %v267, %v3336
        %v3338 = vand.u32 %v3337, 4294901760
        %v3339 = vsub.f32 %v3337, %v3338
        %v3340 = vand.u32 %v3339, 4294901760
        %3341 = vmatpush1.msra.mxu0 %v3340
        %v3342 = vand.u32 %v272, 4294901760
        %v3343 = vsub.f32 %v272, %v3342
        %v3344 = vand.u32 %v3343, 4294901760
        %v3345 = vsub.f32 %v3343, %v3344
        %v3346 = vand.u32 %v3345, 4294901760
        %3347 = vmatprep.subr.mxu0 %v3346
        %v3348 = vand.u32 %v271, 4294901760
        %v3349 = vsub.f32 %v271, %v3348
        %v3350 = vand.u32 %v3349, 4294901760
        %v3351 = vsub.f32 %v3349, %v3350
        %v3352 = vand.u32 %v3351, 4294901760
        %3353 = vmatpush1.msra.mxu0 %v3352
        %v3354 = vand.u32 %v276, 4294901760
        %v3355 = vsub.f32 %v276, %v3354
        %v3356 = vand.u32 %v3355, 4294901760
        %v3357 = vsub.f32 %v3355, %v3356
        %v3358 = vand.u32 %v3357, 4294901760
        %3359 = vmatprep.subr.mxu0 %v3358
        %v3360 = vand.u32 %v275, 4294901760
        %v3361 = vsub.f32 %v275, %v3360
        %v3362 = vand.u32 %v3361, 4294901760
        %v3363 = vsub.f32 %v3361, %v3362
        %v3364 = vand.u32 %v3363, 4294901760
        %3365 = vmatpush1.msra.mxu0 %v3364
        %v3366 = vand.u32 %v280, 4294901760
        %v3367 = vsub.f32 %v280, %v3366
        %v3368 = vand.u32 %v3367, 4294901760
        %v3369 = vsub.f32 %v3367, %v3368
        %v3370 = vand.u32 %v3369, 4294901760
        %3371 = vmatprep.subr.mxu0 %v3370
        %v3372 = vand.u32 %v279, 4294901760
        %v3373 = vsub.f32 %v279, %v3372
        %v3374 = vand.u32 %v3373, 4294901760
        %v3375 = vsub.f32 %v3373, %v3374
        %v3376 = vand.u32 %v3375, 4294901760
        %3377 = vmatpush1.msra.mxu0 %v3376
        %v3378 = vand.u32 %v284, 4294901760
        %v3379 = vsub.f32 %v284, %v3378
        %v3380 = vand.u32 %v3379, 4294901760
        %v3381 = vsub.f32 %v3379, %v3380
        %v3382 = vand.u32 %v3381, 4294901760
        %3383 = vmatprep.subr.mxu0 %v3382
        %v3384 = vand.u32 %v283, 4294901760
        %v3385 = vsub.f32 %v283, %v3384
        %v3386 = vand.u32 %v3385, 4294901760
        %v3387 = vsub.f32 %v3385, %v3386
        %v3388 = vand.u32 %v3387, 4294901760
        %3389 = vmatpush1.msra.mxu0 %v3388
        %v3390 = vand.u32 %v288, 4294901760
        %v3391 = vsub.f32 %v288, %v3390
        %v3392 = vand.u32 %v3391, 4294901760
        %v3393 = vsub.f32 %v3391, %v3392
        %v3394 = vand.u32 %v3393, 4294901760
        %3395 = vmatprep.subr.mxu0 %v3394
        %v3396 = vand.u32 %v287, 4294901760
        %v3397 = vsub.f32 %v287, %v3396
        %v3398 = vand.u32 %v3397, 4294901760
        %v3399 = vsub.f32 %v3397, %v3398
        %v3400 = vand.u32 %v3399, 4294901760
        %3401 = vmatpush1.msra.mxu0 %v3400
        %v3402 = vand.u32 %v292, 4294901760
        %v3403 = vsub.f32 %v292, %v3402
        %v3404 = vand.u32 %v3403, 4294901760
        %v3405 = vsub.f32 %v3403, %v3404
        %v3406 = vand.u32 %v3405, 4294901760
        %3407 = vmatprep.subr.mxu0 %v3406
        %v3408 = vand.u32 %v291, 4294901760
        %v3409 = vsub.f32 %v291, %v3408
        %v3410 = vand.u32 %v3409, 4294901760
        %v3411 = vsub.f32 %v3409, %v3410
        %v3412 = vand.u32 %v3411, 4294901760
        %3413 = vmatpush1.msra.mxu0 %v3412
        %v3414 = vand.u32 %v296, 4294901760
        %v3415 = vsub.f32 %v296, %v3414
        %v3416 = vand.u32 %v3415, 4294901760
        %v3417 = vsub.f32 %v3415, %v3416
        %v3418 = vand.u32 %v3417, 4294901760
        %3419 = vmatprep.subr.mxu0 %v3418
        %v3420 = vand.u32 %v295, 4294901760
        %v3421 = vsub.f32 %v295, %v3420
        %v3422 = vand.u32 %v3421, 4294901760
        %v3423 = vsub.f32 %v3421, %v3422
        %v3424 = vand.u32 %v3423, 4294901760
        %3425 = vmatpush1.msra.mxu0 %v3424
        %v3426 = vand.u32 %v300, 4294901760
        %v3427 = vsub.f32 %v300, %v3426
        %v3428 = vand.u32 %v3427, 4294901760
        %v3429 = vsub.f32 %v3427, %v3428
        %v3430 = vand.u32 %v3429, 4294901760
        %3431 = vmatprep.subr.mxu0 %v3430
        %v3432 = vand.u32 %v299, 4294901760
        %v3433 = vsub.f32 %v299, %v3432
        %v3434 = vand.u32 %v3433, 4294901760
        %v3435 = vsub.f32 %v3433, %v3434
        %v3436 = vand.u32 %v3435, 4294901760
        %3437 = vmatpush1.msra.mxu0 %v3436
        %v3438 = vand.u32 %v304, 4294901760
        %v3439 = vsub.f32 %v304, %v3438
        %v3440 = vand.u32 %v3439, 4294901760
        %v3441 = vsub.f32 %v3439, %v3440
        %v3442 = vand.u32 %v3441, 4294901760
        %3443 = vmatprep.subr.mxu0 %v3442
        %v3444 = vand.u32 %v303, 4294901760
        %v3445 = vsub.f32 %v303, %v3444
        %v3446 = vand.u32 %v3445, 4294901760
        %v3447 = vsub.f32 %v3445, %v3446
        %v3448 = vand.u32 %v3447, 4294901760
        %3449 = vmatpush1.msra.mxu0 %v3448
        %v3450 = vand.u32 %v308, 4294901760
        %v3451 = vsub.f32 %v308, %v3450
        %v3452 = vand.u32 %v3451, 4294901760
        %v3453 = vsub.f32 %v3451, %v3452
        %v3454 = vand.u32 %v3453, 4294901760
        %3455 = vmatprep.subr.mxu0 %v3454
        %v3456 = vand.u32 %v307, 4294901760
        %v3457 = vsub.f32 %v307, %v3456
        %v3458 = vand.u32 %v3457, 4294901760
        %v3459 = vsub.f32 %v3457, %v3458
        %v3460 = vand.u32 %v3459, 4294901760
        %3461 = vmatpush1.msra.mxu0 %v3460
        %v3462 = vand.u32 %v312, 4294901760
        %v3463 = vsub.f32 %v312, %v3462
        %v3464 = vand.u32 %v3463, 4294901760
        %v3465 = vsub.f32 %v3463, %v3464
        %v3466 = vand.u32 %v3465, 4294901760
        %3467 = vmatprep.subr.mxu0 %v3466
        %v3468 = vand.u32 %v311, 4294901760
        %v3469 = vsub.f32 %v311, %v3468
        %v3470 = vand.u32 %v3469, 4294901760
        %v3471 = vsub.f32 %v3469, %v3470
        %v3472 = vand.u32 %v3471, 4294901760
        %3473 = vmatpush1.msra.mxu0 %v3472
        %v3474 = vand.u32 %v316, 4294901760
        %v3475 = vsub.f32 %v316, %v3474
        %v3476 = vand.u32 %v3475, 4294901760
        %v3477 = vsub.f32 %v3475, %v3476
        %v3478 = vand.u32 %v3477, 4294901760
        %3479 = vmatprep.subr.mxu0 %v3478
        %v3480 = vand.u32 %v315, 4294901760
        %v3481 = vsub.f32 %v315, %v3480
        %v3482 = vand.u32 %v3481, 4294901760
        %v3483 = vsub.f32 %v3481, %v3482
        %v3484 = vand.u32 %v3483, 4294901760
        %3485 = vmatpush1.msra.mxu0 %v3484
        %v3486 = vand.u32 %v320, 4294901760
        %v3487 = vsub.f32 %v320, %v3486
        %v3488 = vand.u32 %v3487, 4294901760
        %v3489 = vsub.f32 %v3487, %v3488
        %v3490 = vand.u32 %v3489, 4294901760
        %3491 = vmatprep.subr.mxu0 %v3490
        %v3492 = vand.u32 %v319, 4294901760
        %v3493 = vsub.f32 %v319, %v3492
        %v3494 = vand.u32 %v3493, 4294901760
        %v3495 = vsub.f32 %v3493, %v3494
        %v3496 = vand.u32 %v3495, 4294901760
        %3497 = vmatpush1.msra.mxu0 %v3496
        %v3498 = vand.u32 %v324, 4294901760
        %v3499 = vsub.f32 %v324, %v3498
        %v3500 = vand.u32 %v3499, 4294901760
        %v3501 = vsub.f32 %v3499, %v3500
        %v3502 = vand.u32 %v3501, 4294901760
        %3503 = vmatprep.subr.mxu0 %v3502
        %v3504 = vand.u32 %v323, 4294901760
        %v3505 = vsub.f32 %v323, %v3504
        %v3506 = vand.u32 %v3505, 4294901760
        %v3507 = vsub.f32 %v3505, %v3506
        %v3508 = vand.u32 %v3507, 4294901760
        %3509 = vmatpush1.msra.mxu0 %v3508
        %v3510 = vand.u32 %v328, 4294901760
        %v3511 = vsub.f32 %v328, %v3510
        %v3512 = vand.u32 %v3511, 4294901760
        %v3513 = vsub.f32 %v3511, %v3512
        %v3514 = vand.u32 %v3513, 4294901760
        %3515 = vmatprep.subr.mxu0 %v3514
        %v3516 = vand.u32 %v327, 4294901760
        %v3517 = vsub.f32 %v327, %v3516
        %v3518 = vand.u32 %v3517, 4294901760
        %v3519 = vsub.f32 %v3517, %v3518
        %v3520 = vand.u32 %v3519, 4294901760
        %3521 = vmatpush1.msra.mxu0 %v3520
        %v3522 = vand.u32 %v332, 4294901760
        %v3523 = vsub.f32 %v332, %v3522
        %v3524 = vand.u32 %v3523, 4294901760
        %v3525 = vsub.f32 %v3523, %v3524
        %v3526 = vand.u32 %v3525, 4294901760
        %3527 = vmatprep.subr.mxu0 %v3526
        %v3528 = vand.u32 %v331, 4294901760
        %v3529 = vsub.f32 %v331, %v3528
        %v3530 = vand.u32 %v3529, 4294901760
        %v3531 = vsub.f32 %v3529, %v3530
        %v3532 = vand.u32 %v3531, 4294901760
        %3533 = vmatpush1.msra.mxu0 %v3532
        %v3534 = vand.u32 %v336, 4294901760
        %v3535 = vsub.f32 %v336, %v3534
        %v3536 = vand.u32 %v3535, 4294901760
        %v3537 = vsub.f32 %v3535, %v3536
        %v3538 = vand.u32 %v3537, 4294901760
        %3539 = vmatprep.subr.mxu0 %v3538
        %v3540 = vand.u32 %v335, 4294901760
        %v3541 = vsub.f32 %v335, %v3540
        %v3542 = vand.u32 %v3541, 4294901760
        %v3543 = vsub.f32 %v3541, %v3542
        %v3544 = vand.u32 %v3543, 4294901760
        %3545 = vmatpush1.msra.mxu0 %v3544
        %v3546 = vand.u32 %v340, 4294901760
        %v3547 = vsub.f32 %v340, %v3546
        %v3548 = vand.u32 %v3547, 4294901760
        %v3549 = vsub.f32 %v3547, %v3548
        %v3550 = vand.u32 %v3549, 4294901760
        %3551 = vmatprep.subr.mxu0 %v3550
        %v3552 = vand.u32 %v339, 4294901760
        %v3553 = vsub.f32 %v339, %v3552
        %v3554 = vand.u32 %v3553, 4294901760
        %v3555 = vsub.f32 %v3553, %v3554
        %v3556 = vand.u32 %v3555, 4294901760
        %3557 = vmatpush1.msra.mxu0 %v3556
        %v3558 = vand.u32 %v344, 4294901760
        %v3559 = vsub.f32 %v344, %v3558
        %v3560 = vand.u32 %v3559, 4294901760
        %v3561 = vsub.f32 %v3559, %v3560
        %v3562 = vand.u32 %v3561, 4294901760
        %3563 = vmatprep.subr.mxu0 %v3562
        %v3564 = vand.u32 %v343, 4294901760
        %v3565 = vsub.f32 %v343, %v3564
        %v3566 = vand.u32 %v3565, 4294901760
        %v3567 = vsub.f32 %v3565, %v3566
        %v3568 = vand.u32 %v3567, 4294901760
        %3569 = vmatpush1.msra.mxu0 %v3568
        %v3570 = vand.u32 %v214, 4294901760
        %3571 = vmatprep.mubr.f32.mxu0 %v3570
        %v3572 = vand.u32 %v213, 4294901760
        %3573 = vmatmul.mubr.f32.gmra.mrb[0].mxu0 %v3572
        %v3574 = vpop.f32.mrb[0].mxu0
        %v3575 = vadd.f32 %v3182, %v3574
        %v3576 = vpop.f32.mrb[0].mxu0
        %v3577 = vadd.f32 %v3184, %v3576
        %3578 = vdwg.mxu0
        %v3579 = vand.u32 %v220, 4294901760
        %v3580 = vsub.f32 %v220, %v3579
        %3581 = vmatprep.subr.mxu0 %v3580
        %v3582 = vand.u32 %v219, 4294901760
        %v3583 = vsub.f32 %v219, %v3582
        %3584 = vmatpush1.msra.mxu0 %v3583
        %v3585 = vand.u32 %v224, 4294901760
        %v3586 = vsub.f32 %v224, %v3585
        %3587 = vmatprep.subr.mxu0 %v3586
        %v3588 = vand.u32 %v223, 4294901760
        %v3589 = vsub.f32 %v223, %v3588
        %3590 = vmatpush1.msra.mxu0 %v3589
        %v3591 = vand.u32 %v228, 4294901760
        %v3592 = vsub.f32 %v228, %v3591
        %3593 = vmatprep.subr.mxu0 %v3592
        %v3594 = vand.u32 %v227, 4294901760
        %v3595 = vsub.f32 %v227, %v3594
        %3596 = vmatpush1.msra.mxu0 %v3595
        %v3597 = vand.u32 %v232, 4294901760
        %v3598 = vsub.f32 %v232, %v3597
        %3599 = vmatprep.subr.mxu0 %v3598
        %v3600 = vand.u32 %v231, 4294901760
        %v3601 = vsub.f32 %v231, %v3600
        %3602 = vmatpush1.msra.mxu0 %v3601
        %v3603 = vand.u32 %v236, 4294901760
        %v3604 = vsub.f32 %v236, %v3603
        %3605 = vmatprep.subr.mxu0 %v3604
        %v3606 = vand.u32 %v235, 4294901760
        %v3607 = vsub.f32 %v235, %v3606
        %3608 = vmatpush1.msra.mxu0 %v3607
        %v3609 = vand.u32 %v240, 4294901760
        %v3610 = vsub.f32 %v240, %v3609
        %3611 = vmatprep.subr.mxu0 %v3610
        %v3612 = vand.u32 %v239, 4294901760
        %v3613 = vsub.f32 %v239, %v3612
        %3614 = vmatpush1.msra.mxu0 %v3613
        %v3615 = vand.u32 %v244, 4294901760
        %v3616 = vsub.f32 %v244, %v3615
        %3617 = vmatprep.subr.mxu0 %v3616
        %v3618 = vand.u32 %v243, 4294901760
        %v3619 = vsub.f32 %v243, %v3618
        %3620 = vmatpush1.msra.mxu0 %v3619
        %v3621 = vand.u32 %v248, 4294901760
        %v3622 = vsub.f32 %v248, %v3621
        %3623 = vmatprep.subr.mxu0 %v3622
        %v3624 = vand.u32 %v247, 4294901760
        %v3625 = vsub.f32 %v247, %v3624
        %3626 = vmatpush1.msra.mxu0 %v3625
        %v3627 = vand.u32 %v252, 4294901760
        %v3628 = vsub.f32 %v252, %v3627
        %3629 = vmatprep.subr.mxu0 %v3628
        %v3630 = vand.u32 %v251, 4294901760
        %v3631 = vsub.f32 %v251, %v3630
        %3632 = vmatpush1.msra.mxu0 %v3631
        %v3633 = vand.u32 %v256, 4294901760
        %v3634 = vsub.f32 %v256, %v3633
        %3635 = vmatprep.subr.mxu0 %v3634
        %v3636 = vand.u32 %v255, 4294901760
        %v3637 = vsub.f32 %v255, %v3636
        %3638 = vmatpush1.msra.mxu0 %v3637
        %v3639 = vand.u32 %v260, 4294901760
        %v3640 = vsub.f32 %v260, %v3639
        %3641 = vmatprep.subr.mxu0 %v3640
        %v3642 = vand.u32 %v259, 4294901760
        %v3643 = vsub.f32 %v259, %v3642
        %3644 = vmatpush1.msra.mxu0 %v3643
        %v3645 = vand.u32 %v264, 4294901760
        %v3646 = vsub.f32 %v264, %v3645
        %3647 = vmatprep.subr.mxu0 %v3646
        %v3648 = vand.u32 %v263, 4294901760
        %v3649 = vsub.f32 %v263, %v3648
        %3650 = vmatpush1.msra.mxu0 %v3649
        %v3651 = vand.u32 %v268, 4294901760
        %v3652 = vsub.f32 %v268, %v3651
        %3653 = vmatprep.subr.mxu0 %v3652
        %v3654 = vand.u32 %v267, 4294901760
        %v3655 = vsub.f32 %v267, %v3654
        %3656 = vmatpush1.msra.mxu0 %v3655
        %v3657 = vand.u32 %v272, 4294901760
        %v3658 = vsub.f32 %v272, %v3657
        %3659 = vmatprep.subr.mxu0 %v3658
        %v3660 = vand.u32 %v271, 4294901760
        %v3661 = vsub.f32 %v271, %v3660
        %3662 = vmatpush1.msra.mxu0 %v3661
        %v3663 = vand.u32 %v276, 4294901760
        %v3664 = vsub.f32 %v276, %v3663
        %3665 = vmatprep.subr.mxu0 %v3664
        %v3666 = vand.u32 %v275, 4294901760
        %v3667 = vsub.f32 %v275, %v3666
        %3668 = vmatpush1.msra.mxu0 %v3667
        %v3669 = vand.u32 %v280, 4294901760
        %v3670 = vsub.f32 %v280, %v3669
        %3671 = vmatprep.subr.mxu0 %v3670
        %v3672 = vand.u32 %v279, 4294901760
        %v3673 = vsub.f32 %v279, %v3672
        %3674 = vmatpush1.msra.mxu0 %v3673
        %v3675 = vand.u32 %v284, 4294901760
        %v3676 = vsub.f32 %v284, %v3675
        %3677 = vmatprep.subr.mxu0 %v3676
        %v3678 = vand.u32 %v283, 4294901760
        %v3679 = vsub.f32 %v283, %v3678
        %3680 = vmatpush1.msra.mxu0 %v3679
        %v3681 = vand.u32 %v288, 4294901760
        %v3682 = vsub.f32 %v288, %v3681
        %3683 = vmatprep.subr.mxu0 %v3682
        %v3684 = vand.u32 %v287, 4294901760
        %v3685 = vsub.f32 %v287, %v3684
        %3686 = vmatpush1.msra.mxu0 %v3685
        %v3687 = vand.u32 %v292, 4294901760
        %v3688 = vsub.f32 %v292, %v3687
        %3689 = vmatprep.subr.mxu0 %v3688
        %v3690 = vand.u32 %v291, 4294901760
        %v3691 = vsub.f32 %v291, %v3690
        %3692 = vmatpush1.msra.mxu0 %v3691
        %v3693 = vand.u32 %v296, 4294901760
        %v3694 = vsub.f32 %v296, %v3693
        %3695 = vmatprep.subr.mxu0 %v3694
        %v3696 = vand.u32 %v295, 4294901760
        %v3697 = vsub.f32 %v295, %v3696
        %3698 = vmatpush1.msra.mxu0 %v3697
        %v3699 = vand.u32 %v300, 4294901760
        %v3700 = vsub.f32 %v300, %v3699
        %3701 = vmatprep.subr.mxu0 %v3700
        %v3702 = vand.u32 %v299, 4294901760
        %v3703 = vsub.f32 %v299, %v3702
        %3704 = vmatpush1.msra.mxu0 %v3703
        %v3705 = vand.u32 %v304, 4294901760
        %v3706 = vsub.f32 %v304, %v3705
        %3707 = vmatprep.subr.mxu0 %v3706
        %v3708 = vand.u32 %v303, 4294901760
        %v3709 = vsub.f32 %v303, %v3708
        %3710 = vmatpush1.msra.mxu0 %v3709
        %v3711 = vand.u32 %v308, 4294901760
        %v3712 = vsub.f32 %v308, %v3711
        %3713 = vmatprep.subr.mxu0 %v3712
        %v3714 = vand.u32 %v307, 4294901760
        %v3715 = vsub.f32 %v307, %v3714
        %3716 = vmatpush1.msra.mxu0 %v3715
        %v3717 = vand.u32 %v312, 4294901760
        %v3718 = vsub.f32 %v312, %v3717
        %3719 = vmatprep.subr.mxu0 %v3718
        %v3720 = vand.u32 %v311, 4294901760
        %v3721 = vsub.f32 %v311, %v3720
        %3722 = vmatpush1.msra.mxu0 %v3721
        %v3723 = vand.u32 %v316, 4294901760
        %v3724 = vsub.f32 %v316, %v3723
        %3725 = vmatprep.subr.mxu0 %v3724
        %v3726 = vand.u32 %v315, 4294901760
        %v3727 = vsub.f32 %v315, %v3726
        %3728 = vmatpush1.msra.mxu0 %v3727
        %v3729 = vand.u32 %v320, 4294901760
        %v3730 = vsub.f32 %v320, %v3729
        %3731 = vmatprep.subr.mxu0 %v3730
        %v3732 = vand.u32 %v319, 4294901760
        %v3733 = vsub.f32 %v319, %v3732
        %3734 = vmatpush1.msra.mxu0 %v3733
        %v3735 = vand.u32 %v324, 4294901760
        %v3736 = vsub.f32 %v324, %v3735
        %3737 = vmatprep.subr.mxu0 %v3736
        %v3738 = vand.u32 %v323, 4294901760
        %v3739 = vsub.f32 %v323, %v3738
        %3740 = vmatpush1.msra.mxu0 %v3739
        %v3741 = vand.u32 %v328, 4294901760
        %v3742 = vsub.f32 %v328, %v3741
        %3743 = vmatprep.subr.mxu0 %v3742
        %v3744 = vand.u32 %v327, 4294901760
        %v3745 = vsub.f32 %v327, %v3744
        %3746 = vmatpush1.msra.mxu0 %v3745
        %v3747 = vand.u32 %v332, 4294901760
        %v3748 = vsub.f32 %v332, %v3747
        %3749 = vmatprep.subr.mxu0 %v3748
        %v3750 = vand.u32 %v331, 4294901760
        %v3751 = vsub.f32 %v331, %v3750
        %3752 = vmatpush1.msra.mxu0 %v3751
        %v3753 = vand.u32 %v336, 4294901760
        %v3754 = vsub.f32 %v336, %v3753
        %3755 = vmatprep.subr.mxu0 %v3754
        %v3756 = vand.u32 %v335, 4294901760
        %v3757 = vsub.f32 %v335, %v3756
        %3758 = vmatpush1.msra.mxu0 %v3757
        %v3759 = vand.u32 %v340, 4294901760
        %v3760 = vsub.f32 %v340, %v3759
        %3761 = vmatprep.subr.mxu0 %v3760
        %v3762 = vand.u32 %v339, 4294901760
        %v3763 = vsub.f32 %v339, %v3762
        %3764 = vmatpush1.msra.mxu0 %v3763
        %v3765 = vand.u32 %v344, 4294901760
        %v3766 = vsub.f32 %v344, %v3765
        %3767 = vmatprep.subr.mxu0 %v3766
        %v3768 = vand.u32 %v343, 4294901760
        %v3769 = vsub.f32 %v343, %v3768
        %3770 = vmatpush1.msra.mxu0 %v3769
        %v3771 = vand.u32 %v214, 4294901760
        %v3772 = vsub.f32 %v214, %v3771
        %3773 = vmatprep.mubr.f32.mxu0 %v3772
        %v3774 = vand.u32 %v213, 4294901760
        %v3775 = vsub.f32 %v213, %v3774
        %3776 = vmatmul.mubr.f32.gmra.mrb[0].mxu0 %v3775
        %v3777 = vpop.f32.mrb[0].mxu0
        %v3778 = vadd.f32 %v3575, %v3777
        %v3779 = vpop.f32.mrb[0].mxu0
        %v3780 = vadd.f32 %v3577, %v3779
        %3781 = vdwg.mxu0
        %v3782 = vand.u32 %v220, 4294901760
        %3783 = vmatprep.subr.mxu0 %v3782
        %v3784 = vand.u32 %v219, 4294901760
        %3785 = vmatpush1.msra.mxu0 %v3784
        %v3786 = vand.u32 %v224, 4294901760
        %3787 = vmatprep.subr.mxu0 %v3786
        %v3788 = vand.u32 %v223, 4294901760
        %3789 = vmatpush1.msra.mxu0 %v3788
        %v3790 = vand.u32 %v228, 4294901760
        %3791 = vmatprep.subr.mxu0 %v3790
        %v3792 = vand.u32 %v227, 4294901760
        %3793 = vmatpush1.msra.mxu0 %v3792
        %v3794 = vand.u32 %v232, 4294901760
        %3795 = vmatprep.subr.mxu0 %v3794
        %v3796 = vand.u32 %v231, 4294901760
        %3797 = vmatpush1.msra.mxu0 %v3796
        %v3798 = vand.u32 %v236, 4294901760
        %3799 = vmatprep.subr.mxu0 %v3798
        %v3800 = vand.u32 %v235, 4294901760
        %3801 = vmatpush1.msra.mxu0 %v3800
        %v3802 = vand.u32 %v240, 4294901760
        %3803 = vmatprep.subr.mxu0 %v3802
        %v3804 = vand.u32 %v239, 4294901760
        %3805 = vmatpush1.msra.mxu0 %v3804
        %v3806 = vand.u32 %v244, 4294901760
        %3807 = vmatprep.subr.mxu0 %v3806
        %v3808 = vand.u32 %v243, 4294901760
        %3809 = vmatpush1.msra.mxu0 %v3808
        %v3810 = vand.u32 %v248, 4294901760
        %3811 = vmatprep.subr.mxu0 %v3810
        %v3812 = vand.u32 %v247, 4294901760
        %3813 = vmatpush1.msra.mxu0 %v3812
        %v3814 = vand.u32 %v252, 4294901760
        %3815 = vmatprep.subr.mxu0 %v3814
        %v3816 = vand.u32 %v251, 4294901760
        %3817 = vmatpush1.msra.mxu0 %v3816
        %v3818 = vand.u32 %v256, 4294901760
        %3819 = vmatprep.subr.mxu0 %v3818
        %v3820 = vand.u32 %v255, 4294901760
        %3821 = vmatpush1.msra.mxu0 %v3820
        %v3822 = vand.u32 %v260, 4294901760
        %3823 = vmatprep.subr.mxu0 %v3822
        %v3824 = vand.u32 %v259, 4294901760
        %3825 = vmatpush1.msra.mxu0 %v3824
        %v3826 = vand.u32 %v264, 4294901760
        %3827 = vmatprep.subr.mxu0 %v3826
        %v3828 = vand.u32 %v263, 4294901760
        %3829 = vmatpush1.msra.mxu0 %v3828
        %v3830 = vand.u32 %v268, 4294901760
        %3831 = vmatprep.subr.mxu0 %v3830
        %v3832 = vand.u32 %v267, 4294901760
        %3833 = vmatpush1.msra.mxu0 %v3832
        %v3834 = vand.u32 %v272, 4294901760
        %3835 = vmatprep.subr.mxu0 %v3834
        %v3836 = vand.u32 %v271, 4294901760
        %3837 = vmatpush1.msra.mxu0 %v3836
        %v3838 = vand.u32 %v276, 4294901760
        %3839 = vmatprep.subr.mxu0 %v3838
        %v3840 = vand.u32 %v275, 4294901760
        %3841 = vmatpush1.msra.mxu0 %v3840
        %v3842 = vand.u32 %v280, 4294901760
        %3843 = vmatprep.subr.mxu0 %v3842
        %v3844 = vand.u32 %v279, 4294901760
        %3845 = vmatpush1.msra.mxu0 %v3844
        %v3846 = vand.u32 %v284, 4294901760
        %3847 = vmatprep.subr.mxu0 %v3846
        %v3848 = vand.u32 %v283, 4294901760
        %3849 = vmatpush1.msra.mxu0 %v3848
        %v3850 = vand.u32 %v288, 4294901760
        %3851 = vmatprep.subr.mxu0 %v3850
        %v3852 = vand.u32 %v287, 4294901760
        %3853 = vmatpush1.msra.mxu0 %v3852
        %v3854 = vand.u32 %v292, 4294901760
        %3855 = vmatprep.subr.mxu0 %v3854
        %v3856 = vand.u32 %v291, 4294901760
        %3857 = vmatpush1.msra.mxu0 %v3856
        %v3858 = vand.u32 %v296, 4294901760
        %3859 = vmatprep.subr.mxu0 %v3858
        %v3860 = vand.u32 %v295, 4294901760
        %3861 = vmatpush1.msra.mxu0 %v3860
        %v3862 = vand.u32 %v300, 4294901760
        %3863 = vmatprep.subr.mxu0 %v3862
        %v3864 = vand.u32 %v299, 4294901760
        %3865 = vmatpush1.msra.mxu0 %v3864
        %v3866 = vand.u32 %v304, 4294901760
        %3867 = vmatprep.subr.mxu0 %v3866
        %v3868 = vand.u32 %v303, 4294901760
        %3869 = vmatpush1.msra.mxu0 %v3868
        %v3870 = vand.u32 %v308, 4294901760
        %3871 = vmatprep.subr.mxu0 %v3870
        %v3872 = vand.u32 %v307, 4294901760
        %3873 = vmatpush1.msra.mxu0 %v3872
        %v3874 = vand.u32 %v312, 4294901760
        %3875 = vmatprep.subr.mxu0 %v3874
        %v3876 = vand.u32 %v311, 4294901760
        %3877 = vmatpush1.msra.mxu0 %v3876
        %v3878 = vand.u32 %v316, 4294901760
        %3879 = vmatprep.subr.mxu0 %v3878
        %v3880 = vand.u32 %v315, 4294901760
        %3881 = vmatpush1.msra.mxu0 %v3880
        %v3882 = vand.u32 %v320, 4294901760
        %3883 = vmatprep.subr.mxu0 %v3882
        %v3884 = vand.u32 %v319, 4294901760
        %3885 = vmatpush1.msra.mxu0 %v3884
        %v3886 = vand.u32 %v324, 4294901760
        %3887 = vmatprep.subr.mxu0 %v3886
        %v3888 = vand.u32 %v323, 4294901760
        %3889 = vmatpush1.msra.mxu0 %v3888
        %v3890 = vand.u32 %v328, 4294901760
        %3891 = vmatprep.subr.mxu0 %v3890
        %v3892 = vand.u32 %v327, 4294901760
        %3893 = vmatpush1.msra.mxu0 %v3892
        %v3894 = vand.u32 %v332, 4294901760
        %3895 = vmatprep.subr.mxu0 %v3894
        %v3896 = vand.u32 %v331, 4294901760
        %3897 = vmatpush1.msra.mxu0 %v3896
        %v3898 = vand.u32 %v336, 4294901760
        %3899 = vmatprep.subr.mxu0 %v3898
        %v3900 = vand.u32 %v335, 4294901760
        %3901 = vmatpush1.msra.mxu0 %v3900
        %v3902 = vand.u32 %v340, 4294901760
        %3903 = vmatprep.subr.mxu0 %v3902
        %v3904 = vand.u32 %v339, 4294901760
        %3905 = vmatpush1.msra.mxu0 %v3904
        %v3906 = vand.u32 %v344, 4294901760
        %3907 = vmatprep.subr.mxu0 %v3906
        %v3908 = vand.u32 %v343, 4294901760
        %3909 = vmatpush1.msra.mxu0 %v3908
        %v3910 = vand.u32 %v214, 4294901760
        %v3911 = vsub.f32 %v214, %v3910
        %v3912 = vand.u32 %v3911, 4294901760
        %3913 = vmatprep.mubr.f32.mxu0 %v3912
        %v3914 = vand.u32 %v213, 4294901760
        %v3915 = vsub.f32 %v213, %v3914
        %v3916 = vand.u32 %v3915, 4294901760
        %3917 = vmatmul.mubr.f32.gmra.mrb[0].mxu0 %v3916
        %v3918 = vpop.f32.mrb[0].mxu0
        %v3919 = vadd.f32 %v3778, %v3918
        %v3920 = vpop.f32.mrb[0].mxu0
        %v3921 = vadd.f32 %v3780, %v3920
        %3922 = vdwg.mxu0
        %v3923 = vand.u32 %v220, 4294901760
        %v3924 = vsub.f32 %v220, %v3923
        %v3925 = vand.u32 %v3924, 4294901760
        %3926 = vmatprep.subr.mxu0 %v3925
        %v3927 = vand.u32 %v219, 4294901760
        %v3928 = vsub.f32 %v219, %v3927
        %v3929 = vand.u32 %v3928, 4294901760
        %3930 = vmatpush1.msra.mxu0 %v3929
        %v3931 = vand.u32 %v224, 4294901760
        %v3932 = vsub.f32 %v224, %v3931
        %v3933 = vand.u32 %v3932, 4294901760
        %3934 = vmatprep.subr.mxu0 %v3933
        %v3935 = vand.u32 %v223, 4294901760
        %v3936 = vsub.f32 %v223, %v3935
        %v3937 = vand.u32 %v3936, 4294901760
        %3938 = vmatpush1.msra.mxu0 %v3937
        %v3939 = vand.u32 %v228, 4294901760
        %v3940 = vsub.f32 %v228, %v3939
        %v3941 = vand.u32 %v3940, 4294901760
        %3942 = vmatprep.subr.mxu0 %v3941
        %v3943 = vand.u32 %v227, 4294901760
        %v3944 = vsub.f32 %v227, %v3943
        %v3945 = vand.u32 %v3944, 4294901760
        %3946 = vmatpush1.msra.mxu0 %v3945
        %v3947 = vand.u32 %v232, 4294901760
        %v3948 = vsub.f32 %v232, %v3947
        %v3949 = vand.u32 %v3948, 4294901760
        %3950 = vmatprep.subr.mxu0 %v3949
        %v3951 = vand.u32 %v231, 4294901760
        %v3952 = vsub.f32 %v231, %v3951
        %v3953 = vand.u32 %v3952, 4294901760
        %3954 = vmatpush1.msra.mxu0 %v3953
        %v3955 = vand.u32 %v236, 4294901760
        %v3956 = vsub.f32 %v236, %v3955
        %v3957 = vand.u32 %v3956, 4294901760
        %3958 = vmatprep.subr.mxu0 %v3957
        %v3959 = vand.u32 %v235, 4294901760
        %v3960 = vsub.f32 %v235, %v3959
        %v3961 = vand.u32 %v3960, 4294901760
        %3962 = vmatpush1.msra.mxu0 %v3961
        %v3963 = vand.u32 %v240, 4294901760
        %v3964 = vsub.f32 %v240, %v3963
        %v3965 = vand.u32 %v3964, 4294901760
        %3966 = vmatprep.subr.mxu0 %v3965
        %v3967 = vand.u32 %v239, 4294901760
        %v3968 = vsub.f32 %v239, %v3967
        %v3969 = vand.u32 %v3968, 4294901760
        %3970 = vmatpush1.msra.mxu0 %v3969
        %v3971 = vand.u32 %v244, 4294901760
        %v3972 = vsub.f32 %v244, %v3971
        %v3973 = vand.u32 %v3972, 4294901760
        %3974 = vmatprep.subr.mxu0 %v3973
        %v3975 = vand.u32 %v243, 4294901760
        %v3976 = vsub.f32 %v243, %v3975
        %v3977 = vand.u32 %v3976, 4294901760
        %3978 = vmatpush1.msra.mxu0 %v3977
        %v3979 = vand.u32 %v248, 4294901760
        %v3980 = vsub.f32 %v248, %v3979
        %v3981 = vand.u32 %v3980, 4294901760
        %3982 = vmatprep.subr.mxu0 %v3981
        %v3983 = vand.u32 %v247, 4294901760
        %v3984 = vsub.f32 %v247, %v3983
        %v3985 = vand.u32 %v3984, 4294901760
        %3986 = vmatpush1.msra.mxu0 %v3985
        %v3987 = vand.u32 %v252, 4294901760
        %v3988 = vsub.f32 %v252, %v3987
        %v3989 = vand.u32 %v3988, 4294901760
        %3990 = vmatprep.subr.mxu0 %v3989
        %v3991 = vand.u32 %v251, 4294901760
        %v3992 = vsub.f32 %v251, %v3991
        %v3993 = vand.u32 %v3992, 4294901760
        %3994 = vmatpush1.msra.mxu0 %v3993
        %v3995 = vand.u32 %v256, 4294901760
        %v3996 = vsub.f32 %v256, %v3995
        %v3997 = vand.u32 %v3996, 4294901760
        %3998 = vmatprep.subr.mxu0 %v3997
        %v3999 = vand.u32 %v255, 4294901760
        %v4000 = vsub.f32 %v255, %v3999
        %v4001 = vand.u32 %v4000, 4294901760
        %4002 = vmatpush1.msra.mxu0 %v4001
        %v4003 = vand.u32 %v260, 4294901760
        %v4004 = vsub.f32 %v260, %v4003
        %v4005 = vand.u32 %v4004, 4294901760
        %4006 = vmatprep.subr.mxu0 %v4005
        %v4007 = vand.u32 %v259, 4294901760
        %v4008 = vsub.f32 %v259, %v4007
        %v4009 = vand.u32 %v4008, 4294901760
        %4010 = vmatpush1.msra.mxu0 %v4009
        %v4011 = vand.u32 %v264, 4294901760
        %v4012 = vsub.f32 %v264, %v4011
        %v4013 = vand.u32 %v4012, 4294901760
        %4014 = vmatprep.subr.mxu0 %v4013
        %v4015 = vand.u32 %v263, 4294901760
        %v4016 = vsub.f32 %v263, %v4015
        %v4017 = vand.u32 %v4016, 4294901760
        %4018 = vmatpush1.msra.mxu0 %v4017
        %v4019 = vand.u32 %v268, 4294901760
        %v4020 = vsub.f32 %v268, %v4019
        %v4021 = vand.u32 %v4020, 4294901760
        %4022 = vmatprep.subr.mxu0 %v4021
        %v4023 = vand.u32 %v267, 4294901760
        %v4024 = vsub.f32 %v267, %v4023
        %v4025 = vand.u32 %v4024, 4294901760
        %4026 = vmatpush1.msra.mxu0 %v4025
        %v4027 = vand.u32 %v272, 4294901760
        %v4028 = vsub.f32 %v272, %v4027
        %v4029 = vand.u32 %v4028, 4294901760
        %4030 = vmatprep.subr.mxu0 %v4029
        %v4031 = vand.u32 %v271, 4294901760
        %v4032 = vsub.f32 %v271, %v4031
        %v4033 = vand.u32 %v4032, 4294901760
        %4034 = vmatpush1.msra.mxu0 %v4033
        %v4035 = vand.u32 %v276, 4294901760
        %v4036 = vsub.f32 %v276, %v4035
        %v4037 = vand.u32 %v4036, 4294901760
        %4038 = vmatprep.subr.mxu0 %v4037
        %v4039 = vand.u32 %v275, 4294901760
        %v4040 = vsub.f32 %v275, %v4039
        %v4041 = vand.u32 %v4040, 4294901760
        %4042 = vmatpush1.msra.mxu0 %v4041
        %v4043 = vand.u32 %v280, 4294901760
        %v4044 = vsub.f32 %v280, %v4043
        %v4045 = vand.u32 %v4044, 4294901760
        %4046 = vmatprep.subr.mxu0 %v4045
        %v4047 = vand.u32 %v279, 4294901760
        %v4048 = vsub.f32 %v279, %v4047
        %v4049 = vand.u32 %v4048, 4294901760
        %4050 = vmatpush1.msra.mxu0 %v4049
        %v4051 = vand.u32 %v284, 4294901760
        %v4052 = vsub.f32 %v284, %v4051
        %v4053 = vand.u32 %v4052, 4294901760
        %4054 = vmatprep.subr.mxu0 %v4053
        %v4055 = vand.u32 %v283, 4294901760
        %v4056 = vsub.f32 %v283, %v4055
        %v4057 = vand.u32 %v4056, 4294901760
        %4058 = vmatpush1.msra.mxu0 %v4057
        %v4059 = vand.u32 %v288, 4294901760
        %v4060 = vsub.f32 %v288, %v4059
        %v4061 = vand.u32 %v4060, 4294901760
        %4062 = vmatprep.subr.mxu0 %v4061
        %v4063 = vand.u32 %v287, 4294901760
        %v4064 = vsub.f32 %v287, %v4063
        %v4065 = vand.u32 %v4064, 4294901760
        %4066 = vmatpush1.msra.mxu0 %v4065
        %v4067 = vand.u32 %v292, 4294901760
        %v4068 = vsub.f32 %v292, %v4067
        %v4069 = vand.u32 %v4068, 4294901760
        %4070 = vmatprep.subr.mxu0 %v4069
        %v4071 = vand.u32 %v291, 4294901760
        %v4072 = vsub.f32 %v291, %v4071
        %v4073 = vand.u32 %v4072, 4294901760
        %4074 = vmatpush1.msra.mxu0 %v4073
        %v4075 = vand.u32 %v296, 4294901760
        %v4076 = vsub.f32 %v296, %v4075
        %v4077 = vand.u32 %v4076, 4294901760
        %4078 = vmatprep.subr.mxu0 %v4077
        %v4079 = vand.u32 %v295, 4294901760
        %v4080 = vsub.f32 %v295, %v4079
        %v4081 = vand.u32 %v4080, 4294901760
        %4082 = vmatpush1.msra.mxu0 %v4081
        %v4083 = vand.u32 %v300, 4294901760
        %v4084 = vsub.f32 %v300, %v4083
        %v4085 = vand.u32 %v4084, 4294901760
        %4086 = vmatprep.subr.mxu0 %v4085
        %v4087 = vand.u32 %v299, 4294901760
        %v4088 = vsub.f32 %v299, %v4087
        %v4089 = vand.u32 %v4088, 4294901760
        %4090 = vmatpush1.msra.mxu0 %v4089
        %v4091 = vand.u32 %v304, 4294901760
        %v4092 = vsub.f32 %v304, %v4091
        %v4093 = vand.u32 %v4092, 4294901760
        %4094 = vmatprep.subr.mxu0 %v4093
        %v4095 = vand.u32 %v303, 4294901760
        %v4096 = vsub.f32 %v303, %v4095
        %v4097 = vand.u32 %v4096, 4294901760
        %4098 = vmatpush1.msra.mxu0 %v4097
        %v4099 = vand.u32 %v308, 4294901760
        %v4100 = vsub.f32 %v308, %v4099
        %v4101 = vand.u32 %v4100, 4294901760
        %4102 = vmatprep.subr.mxu0 %v4101
        %v4103 = vand.u32 %v307, 4294901760
        %v4104 = vsub.f32 %v307, %v4103
        %v4105 = vand.u32 %v4104, 4294901760
        %4106 = vmatpush1.msra.mxu0 %v4105
        %v4107 = vand.u32 %v312, 4294901760
        %v4108 = vsub.f32 %v312, %v4107
        %v4109 = vand.u32 %v4108, 4294901760
        %4110 = vmatprep.subr.mxu0 %v4109
        %v4111 = vand.u32 %v311, 4294901760
        %v4112 = vsub.f32 %v311, %v4111
        %v4113 = vand.u32 %v4112, 4294901760
        %4114 = vmatpush1.msra.mxu0 %v4113
        %v4115 = vand.u32 %v316, 4294901760
        %v4116 = vsub.f32 %v316, %v4115
        %v4117 = vand.u32 %v4116, 4294901760
        %4118 = vmatprep.subr.mxu0 %v4117
        %v4119 = vand.u32 %v315, 4294901760
        %v4120 = vsub.f32 %v315, %v4119
        %v4121 = vand.u32 %v4120, 4294901760
        %4122 = vmatpush1.msra.mxu0 %v4121
        %v4123 = vand.u32 %v320, 4294901760
        %v4124 = vsub.f32 %v320, %v4123
        %v4125 = vand.u32 %v4124, 4294901760
        %4126 = vmatprep.subr.mxu0 %v4125
        %v4127 = vand.u32 %v319, 4294901760
        %v4128 = vsub.f32 %v319, %v4127
        %v4129 = vand.u32 %v4128, 4294901760
        %4130 = vmatpush1.msra.mxu0 %v4129
        %v4131 = vand.u32 %v324, 4294901760
        %v4132 = vsub.f32 %v324, %v4131
        %v4133 = vand.u32 %v4132, 4294901760
        %4134 = vmatprep.subr.mxu0 %v4133
        %v4135 = vand.u32 %v323, 4294901760
        %v4136 = vsub.f32 %v323, %v4135
        %v4137 = vand.u32 %v4136, 4294901760
        %4138 = vmatpush1.msra.mxu0 %v4137
        %v4139 = vand.u32 %v328, 4294901760
        %v4140 = vsub.f32 %v328, %v4139
        %v4141 = vand.u32 %v4140, 4294901760
        %4142 = vmatprep.subr.mxu0 %v4141
        %v4143 = vand.u32 %v327, 4294901760
        %v4144 = vsub.f32 %v327, %v4143
        %v4145 = vand.u32 %v4144, 4294901760
        %4146 = vmatpush1.msra.mxu0 %v4145
        %v4147 = vand.u32 %v332, 4294901760
        %v4148 = vsub.f32 %v332, %v4147
        %v4149 = vand.u32 %v4148, 4294901760
        %4150 = vmatprep.subr.mxu0 %v4149
        %v4151 = vand.u32 %v331, 4294901760
        %v4152 = vsub.f32 %v331, %v4151
        %v4153 = vand.u32 %v4152, 4294901760
        %4154 = vmatpush1.msra.mxu0 %v4153
        %v4155 = vand.u32 %v336, 4294901760
        %v4156 = vsub.f32 %v336, %v4155
        %v4157 = vand.u32 %v4156, 4294901760
        %4158 = vmatprep.subr.mxu0 %v4157
        %v4159 = vand.u32 %v335, 4294901760
        %v4160 = vsub.f32 %v335, %v4159
        %v4161 = vand.u32 %v4160, 4294901760
        %4162 = vmatpush1.msra.mxu0 %v4161
        %v4163 = vand.u32 %v340, 4294901760
        %v4164 = vsub.f32 %v340, %v4163
        %v4165 = vand.u32 %v4164, 4294901760
        %4166 = vmatprep.subr.mxu0 %v4165
        %v4167 = vand.u32 %v339, 4294901760
        %v4168 = vsub.f32 %v339, %v4167
        %v4169 = vand.u32 %v4168, 4294901760
        %4170 = vmatpush1.msra.mxu0 %v4169
        %v4171 = vand.u32 %v344, 4294901760
        %v4172 = vsub.f32 %v344, %v4171
        %v4173 = vand.u32 %v4172, 4294901760
        %4174 = vmatprep.subr.mxu0 %v4173
        %v4175 = vand.u32 %v343, 4294901760
        %v4176 = vsub.f32 %v343, %v4175
        %v4177 = vand.u32 %v4176, 4294901760
        %4178 = vmatpush1.msra.mxu0 %v4177
        %v4179 = vand.u32 %v214, 4294901760
        %4180 = vmatprep.mubr.f32.mxu0 %v4179
        %v4181 = vand.u32 %v213, 4294901760
        %4182 = vmatmul.mubr.f32.gmra.mrb[0].mxu0 %v4181
        %v4183 = vpop.f32.mrb[0].mxu0
        %v4184 = vadd.f32 %v3919, %v4183
        %v4185 = vpop.f32.mrb[0].mxu0
        %v4186 = vadd.f32 %v3921, %v4185
        %4187 = vdwg.mxu0
        %v4188 = vand.u32 %v220, 4294901760
        %4189 = vmatprep.subr.mxu0 %v4188
        %v4190 = vand.u32 %v219, 4294901760
        %4191 = vmatpush1.msra.mxu0 %v4190
        %v4192 = vand.u32 %v224, 4294901760
        %4193 = vmatprep.subr.mxu0 %v4192
        %v4194 = vand.u32 %v223, 4294901760
        %4195 = vmatpush1.msra.mxu0 %v4194
        %v4196 = vand.u32 %v228, 4294901760
        %4197 = vmatprep.subr.mxu0 %v4196
        %v4198 = vand.u32 %v227, 4294901760
        %4199 = vmatpush1.msra.mxu0 %v4198
        %v4200 = vand.u32 %v232, 4294901760
        %4201 = vmatprep.subr.mxu0 %v4200
        %v4202 = vand.u32 %v231, 4294901760
        %4203 = vmatpush1.msra.mxu0 %v4202
        %v4204 = vand.u32 %v236, 4294901760
        %4205 = vmatprep.subr.mxu0 %v4204
        %v4206 = vand.u32 %v235, 4294901760
        %4207 = vmatpush1.msra.mxu0 %v4206
        %v4208 = vand.u32 %v240, 4294901760
        %4209 = vmatprep.subr.mxu0 %v4208
        %v4210 = vand.u32 %v239, 4294901760
        %4211 = vmatpush1.msra.mxu0 %v4210
        %v4212 = vand.u32 %v244, 4294901760
        %4213 = vmatprep.subr.mxu0 %v4212
        %v4214 = vand.u32 %v243, 4294901760
        %4215 = vmatpush1.msra.mxu0 %v4214
        %v4216 = vand.u32 %v248, 4294901760
        %4217 = vmatprep.subr.mxu0 %v4216
        %v4218 = vand.u32 %v247, 4294901760
        %4219 = vmatpush1.msra.mxu0 %v4218
        %v4220 = vand.u32 %v252, 4294901760
        %4221 = vmatprep.subr.mxu0 %v4220
        %v4222 = vand.u32 %v251, 4294901760
        %4223 = vmatpush1.msra.mxu0 %v4222
        %v4224 = vand.u32 %v256, 4294901760
        %4225 = vmatprep.subr.mxu0 %v4224
        %v4226 = vand.u32 %v255, 4294901760
        %4227 = vmatpush1.msra.mxu0 %v4226
        %v4228 = vand.u32 %v260, 4294901760
        %4229 = vmatprep.subr.mxu0 %v4228
        %v4230 = vand.u32 %v259, 4294901760
        %4231 = vmatpush1.msra.mxu0 %v4230
        %v4232 = vand.u32 %v264, 4294901760
        %4233 = vmatprep.subr.mxu0 %v4232
        %v4234 = vand.u32 %v263, 4294901760
        %4235 = vmatpush1.msra.mxu0 %v4234
        %v4236 = vand.u32 %v268, 4294901760
        %4237 = vmatprep.subr.mxu0 %v4236
        %v4238 = vand.u32 %v267, 4294901760
        %4239 = vmatpush1.msra.mxu0 %v4238
        %v4240 = vand.u32 %v272, 4294901760
        %4241 = vmatprep.subr.mxu0 %v4240
        %v4242 = vand.u32 %v271, 4294901760
        %4243 = vmatpush1.msra.mxu0 %v4242
        %v4244 = vand.u32 %v276, 4294901760
        %4245 = vmatprep.subr.mxu0 %v4244
        %v4246 = vand.u32 %v275, 4294901760
        %4247 = vmatpush1.msra.mxu0 %v4246
        %v4248 = vand.u32 %v280, 4294901760
        %4249 = vmatprep.subr.mxu0 %v4248
        %v4250 = vand.u32 %v279, 4294901760
        %4251 = vmatpush1.msra.mxu0 %v4250
        %v4252 = vand.u32 %v284, 4294901760
        %4253 = vmatprep.subr.mxu0 %v4252
        %v4254 = vand.u32 %v283, 4294901760
        %4255 = vmatpush1.msra.mxu0 %v4254
        %v4256 = vand.u32 %v288, 4294901760
        %4257 = vmatprep.subr.mxu0 %v4256
        %v4258 = vand.u32 %v287, 4294901760
        %4259 = vmatpush1.msra.mxu0 %v4258
        %v4260 = vand.u32 %v292, 4294901760
        %4261 = vmatprep.subr.mxu0 %v4260
        %v4262 = vand.u32 %v291, 4294901760
        %4263 = vmatpush1.msra.mxu0 %v4262
        %v4264 = vand.u32 %v296, 4294901760
        %4265 = vmatprep.subr.mxu0 %v4264
        %v4266 = vand.u32 %v295, 4294901760
        %4267 = vmatpush1.msra.mxu0 %v4266
        %v4268 = vand.u32 %v300, 4294901760
        %4269 = vmatprep.subr.mxu0 %v4268
        %v4270 = vand.u32 %v299, 4294901760
        %4271 = vmatpush1.msra.mxu0 %v4270
        %v4272 = vand.u32 %v304, 4294901760
        %4273 = vmatprep.subr.mxu0 %v4272
        %v4274 = vand.u32 %v303, 4294901760
        %4275 = vmatpush1.msra.mxu0 %v4274
        %v4276 = vand.u32 %v308, 4294901760
        %4277 = vmatprep.subr.mxu0 %v4276
        %v4278 = vand.u32 %v307, 4294901760
        %4279 = vmatpush1.msra.mxu0 %v4278
        %v4280 = vand.u32 %v312, 4294901760
        %4281 = vmatprep.subr.mxu0 %v4280
        %v4282 = vand.u32 %v311, 4294901760
        %4283 = vmatpush1.msra.mxu0 %v4282
        %v4284 = vand.u32 %v316, 4294901760
        %4285 = vmatprep.subr.mxu0 %v4284
        %v4286 = vand.u32 %v315, 4294901760
        %4287 = vmatpush1.msra.mxu0 %v4286
        %v4288 = vand.u32 %v320, 4294901760
        %4289 = vmatprep.subr.mxu0 %v4288
        %v4290 = vand.u32 %v319, 4294901760
        %4291 = vmatpush1.msra.mxu0 %v4290
        %v4292 = vand.u32 %v324, 4294901760
        %4293 = vmatprep.subr.mxu0 %v4292
        %v4294 = vand.u32 %v323, 4294901760
        %4295 = vmatpush1.msra.mxu0 %v4294
        %v4296 = vand.u32 %v328, 4294901760
        %4297 = vmatprep.subr.mxu0 %v4296
        %v4298 = vand.u32 %v327, 4294901760
        %4299 = vmatpush1.msra.mxu0 %v4298
        %v4300 = vand.u32 %v332, 4294901760
        %4301 = vmatprep.subr.mxu0 %v4300
        %v4302 = vand.u32 %v331, 4294901760
        %4303 = vmatpush1.msra.mxu0 %v4302
        %v4304 = vand.u32 %v336, 4294901760
        %4305 = vmatprep.subr.mxu0 %v4304
        %v4306 = vand.u32 %v335, 4294901760
        %4307 = vmatpush1.msra.mxu0 %v4306
        %v4308 = vand.u32 %v340, 4294901760
        %4309 = vmatprep.subr.mxu0 %v4308
        %v4310 = vand.u32 %v339, 4294901760
        %4311 = vmatpush1.msra.mxu0 %v4310
        %v4312 = vand.u32 %v344, 4294901760
        %4313 = vmatprep.subr.mxu0 %v4312
        %v4314 = vand.u32 %v343, 4294901760
        %4315 = vmatpush1.msra.mxu0 %v4314
        %v4316 = vand.u32 %v214, 4294901760
        %4317 = vmatprep.mubr.f32.mxu0 %v4316
        %v4318 = vand.u32 %v213, 4294901760
        %4319 = vmatmul.mubr.f32.gmra.mrb[0].mxu0 %v4318
        %v4320 = vpop.f32.mrb[0].mxu0
        %v4321 = vadd.f32 %v4184, %v4320
        %v4322 = vpop.f32.mrb[0].mxu0
        %v4323 = vadd.f32 %v4186, %v4322
        %4324 = vdwg.mxu0
        %v4325 = vand.u32 %v348, 4294901760
        %4326 = vmatprep.subr.mxu0 %v4325
        %v4327 = vand.u32 %v347, 4294901760
        %4328 = vmatpush1.msra.mxu0 %v4327
        %v4329 = vand.u32 %v352, 4294901760
        %4330 = vmatprep.subr.mxu0 %v4329
        %v4331 = vand.u32 %v351, 4294901760
        %4332 = vmatpush1.msra.mxu0 %v4331
        %v4333 = vand.u32 %v356, 4294901760
        %4334 = vmatprep.subr.mxu0 %v4333
        %v4335 = vand.u32 %v355, 4294901760
        %4336 = vmatpush1.msra.mxu0 %v4335
        %v4337 = vand.u32 %v360, 4294901760
        %4338 = vmatprep.subr.mxu0 %v4337
        %v4339 = vand.u32 %v359, 4294901760
        %4340 = vmatpush1.msra.mxu0 %v4339
        %v4341 = vand.u32 %v364, 4294901760
        %4342 = vmatprep.subr.mxu0 %v4341
        %v4343 = vand.u32 %v363, 4294901760
        %4344 = vmatpush1.msra.mxu0 %v4343
        %v4345 = vand.u32 %v368, 4294901760
        %4346 = vmatprep.subr.mxu0 %v4345
        %v4347 = vand.u32 %v367, 4294901760
        %4348 = vmatpush1.msra.mxu0 %v4347
        %v4349 = vand.u32 %v372, 4294901760
        %4350 = vmatprep.subr.mxu0 %v4349
        %v4351 = vand.u32 %v371, 4294901760
        %4352 = vmatpush1.msra.mxu0 %v4351
        %v4353 = vand.u32 %v376, 4294901760
        %4354 = vmatprep.subr.mxu0 %v4353
        %v4355 = vand.u32 %v375, 4294901760
        %4356 = vmatpush1.msra.mxu0 %v4355
        %v4357 = vand.u32 %v380, 4294901760
        %4358 = vmatprep.subr.mxu0 %v4357
        %v4359 = vand.u32 %v379, 4294901760
        %4360 = vmatpush1.msra.mxu0 %v4359
        %v4361 = vand.u32 %v384, 4294901760
        %4362 = vmatprep.subr.mxu0 %v4361
        %v4363 = vand.u32 %v383, 4294901760
        %4364 = vmatpush1.msra.mxu0 %v4363
        %v4365 = vand.u32 %v388, 4294901760
        %4366 = vmatprep.subr.mxu0 %v4365
        %v4367 = vand.u32 %v387, 4294901760
        %4368 = vmatpush1.msra.mxu0 %v4367
        %v4369 = vand.u32 %v392, 4294901760
        %4370 = vmatprep.subr.mxu0 %v4369
        %v4371 = vand.u32 %v391, 4294901760
        %4372 = vmatpush1.msra.mxu0 %v4371
        %v4373 = vand.u32 %v396, 4294901760
        %4374 = vmatprep.subr.mxu0 %v4373
        %v4375 = vand.u32 %v395, 4294901760
        %4376 = vmatpush1.msra.mxu0 %v4375
        %v4377 = vand.u32 %v400, 4294901760
        %4378 = vmatprep.subr.mxu0 %v4377
        %v4379 = vand.u32 %v399, 4294901760
        %4380 = vmatpush1.msra.mxu0 %v4379
        %v4381 = vand.u32 %v404, 4294901760
        %4382 = vmatprep.subr.mxu0 %v4381
        %v4383 = vand.u32 %v403, 4294901760
        %4384 = vmatpush1.msra.mxu0 %v4383
        %v4385 = vand.u32 %v408, 4294901760
        %4386 = vmatprep.subr.mxu0 %v4385
        %v4387 = vand.u32 %v407, 4294901760
        %4388 = vmatpush1.msra.mxu0 %v4387
        %v4389 = vand.u32 %v412, 4294901760
        %4390 = vmatprep.subr.mxu0 %v4389
        %v4391 = vand.u32 %v411, 4294901760
        %4392 = vmatpush1.msra.mxu0 %v4391
        %v4393 = vand.u32 %v416, 4294901760
        %4394 = vmatprep.subr.mxu0 %v4393
        %v4395 = vand.u32 %v415, 4294901760
        %4396 = vmatpush1.msra.mxu0 %v4395
        %v4397 = vand.u32 %v420, 4294901760
        %4398 = vmatprep.subr.mxu0 %v4397
        %v4399 = vand.u32 %v419, 4294901760
        %4400 = vmatpush1.msra.mxu0 %v4399
        %v4401 = vand.u32 %v424, 4294901760
        %4402 = vmatprep.subr.mxu0 %v4401
        %v4403 = vand.u32 %v423, 4294901760
        %4404 = vmatpush1.msra.mxu0 %v4403
        %v4405 = vand.u32 %v428, 4294901760
        %4406 = vmatprep.subr.mxu0 %v4405
        %v4407 = vand.u32 %v427, 4294901760
        %4408 = vmatpush1.msra.mxu0 %v4407
        %v4409 = vand.u32 %v432, 4294901760
        %4410 = vmatprep.subr.mxu0 %v4409
        %v4411 = vand.u32 %v431, 4294901760
        %4412 = vmatpush1.msra.mxu0 %v4411
        %v4413 = vand.u32 %v436, 4294901760
        %4414 = vmatprep.subr.mxu0 %v4413
        %v4415 = vand.u32 %v435, 4294901760
        %4416 = vmatpush1.msra.mxu0 %v4415
        %v4417 = vand.u32 %v440, 4294901760
        %4418 = vmatprep.subr.mxu0 %v4417
        %v4419 = vand.u32 %v439, 4294901760
        %4420 = vmatpush1.msra.mxu0 %v4419
        %v4421 = vand.u32 %v444, 4294901760
        %4422 = vmatprep.subr.mxu0 %v4421
        %v4423 = vand.u32 %v443, 4294901760
        %4424 = vmatpush1.msra.mxu0 %v4423
        %v4425 = vand.u32 %v448, 4294901760
        %4426 = vmatprep.subr.mxu0 %v4425
        %v4427 = vand.u32 %v447, 4294901760
        %4428 = vmatpush1.msra.mxu0 %v4427
        %v4429 = vand.u32 %v452, 4294901760
        %4430 = vmatprep.subr.mxu0 %v4429
        %v4431 = vand.u32 %v451, 4294901760
        %4432 = vmatpush1.msra.mxu0 %v4431
        %v4433 = vand.u32 %v456, 4294901760
        %4434 = vmatprep.subr.mxu0 %v4433
        %v4435 = vand.u32 %v455, 4294901760
        %4436 = vmatpush1.msra.mxu0 %v4435
        %v4437 = vand.u32 %v460, 4294901760
        %4438 = vmatprep.subr.mxu0 %v4437
        %v4439 = vand.u32 %v459, 4294901760
        %4440 = vmatpush1.msra.mxu0 %v4439
        %v4441 = vand.u32 %v464, 4294901760
        %4442 = vmatprep.subr.mxu0 %v4441
        %v4443 = vand.u32 %v463, 4294901760
        %4444 = vmatpush1.msra.mxu0 %v4443
        %v4445 = vand.u32 %v468, 4294901760
        %4446 = vmatprep.subr.mxu0 %v4445
        %v4447 = vand.u32 %v467, 4294901760
        %4448 = vmatpush1.msra.mxu0 %v4447
        %v4449 = vand.u32 %v472, 4294901760
        %4450 = vmatprep.subr.mxu0 %v4449
        %v4451 = vand.u32 %v471, 4294901760
        %4452 = vmatpush1.msra.mxu0 %v4451
        %v4453 = vand.u32 %v216, 4294901760
        %v4454 = vsub.f32 %v216, %v4453
        %v4455 = vand.u32 %v4454, 4294901760
        %v4456 = vsub.f32 %v4454, %v4455
        %v4457 = vand.u32 %v4456, 4294901760
        %4458 = vmatprep.mubr.f32.mxu0 %v4457
        %v4459 = vand.u32 %v215, 4294901760
        %v4460 = vsub.f32 %v215, %v4459
        %v4461 = vand.u32 %v4460, 4294901760
        %v4462 = vsub.f32 %v4460, %v4461
        %v4463 = vand.u32 %v4462, 4294901760
        %4464 = vmatmul.mubr.f32.gmra.mrb[0].mxu0 %v4463
        %v4465 = vpop.f32.mrb[0].mxu0
        %v4466 = vadd.f32 %v4321, %v4465
        %v4467 = vpop.f32.mrb[0].mxu0
        %v4468 = vadd.f32 %v4323, %v4467
        %4469 = vdwg.mxu0
        %v4470 = vand.u32 %v348, 4294901760
        %v4471 = vsub.f32 %v348, %v4470
        %v4472 = vand.u32 %v4471, 4294901760
        %v4473 = vsub.f32 %v4471, %v4472
        %v4474 = vand.u32 %v4473, 4294901760
        %4475 = vmatprep.subr.mxu0 %v4474
        %v4476 = vand.u32 %v347, 4294901760
        %v4477 = vsub.f32 %v347, %v4476
        %v4478 = vand.u32 %v4477, 4294901760
        %v4479 = vsub.f32 %v4477, %v4478
        %v4480 = vand.u32 %v4479, 4294901760
        %4481 = vmatpush1.msra.mxu0 %v4480
        %v4482 = vand.u32 %v352, 4294901760
        %v4483 = vsub.f32 %v352, %v4482
        %v4484 = vand.u32 %v4483, 4294901760
        %v4485 = vsub.f32 %v4483, %v4484
        %v4486 = vand.u32 %v4485, 4294901760
        %4487 = vmatprep.subr.mxu0 %v4486
        %v4488 = vand.u32 %v351, 4294901760
        %v4489 = vsub.f32 %v351, %v4488
        %v4490 = vand.u32 %v4489, 4294901760
        %v4491 = vsub.f32 %v4489, %v4490
        %v4492 = vand.u32 %v4491, 4294901760
        %4493 = vmatpush1.msra.mxu0 %v4492
        %v4494 = vand.u32 %v356, 4294901760
        %v4495 = vsub.f32 %v356, %v4494
        %v4496 = vand.u32 %v4495, 4294901760
        %v4497 = vsub.f32 %v4495, %v4496
        %v4498 = vand.u32 %v4497, 4294901760
        %4499 = vmatprep.subr.mxu0 %v4498
        %v4500 = vand.u32 %v355, 4294901760
        %v4501 = vsub.f32 %v355, %v4500
        %v4502 = vand.u32 %v4501, 4294901760
        %v4503 = vsub.f32 %v4501, %v4502
        %v4504 = vand.u32 %v4503, 4294901760
        %4505 = vmatpush1.msra.mxu0 %v4504
        %v4506 = vand.u32 %v360, 4294901760
        %v4507 = vsub.f32 %v360, %v4506
        %v4508 = vand.u32 %v4507, 4294901760
        %v4509 = vsub.f32 %v4507, %v4508
        %v4510 = vand.u32 %v4509, 4294901760
        %4511 = vmatprep.subr.mxu0 %v4510
        %v4512 = vand.u32 %v359, 4294901760
        %v4513 = vsub.f32 %v359, %v4512
        %v4514 = vand.u32 %v4513, 4294901760
        %v4515 = vsub.f32 %v4513, %v4514
        %v4516 = vand.u32 %v4515, 4294901760
        %4517 = vmatpush1.msra.mxu0 %v4516
        %v4518 = vand.u32 %v364, 4294901760
        %v4519 = vsub.f32 %v364, %v4518
        %v4520 = vand.u32 %v4519, 4294901760
        %v4521 = vsub.f32 %v4519, %v4520
        %v4522 = vand.u32 %v4521, 4294901760
        %4523 = vmatprep.subr.mxu0 %v4522
        %v4524 = vand.u32 %v363, 4294901760
        %v4525 = vsub.f32 %v363, %v4524
        %v4526 = vand.u32 %v4525, 4294901760
        %v4527 = vsub.f32 %v4525, %v4526
        %v4528 = vand.u32 %v4527, 4294901760
        %4529 = vmatpush1.msra.mxu0 %v4528
        %v4530 = vand.u32 %v368, 4294901760
        %v4531 = vsub.f32 %v368, %v4530
        %v4532 = vand.u32 %v4531, 4294901760
        %v4533 = vsub.f32 %v4531, %v4532
        %v4534 = vand.u32 %v4533, 4294901760
        %4535 = vmatprep.subr.mxu0 %v4534
        %v4536 = vand.u32 %v367, 4294901760
        %v4537 = vsub.f32 %v367, %v4536
        %v4538 = vand.u32 %v4537, 4294901760
        %v4539 = vsub.f32 %v4537, %v4538
        %v4540 = vand.u32 %v4539, 4294901760
        %4541 = vmatpush1.msra.mxu0 %v4540
        %v4542 = vand.u32 %v372, 4294901760
        %v4543 = vsub.f32 %v372, %v4542
        %v4544 = vand.u32 %v4543, 4294901760
        %v4545 = vsub.f32 %v4543, %v4544
        %v4546 = vand.u32 %v4545, 4294901760
        %4547 = vmatprep.subr.mxu0 %v4546
        %v4548 = vand.u32 %v371, 4294901760
        %v4549 = vsub.f32 %v371, %v4548
        %v4550 = vand.u32 %v4549, 4294901760
        %v4551 = vsub.f32 %v4549, %v4550
        %v4552 = vand.u32 %v4551, 4294901760
        %4553 = vmatpush1.msra.mxu0 %v4552
        %v4554 = vand.u32 %v376, 4294901760
        %v4555 = vsub.f32 %v376, %v4554
        %v4556 = vand.u32 %v4555, 4294901760
        %v4557 = vsub.f32 %v4555, %v4556
        %v4558 = vand.u32 %v4557, 4294901760
        %4559 = vmatprep.subr.mxu0 %v4558
        %v4560 = vand.u32 %v375, 4294901760
        %v4561 = vsub.f32 %v375, %v4560
        %v4562 = vand.u32 %v4561, 4294901760
        %v4563 = vsub.f32 %v4561, %v4562
        %v4564 = vand.u32 %v4563, 4294901760
        %4565 = vmatpush1.msra.mxu0 %v4564
        %v4566 = vand.u32 %v380, 4294901760
        %v4567 = vsub.f32 %v380, %v4566
        %v4568 = vand.u32 %v4567, 4294901760
        %v4569 = vsub.f32 %v4567, %v4568
        %v4570 = vand.u32 %v4569, 4294901760
        %4571 = vmatprep.subr.mxu0 %v4570
        %v4572 = vand.u32 %v379, 4294901760
        %v4573 = vsub.f32 %v379, %v4572
        %v4574 = vand.u32 %v4573, 4294901760
        %v4575 = vsub.f32 %v4573, %v4574
        %v4576 = vand.u32 %v4575, 4294901760
        %4577 = vmatpush1.msra.mxu0 %v4576
        %v4578 = vand.u32 %v384, 4294901760
        %v4579 = vsub.f32 %v384, %v4578
        %v4580 = vand.u32 %v4579, 4294901760
        %v4581 = vsub.f32 %v4579, %v4580
        %v4582 = vand.u32 %v4581, 4294901760
        %4583 = vmatprep.subr.mxu0 %v4582
        %v4584 = vand.u32 %v383, 4294901760
        %v4585 = vsub.f32 %v383, %v4584
        %v4586 = vand.u32 %v4585, 4294901760
        %v4587 = vsub.f32 %v4585, %v4586
        %v4588 = vand.u32 %v4587, 4294901760
        %4589 = vmatpush1.msra.mxu0 %v4588
        %v4590 = vand.u32 %v388, 4294901760
        %v4591 = vsub.f32 %v388, %v4590
        %v4592 = vand.u32 %v4591, 4294901760
        %v4593 = vsub.f32 %v4591, %v4592
        %v4594 = vand.u32 %v4593, 4294901760
        %4595 = vmatprep.subr.mxu0 %v4594
        %v4596 = vand.u32 %v387, 4294901760
        %v4597 = vsub.f32 %v387, %v4596
        %v4598 = vand.u32 %v4597, 4294901760
        %v4599 = vsub.f32 %v4597, %v4598
        %v4600 = vand.u32 %v4599, 4294901760
        %4601 = vmatpush1.msra.mxu0 %v4600
        %v4602 = vand.u32 %v392, 4294901760
        %v4603 = vsub.f32 %v392, %v4602
        %v4604 = vand.u32 %v4603, 4294901760
        %v4605 = vsub.f32 %v4603, %v4604
        %v4606 = vand.u32 %v4605, 4294901760
        %4607 = vmatprep.subr.mxu0 %v4606
        %v4608 = vand.u32 %v391, 4294901760
        %v4609 = vsub.f32 %v391, %v4608
        %v4610 = vand.u32 %v4609, 4294901760
        %v4611 = vsub.f32 %v4609, %v4610
        %v4612 = vand.u32 %v4611, 4294901760
        %4613 = vmatpush1.msra.mxu0 %v4612
        %v4614 = vand.u32 %v396, 4294901760
        %v4615 = vsub.f32 %v396, %v4614
        %v4616 = vand.u32 %v4615, 4294901760
        %v4617 = vsub.f32 %v4615, %v4616
        %v4618 = vand.u32 %v4617, 4294901760
        %4619 = vmatprep.subr.mxu0 %v4618
        %v4620 = vand.u32 %v395, 4294901760
        %v4621 = vsub.f32 %v395, %v4620
        %v4622 = vand.u32 %v4621, 4294901760
        %v4623 = vsub.f32 %v4621, %v4622
        %v4624 = vand.u32 %v4623, 4294901760
        %4625 = vmatpush1.msra.mxu0 %v4624
        %v4626 = vand.u32 %v400, 4294901760
        %v4627 = vsub.f32 %v400, %v4626
        %v4628 = vand.u32 %v4627, 4294901760
        %v4629 = vsub.f32 %v4627, %v4628
        %v4630 = vand.u32 %v4629, 4294901760
        %4631 = vmatprep.subr.mxu0 %v4630
        %v4632 = vand.u32 %v399, 4294901760
        %v4633 = vsub.f32 %v399, %v4632
        %v4634 = vand.u32 %v4633, 4294901760
        %v4635 = vsub.f32 %v4633, %v4634
        %v4636 = vand.u32 %v4635, 4294901760
        %4637 = vmatpush1.msra.mxu0 %v4636
        %v4638 = vand.u32 %v404, 4294901760
        %v4639 = vsub.f32 %v404, %v4638
        %v4640 = vand.u32 %v4639, 4294901760
        %v4641 = vsub.f32 %v4639, %v4640
        %v4642 = vand.u32 %v4641, 4294901760
        %4643 = vmatprep.subr.mxu0 %v4642
        %v4644 = vand.u32 %v403, 4294901760
        %v4645 = vsub.f32 %v403, %v4644
        %v4646 = vand.u32 %v4645, 4294901760
        %v4647 = vsub.f32 %v4645, %v4646
        %v4648 = vand.u32 %v4647, 4294901760
        %4649 = vmatpush1.msra.mxu0 %v4648
        %v4650 = vand.u32 %v408, 4294901760
        %v4651 = vsub.f32 %v408, %v4650
        %v4652 = vand.u32 %v4651, 4294901760
        %v4653 = vsub.f32 %v4651, %v4652
        %v4654 = vand.u32 %v4653, 4294901760
        %4655 = vmatprep.subr.mxu0 %v4654
        %v4656 = vand.u32 %v407, 4294901760
        %v4657 = vsub.f32 %v407, %v4656
        %v4658 = vand.u32 %v4657, 4294901760
        %v4659 = vsub.f32 %v4657, %v4658
        %v4660 = vand.u32 %v4659, 4294901760
        %4661 = vmatpush1.msra.mxu0 %v4660
        %v4662 = vand.u32 %v412, 4294901760
        %v4663 = vsub.f32 %v412, %v4662
        %v4664 = vand.u32 %v4663, 4294901760
        %v4665 = vsub.f32 %v4663, %v4664
        %v4666 = vand.u32 %v4665, 4294901760
        %4667 = vmatprep.subr.mxu0 %v4666
        %v4668 = vand.u32 %v411, 4294901760
        %v4669 = vsub.f32 %v411, %v4668
        %v4670 = vand.u32 %v4669, 4294901760
        %v4671 = vsub.f32 %v4669, %v4670
        %v4672 = vand.u32 %v4671, 4294901760
        %4673 = vmatpush1.msra.mxu0 %v4672
        %v4674 = vand.u32 %v416, 4294901760
        %v4675 = vsub.f32 %v416, %v4674
        %v4676 = vand.u32 %v4675, 4294901760
        %v4677 = vsub.f32 %v4675, %v4676
        %v4678 = vand.u32 %v4677, 4294901760
        %4679 = vmatprep.subr.mxu0 %v4678
        %v4680 = vand.u32 %v415, 4294901760
        %v4681 = vsub.f32 %v415, %v4680
        %v4682 = vand.u32 %v4681, 4294901760
        %v4683 = vsub.f32 %v4681, %v4682
        %v4684 = vand.u32 %v4683, 4294901760
        %4685 = vmatpush1.msra.mxu0 %v4684
        %v4686 = vand.u32 %v420, 4294901760
        %v4687 = vsub.f32 %v420, %v4686
        %v4688 = vand.u32 %v4687, 4294901760
        %v4689 = vsub.f32 %v4687, %v4688
        %v4690 = vand.u32 %v4689, 4294901760
        %4691 = vmatprep.subr.mxu0 %v4690
        %v4692 = vand.u32 %v419, 4294901760
        %v4693 = vsub.f32 %v419, %v4692
        %v4694 = vand.u32 %v4693, 4294901760
        %v4695 = vsub.f32 %v4693, %v4694
        %v4696 = vand.u32 %v4695, 4294901760
        %4697 = vmatpush1.msra.mxu0 %v4696
        %v4698 = vand.u32 %v424, 4294901760
        %v4699 = vsub.f32 %v424, %v4698
        %v4700 = vand.u32 %v4699, 4294901760
        %v4701 = vsub.f32 %v4699, %v4700
        %v4702 = vand.u32 %v4701, 4294901760
        %4703 = vmatprep.subr.mxu0 %v4702
        %v4704 = vand.u32 %v423, 4294901760
        %v4705 = vsub.f32 %v423, %v4704
        %v4706 = vand.u32 %v4705, 4294901760
        %v4707 = vsub.f32 %v4705, %v4706
        %v4708 = vand.u32 %v4707, 4294901760
        %4709 = vmatpush1.msra.mxu0 %v4708
        %v4710 = vand.u32 %v428, 4294901760
        %v4711 = vsub.f32 %v428, %v4710
        %v4712 = vand.u32 %v4711, 4294901760
        %v4713 = vsub.f32 %v4711, %v4712
        %v4714 = vand.u32 %v4713, 4294901760
        %4715 = vmatprep.subr.mxu0 %v4714
        %v4716 = vand.u32 %v427, 4294901760
        %v4717 = vsub.f32 %v427, %v4716
        %v4718 = vand.u32 %v4717, 4294901760
        %v4719 = vsub.f32 %v4717, %v4718
        %v4720 = vand.u32 %v4719, 4294901760
        %4721 = vmatpush1.msra.mxu0 %v4720
        %v4722 = vand.u32 %v432, 4294901760
        %v4723 = vsub.f32 %v432, %v4722
        %v4724 = vand.u32 %v4723, 4294901760
        %v4725 = vsub.f32 %v4723, %v4724
        %v4726 = vand.u32 %v4725, 4294901760
        %4727 = vmatprep.subr.mxu0 %v4726
        %v4728 = vand.u32 %v431, 4294901760
        %v4729 = vsub.f32 %v431, %v4728
        %v4730 = vand.u32 %v4729, 4294901760
        %v4731 = vsub.f32 %v4729, %v4730
        %v4732 = vand.u32 %v4731, 4294901760
        %4733 = vmatpush1.msra.mxu0 %v4732
        %v4734 = vand.u32 %v436, 4294901760
        %v4735 = vsub.f32 %v436, %v4734
        %v4736 = vand.u32 %v4735, 4294901760
        %v4737 = vsub.f32 %v4735, %v4736
        %v4738 = vand.u32 %v4737, 4294901760
        %4739 = vmatprep.subr.mxu0 %v4738
        %v4740 = vand.u32 %v435, 4294901760
        %v4741 = vsub.f32 %v435, %v4740
        %v4742 = vand.u32 %v4741, 4294901760
        %v4743 = vsub.f32 %v4741, %v4742
        %v4744 = vand.u32 %v4743, 4294901760
        %4745 = vmatpush1.msra.mxu0 %v4744
        %v4746 = vand.u32 %v440, 4294901760
        %v4747 = vsub.f32 %v440, %v4746
        %v4748 = vand.u32 %v4747, 4294901760
        %v4749 = vsub.f32 %v4747, %v4748
        %v4750 = vand.u32 %v4749, 4294901760
        %4751 = vmatprep.subr.mxu0 %v4750
        %v4752 = vand.u32 %v439, 4294901760
        %v4753 = vsub.f32 %v439, %v4752
        %v4754 = vand.u32 %v4753, 4294901760
        %v4755 = vsub.f32 %v4753, %v4754
        %v4756 = vand.u32 %v4755, 4294901760
        %4757 = vmatpush1.msra.mxu0 %v4756
        %v4758 = vand.u32 %v444, 4294901760
        %v4759 = vsub.f32 %v444, %v4758
        %v4760 = vand.u32 %v4759, 4294901760
        %v4761 = vsub.f32 %v4759, %v4760
        %v4762 = vand.u32 %v4761, 4294901760
        %4763 = vmatprep.subr.mxu0 %v4762
        %v4764 = vand.u32 %v443, 4294901760
        %v4765 = vsub.f32 %v443, %v4764
        %v4766 = vand.u32 %v4765, 4294901760
        %v4767 = vsub.f32 %v4765, %v4766
        %v4768 = vand.u32 %v4767, 4294901760
        %4769 = vmatpush1.msra.mxu0 %v4768
        %v4770 = vand.u32 %v448, 4294901760
        %v4771 = vsub.f32 %v448, %v4770
        %v4772 = vand.u32 %v4771, 4294901760
        %v4773 = vsub.f32 %v4771, %v4772
        %v4774 = vand.u32 %v4773, 4294901760
        %4775 = vmatprep.subr.mxu0 %v4774
        %v4776 = vand.u32 %v447, 4294901760
        %v4777 = vsub.f32 %v447, %v4776
        %v4778 = vand.u32 %v4777, 4294901760
        %v4779 = vsub.f32 %v4777, %v4778
        %v4780 = vand.u32 %v4779, 4294901760
        %4781 = vmatpush1.msra.mxu0 %v4780
        %v4782 = vand.u32 %v452, 4294901760
        %v4783 = vsub.f32 %v452, %v4782
        %v4784 = vand.u32 %v4783, 4294901760
        %v4785 = vsub.f32 %v4783, %v4784
        %v4786 = vand.u32 %v4785, 4294901760
        %4787 = vmatprep.subr.mxu0 %v4786
        %v4788 = vand.u32 %v451, 4294901760
        %v4789 = vsub.f32 %v451, %v4788
        %v4790 = vand.u32 %v4789, 4294901760
        %v4791 = vsub.f32 %v4789, %v4790
        %v4792 = vand.u32 %v4791, 4294901760
        %4793 = vmatpush1.msra.mxu0 %v4792
        %v4794 = vand.u32 %v456, 4294901760
        %v4795 = vsub.f32 %v456, %v4794
        %v4796 = vand.u32 %v4795, 4294901760
        %v4797 = vsub.f32 %v4795, %v4796
        %v4798 = vand.u32 %v4797, 4294901760
        %4799 = vmatprep.subr.mxu0 %v4798
        %v4800 = vand.u32 %v455, 4294901760
        %v4801 = vsub.f32 %v455, %v4800
        %v4802 = vand.u32 %v4801, 4294901760
        %v4803 = vsub.f32 %v4801, %v4802
        %v4804 = vand.u32 %v4803, 4294901760
        %4805 = vmatpush1.msra.mxu0 %v4804
        %v4806 = vand.u32 %v460, 4294901760
        %v4807 = vsub.f32 %v460, %v4806
        %v4808 = vand.u32 %v4807, 4294901760
        %v4809 = vsub.f32 %v4807, %v4808
        %v4810 = vand.u32 %v4809, 4294901760
        %4811 = vmatprep.subr.mxu0 %v4810
        %v4812 = vand.u32 %v459, 4294901760
        %v4813 = vsub.f32 %v459, %v4812
        %v4814 = vand.u32 %v4813, 4294901760
        %v4815 = vsub.f32 %v4813, %v4814
        %v4816 = vand.u32 %v4815, 4294901760
        %4817 = vmatpush1.msra.mxu0 %v4816
        %v4818 = vand.u32 %v464, 4294901760
        %v4819 = vsub.f32 %v464, %v4818
        %v4820 = vand.u32 %v4819, 4294901760
        %v4821 = vsub.f32 %v4819, %v4820
        %v4822 = vand.u32 %v4821, 4294901760
        %4823 = vmatprep.subr.mxu0 %v4822
        %v4824 = vand.u32 %v463, 4294901760
        %v4825 = vsub.f32 %v463, %v4824
        %v4826 = vand.u32 %v4825, 4294901760
        %v4827 = vsub.f32 %v4825, %v4826
        %v4828 = vand.u32 %v4827, 4294901760
        %4829 = vmatpush1.msra.mxu0 %v4828
        %v4830 = vand.u32 %v468, 4294901760
        %v4831 = vsub.f32 %v468, %v4830
        %v4832 = vand.u32 %v4831, 4294901760
        %v4833 = vsub.f32 %v4831, %v4832
        %v4834 = vand.u32 %v4833, 4294901760
        %4835 = vmatprep.subr.mxu0 %v4834
        %v4836 = vand.u32 %v467, 4294901760
        %v4837 = vsub.f32 %v467, %v4836
        %v4838 = vand.u32 %v4837, 4294901760
        %v4839 = vsub.f32 %v4837, %v4838
        %v4840 = vand.u32 %v4839, 4294901760
        %4841 = vmatpush1.msra.mxu0 %v4840
        %v4842 = vand.u32 %v472, 4294901760
        %v4843 = vsub.f32 %v472, %v4842
        %v4844 = vand.u32 %v4843, 4294901760
        %v4845 = vsub.f32 %v4843, %v4844
        %v4846 = vand.u32 %v4845, 4294901760
        %4847 = vmatprep.subr.mxu0 %v4846
        %v4848 = vand.u32 %v471, 4294901760
        %v4849 = vsub.f32 %v471, %v4848
        %v4850 = vand.u32 %v4849, 4294901760
        %v4851 = vsub.f32 %v4849, %v4850
        %v4852 = vand.u32 %v4851, 4294901760
        %4853 = vmatpush1.msra.mxu0 %v4852
        %v4854 = vand.u32 %v216, 4294901760
        %4855 = vmatprep.mubr.f32.mxu0 %v4854
        %v4856 = vand.u32 %v215, 4294901760
        %4857 = vmatmul.mubr.f32.gmra.mrb[0].mxu0 %v4856
        %v4858 = vpop.f32.mrb[0].mxu0
        %v4859 = vadd.f32 %v4466, %v4858
        %v4860 = vpop.f32.mrb[0].mxu0
        %v4861 = vadd.f32 %v4468, %v4860
        %4862 = vdwg.mxu0
        %v4863 = vand.u32 %v348, 4294901760
        %v4864 = vsub.f32 %v348, %v4863
        %4865 = vmatprep.subr.mxu0 %v4864
        %v4866 = vand.u32 %v347, 4294901760
        %v4867 = vsub.f32 %v347, %v4866
        %4868 = vmatpush1.msra.mxu0 %v4867
        %v4869 = vand.u32 %v352, 4294901760
        %v4870 = vsub.f32 %v352, %v4869
        %4871 = vmatprep.subr.mxu0 %v4870
        %v4872 = vand.u32 %v351, 4294901760
        %v4873 = vsub.f32 %v351, %v4872
        %4874 = vmatpush1.msra.mxu0 %v4873
        %v4875 = vand.u32 %v356, 4294901760
        %v4876 = vsub.f32 %v356, %v4875
        %4877 = vmatprep.subr.mxu0 %v4876
        %v4878 = vand.u32 %v355, 4294901760
        %v4879 = vsub.f32 %v355, %v4878
        %4880 = vmatpush1.msra.mxu0 %v4879
        %v4881 = vand.u32 %v360, 4294901760
        %v4882 = vsub.f32 %v360, %v4881
        %4883 = vmatprep.subr.mxu0 %v4882
        %v4884 = vand.u32 %v359, 4294901760
        %v4885 = vsub.f32 %v359, %v4884
        %4886 = vmatpush1.msra.mxu0 %v4885
        %v4887 = vand.u32 %v364, 4294901760
        %v4888 = vsub.f32 %v364, %v4887
        %4889 = vmatprep.subr.mxu0 %v4888
        %v4890 = vand.u32 %v363, 4294901760
        %v4891 = vsub.f32 %v363, %v4890
        %4892 = vmatpush1.msra.mxu0 %v4891
        %v4893 = vand.u32 %v368, 4294901760
        %v4894 = vsub.f32 %v368, %v4893
        %4895 = vmatprep.subr.mxu0 %v4894
        %v4896 = vand.u32 %v367, 4294901760
        %v4897 = vsub.f32 %v367, %v4896
        %4898 = vmatpush1.msra.mxu0 %v4897
        %v4899 = vand.u32 %v372, 4294901760
        %v4900 = vsub.f32 %v372, %v4899
        %4901 = vmatprep.subr.mxu0 %v4900
        %v4902 = vand.u32 %v371, 4294901760
        %v4903 = vsub.f32 %v371, %v4902
        %4904 = vmatpush1.msra.mxu0 %v4903
        %v4905 = vand.u32 %v376, 4294901760
        %v4906 = vsub.f32 %v376, %v4905
        %4907 = vmatprep.subr.mxu0 %v4906
        %v4908 = vand.u32 %v375, 4294901760
        %v4909 = vsub.f32 %v375, %v4908
        %4910 = vmatpush1.msra.mxu0 %v4909
        %v4911 = vand.u32 %v380, 4294901760
        %v4912 = vsub.f32 %v380, %v4911
        %4913 = vmatprep.subr.mxu0 %v4912
        %v4914 = vand.u32 %v379, 4294901760
        %v4915 = vsub.f32 %v379, %v4914
        %4916 = vmatpush1.msra.mxu0 %v4915
        %v4917 = vand.u32 %v384, 4294901760
        %v4918 = vsub.f32 %v384, %v4917
        %4919 = vmatprep.subr.mxu0 %v4918
        %v4920 = vand.u32 %v383, 4294901760
        %v4921 = vsub.f32 %v383, %v4920
        %4922 = vmatpush1.msra.mxu0 %v4921
        %v4923 = vand.u32 %v388, 4294901760
        %v4924 = vsub.f32 %v388, %v4923
        %4925 = vmatprep.subr.mxu0 %v4924
        %v4926 = vand.u32 %v387, 4294901760
        %v4927 = vsub.f32 %v387, %v4926
        %4928 = vmatpush1.msra.mxu0 %v4927
        %v4929 = vand.u32 %v392, 4294901760
        %v4930 = vsub.f32 %v392, %v4929
        %4931 = vmatprep.subr.mxu0 %v4930
        %v4932 = vand.u32 %v391, 4294901760
        %v4933 = vsub.f32 %v391, %v4932
        %4934 = vmatpush1.msra.mxu0 %v4933
        %v4935 = vand.u32 %v396, 4294901760
        %v4936 = vsub.f32 %v396, %v4935
        %4937 = vmatprep.subr.mxu0 %v4936
        %v4938 = vand.u32 %v395, 4294901760
        %v4939 = vsub.f32 %v395, %v4938
        %4940 = vmatpush1.msra.mxu0 %v4939
        %v4941 = vand.u32 %v400, 4294901760
        %v4942 = vsub.f32 %v400, %v4941
        %4943 = vmatprep.subr.mxu0 %v4942
        %v4944 = vand.u32 %v399, 4294901760
        %v4945 = vsub.f32 %v399, %v4944
        %4946 = vmatpush1.msra.mxu0 %v4945
        %v4947 = vand.u32 %v404, 4294901760
        %v4948 = vsub.f32 %v404, %v4947
        %4949 = vmatprep.subr.mxu0 %v4948
        %v4950 = vand.u32 %v403, 4294901760
        %v4951 = vsub.f32 %v403, %v4950
        %4952 = vmatpush1.msra.mxu0 %v4951
        %v4953 = vand.u32 %v408, 4294901760
        %v4954 = vsub.f32 %v408, %v4953
        %4955 = vmatprep.subr.mxu0 %v4954
        %v4956 = vand.u32 %v407, 4294901760
        %v4957 = vsub.f32 %v407, %v4956
        %4958 = vmatpush1.msra.mxu0 %v4957
        %v4959 = vand.u32 %v412, 4294901760
        %v4960 = vsub.f32 %v412, %v4959
        %4961 = vmatprep.subr.mxu0 %v4960
        %v4962 = vand.u32 %v411, 4294901760
        %v4963 = vsub.f32 %v411, %v4962
        %4964 = vmatpush1.msra.mxu0 %v4963
        %v4965 = vand.u32 %v416, 4294901760
        %v4966 = vsub.f32 %v416, %v4965
        %4967 = vmatprep.subr.mxu0 %v4966
        %v4968 = vand.u32 %v415, 4294901760
        %v4969 = vsub.f32 %v415, %v4968
        %4970 = vmatpush1.msra.mxu0 %v4969
        %v4971 = vand.u32 %v420, 4294901760
        %v4972 = vsub.f32 %v420, %v4971
        %4973 = vmatprep.subr.mxu0 %v4972
        %v4974 = vand.u32 %v419, 4294901760
        %v4975 = vsub.f32 %v419, %v4974
        %4976 = vmatpush1.msra.mxu0 %v4975
        %v4977 = vand.u32 %v424, 4294901760
        %v4978 = vsub.f32 %v424, %v4977
        %4979 = vmatprep.subr.mxu0 %v4978
        %v4980 = vand.u32 %v423, 4294901760
        %v4981 = vsub.f32 %v423, %v4980
        %4982 = vmatpush1.msra.mxu0 %v4981
        %v4983 = vand.u32 %v428, 4294901760
        %v4984 = vsub.f32 %v428, %v4983
        %4985 = vmatprep.subr.mxu0 %v4984
        %v4986 = vand.u32 %v427, 4294901760
        %v4987 = vsub.f32 %v427, %v4986
        %4988 = vmatpush1.msra.mxu0 %v4987
        %v4989 = vand.u32 %v432, 4294901760
        %v4990 = vsub.f32 %v432, %v4989
        %4991 = vmatprep.subr.mxu0 %v4990
        %v4992 = vand.u32 %v431, 4294901760
        %v4993 = vsub.f32 %v431, %v4992
        %4994 = vmatpush1.msra.mxu0 %v4993
        %v4995 = vand.u32 %v436, 4294901760
        %v4996 = vsub.f32 %v436, %v4995
        %4997 = vmatprep.subr.mxu0 %v4996
        %v4998 = vand.u32 %v435, 4294901760
        %v4999 = vsub.f32 %v435, %v4998
        %5000 = vmatpush1.msra.mxu0 %v4999
        %v5001 = vand.u32 %v440, 4294901760
        %v5002 = vsub.f32 %v440, %v5001
        %5003 = vmatprep.subr.mxu0 %v5002
        %v5004 = vand.u32 %v439, 4294901760
        %v5005 = vsub.f32 %v439, %v5004
        %5006 = vmatpush1.msra.mxu0 %v5005
        %v5007 = vand.u32 %v444, 4294901760
        %v5008 = vsub.f32 %v444, %v5007
        %5009 = vmatprep.subr.mxu0 %v5008
        %v5010 = vand.u32 %v443, 4294901760
        %v5011 = vsub.f32 %v443, %v5010
        %5012 = vmatpush1.msra.mxu0 %v5011
        %v5013 = vand.u32 %v448, 4294901760
        %v5014 = vsub.f32 %v448, %v5013
        %5015 = vmatprep.subr.mxu0 %v5014
        %v5016 = vand.u32 %v447, 4294901760
        %v5017 = vsub.f32 %v447, %v5016
        %5018 = vmatpush1.msra.mxu0 %v5017
        %v5019 = vand.u32 %v452, 4294901760
        %v5020 = vsub.f32 %v452, %v5019
        %5021 = vmatprep.subr.mxu0 %v5020
        %v5022 = vand.u32 %v451, 4294901760
        %v5023 = vsub.f32 %v451, %v5022
        %5024 = vmatpush1.msra.mxu0 %v5023
        %v5025 = vand.u32 %v456, 4294901760
        %v5026 = vsub.f32 %v456, %v5025
        %5027 = vmatprep.subr.mxu0 %v5026
        %v5028 = vand.u32 %v455, 4294901760
        %v5029 = vsub.f32 %v455, %v5028
        %5030 = vmatpush1.msra.mxu0 %v5029
        %v5031 = vand.u32 %v460, 4294901760
        %v5032 = vsub.f32 %v460, %v5031
        %5033 = vmatprep.subr.mxu0 %v5032
        %v5034 = vand.u32 %v459, 4294901760
        %v5035 = vsub.f32 %v459, %v5034
        %5036 = vmatpush1.msra.mxu0 %v5035
        %v5037 = vand.u32 %v464, 4294901760
        %v5038 = vsub.f32 %v464, %v5037
        %5039 = vmatprep.subr.mxu0 %v5038
        %v5040 = vand.u32 %v463, 4294901760
        %v5041 = vsub.f32 %v463, %v5040
        %5042 = vmatpush1.msra.mxu0 %v5041
        %v5043 = vand.u32 %v468, 4294901760
        %v5044 = vsub.f32 %v468, %v5043
        %5045 = vmatprep.subr.mxu0 %v5044
        %v5046 = vand.u32 %v467, 4294901760
        %v5047 = vsub.f32 %v467, %v5046
        %5048 = vmatpush1.msra.mxu0 %v5047
        %v5049 = vand.u32 %v472, 4294901760
        %v5050 = vsub.f32 %v472, %v5049
        %5051 = vmatprep.subr.mxu0 %v5050
        %v5052 = vand.u32 %v471, 4294901760
        %v5053 = vsub.f32 %v471, %v5052
        %5054 = vmatpush1.msra.mxu0 %v5053
        %v5055 = vand.u32 %v216, 4294901760
        %v5056 = vsub.f32 %v216, %v5055
        %5057 = vmatprep.mubr.f32.mxu0 %v5056
        %v5058 = vand.u32 %v215, 4294901760
        %v5059 = vsub.f32 %v215, %v5058
        %5060 = vmatmul.mubr.f32.gmra.mrb[0].mxu0 %v5059
        %v5061 = vpop.f32.mrb[0].mxu0
        %v5062 = vadd.f32 %v4859, %v5061
        %v5063 = vpop.f32.mrb[0].mxu0
        %v5064 = vadd.f32 %v4861, %v5063
        %5065 = vdwg.mxu0
        %v5066 = vand.u32 %v348, 4294901760
        %5067 = vmatprep.subr.mxu0 %v5066
        %v5068 = vand.u32 %v347, 4294901760
        %5069 = vmatpush1.msra.mxu0 %v5068
        %v5070 = vand.u32 %v352, 4294901760
        %5071 = vmatprep.subr.mxu0 %v5070
        %v5072 = vand.u32 %v351, 4294901760
        %5073 = vmatpush1.msra.mxu0 %v5072
        %v5074 = vand.u32 %v356, 4294901760
        %5075 = vmatprep.subr.mxu0 %v5074
        %v5076 = vand.u32 %v355, 4294901760
        %5077 = vmatpush1.msra.mxu0 %v5076
        %v5078 = vand.u32 %v360, 4294901760
        %5079 = vmatprep.subr.mxu0 %v5078
        %v5080 = vand.u32 %v359, 4294901760
        %5081 = vmatpush1.msra.mxu0 %v5080
        %v5082 = vand.u32 %v364, 4294901760
        %5083 = vmatprep.subr.mxu0 %v5082
        %v5084 = vand.u32 %v363, 4294901760
        %5085 = vmatpush1.msra.mxu0 %v5084
        %v5086 = vand.u32 %v368, 4294901760
        %5087 = vmatprep.subr.mxu0 %v5086
        %v5088 = vand.u32 %v367, 4294901760
        %5089 = vmatpush1.msra.mxu0 %v5088
        %v5090 = vand.u32 %v372, 4294901760
        %5091 = vmatprep.subr.mxu0 %v5090
        %v5092 = vand.u32 %v371, 4294901760
        %5093 = vmatpush1.msra.mxu0 %v5092
        %v5094 = vand.u32 %v376, 4294901760
        %5095 = vmatprep.subr.mxu0 %v5094
        %v5096 = vand.u32 %v375, 4294901760
        %5097 = vmatpush1.msra.mxu0 %v5096
        %v5098 = vand.u32 %v380, 4294901760
        %5099 = vmatprep.subr.mxu0 %v5098
        %v5100 = vand.u32 %v379, 4294901760
        %5101 = vmatpush1.msra.mxu0 %v5100
        %v5102 = vand.u32 %v384, 4294901760
        %5103 = vmatprep.subr.mxu0 %v5102
        %v5104 = vand.u32 %v383, 4294901760
        %5105 = vmatpush1.msra.mxu0 %v5104
        %v5106 = vand.u32 %v388, 4294901760
        %5107 = vmatprep.subr.mxu0 %v5106
        %v5108 = vand.u32 %v387, 4294901760
        %5109 = vmatpush1.msra.mxu0 %v5108
        %v5110 = vand.u32 %v392, 4294901760
        %5111 = vmatprep.subr.mxu0 %v5110
        %v5112 = vand.u32 %v391, 4294901760
        %5113 = vmatpush1.msra.mxu0 %v5112
        %v5114 = vand.u32 %v396, 4294901760
        %5115 = vmatprep.subr.mxu0 %v5114
        %v5116 = vand.u32 %v395, 4294901760
        %5117 = vmatpush1.msra.mxu0 %v5116
        %v5118 = vand.u32 %v400, 4294901760
        %5119 = vmatprep.subr.mxu0 %v5118
        %v5120 = vand.u32 %v399, 4294901760
        %5121 = vmatpush1.msra.mxu0 %v5120
        %v5122 = vand.u32 %v404, 4294901760
        %5123 = vmatprep.subr.mxu0 %v5122
        %v5124 = vand.u32 %v403, 4294901760
        %5125 = vmatpush1.msra.mxu0 %v5124
        %v5126 = vand.u32 %v408, 4294901760
        %5127 = vmatprep.subr.mxu0 %v5126
        %v5128 = vand.u32 %v407, 4294901760
        %5129 = vmatpush1.msra.mxu0 %v5128
        %v5130 = vand.u32 %v412, 4294901760
        %5131 = vmatprep.subr.mxu0 %v5130
        %v5132 = vand.u32 %v411, 4294901760
        %5133 = vmatpush1.msra.mxu0 %v5132
        %v5134 = vand.u32 %v416, 4294901760
        %5135 = vmatprep.subr.mxu0 %v5134
        %v5136 = vand.u32 %v415, 4294901760
        %5137 = vmatpush1.msra.mxu0 %v5136
        %v5138 = vand.u32 %v420, 4294901760
        %5139 = vmatprep.subr.mxu0 %v5138
        %v5140 = vand.u32 %v419, 4294901760
        %5141 = vmatpush1.msra.mxu0 %v5140
        %v5142 = vand.u32 %v424, 4294901760
        %5143 = vmatprep.subr.mxu0 %v5142
        %v5144 = vand.u32 %v423, 4294901760
        %5145 = vmatpush1.msra.mxu0 %v5144
        %v5146 = vand.u32 %v428, 4294901760
        %5147 = vmatprep.subr.mxu0 %v5146
        %v5148 = vand.u32 %v427, 4294901760
        %5149 = vmatpush1.msra.mxu0 %v5148
        %v5150 = vand.u32 %v432, 4294901760
        %5151 = vmatprep.subr.mxu0 %v5150
        %v5152 = vand.u32 %v431, 4294901760
        %5153 = vmatpush1.msra.mxu0 %v5152
        %v5154 = vand.u32 %v436, 4294901760
        %5155 = vmatprep.subr.mxu0 %v5154
        %v5156 = vand.u32 %v435, 4294901760
        %5157 = vmatpush1.msra.mxu0 %v5156
        %v5158 = vand.u32 %v440, 4294901760
        %5159 = vmatprep.subr.mxu0 %v5158
        %v5160 = vand.u32 %v439, 4294901760
        %5161 = vmatpush1.msra.mxu0 %v5160
        %v5162 = vand.u32 %v444, 4294901760
        %5163 = vmatprep.subr.mxu0 %v5162
        %v5164 = vand.u32 %v443, 4294901760
        %5165 = vmatpush1.msra.mxu0 %v5164
        %v5166 = vand.u32 %v448, 4294901760
        %5167 = vmatprep.subr.mxu0 %v5166
        %v5168 = vand.u32 %v447, 4294901760
        %5169 = vmatpush1.msra.mxu0 %v5168
        %v5170 = vand.u32 %v452, 4294901760
        %5171 = vmatprep.subr.mxu0 %v5170
        %v5172 = vand.u32 %v451, 4294901760
        %5173 = vmatpush1.msra.mxu0 %v5172
        %v5174 = vand.u32 %v456, 4294901760
        %5175 = vmatprep.subr.mxu0 %v5174
        %v5176 = vand.u32 %v455, 4294901760
        %5177 = vmatpush1.msra.mxu0 %v5176
        %v5178 = vand.u32 %v460, 4294901760
        %5179 = vmatprep.subr.mxu0 %v5178
        %v5180 = vand.u32 %v459, 4294901760
        %5181 = vmatpush1.msra.mxu0 %v5180
        %v5182 = vand.u32 %v464, 4294901760
        %5183 = vmatprep.subr.mxu0 %v5182
        %v5184 = vand.u32 %v463, 4294901760
        %5185 = vmatpush1.msra.mxu0 %v5184
        %v5186 = vand.u32 %v468, 4294901760
        %5187 = vmatprep.subr.mxu0 %v5186
        %v5188 = vand.u32 %v467, 4294901760
        %5189 = vmatpush1.msra.mxu0 %v5188
        %v5190 = vand.u32 %v472, 4294901760
        %5191 = vmatprep.subr.mxu0 %v5190
        %v5192 = vand.u32 %v471, 4294901760
        %5193 = vmatpush1.msra.mxu0 %v5192
        %v5194 = vand.u32 %v216, 4294901760
        %v5195 = vsub.f32 %v216, %v5194
        %v5196 = vand.u32 %v5195, 4294901760
        %5197 = vmatprep.mubr.f32.mxu0 %v5196
        %v5198 = vand.u32 %v215, 4294901760
        %v5199 = vsub.f32 %v215, %v5198
        %v5200 = vand.u32 %v5199, 4294901760
        %5201 = vmatmul.mubr.f32.gmra.mrb[0].mxu0 %v5200
        %v5202 = vpop.f32.mrb[0].mxu0
        %v5203 = vadd.f32 %v5062, %v5202
        %v5204 = vpop.f32.mrb[0].mxu0
        %v5205 = vadd.f32 %v5064, %v5204
        %5206 = vdwg.mxu0
        %v5207 = vand.u32 %v348, 4294901760
        %v5208 = vsub.f32 %v348, %v5207
        %v5209 = vand.u32 %v5208, 4294901760
        %5210 = vmatprep.subr.mxu0 %v5209
        %v5211 = vand.u32 %v347, 4294901760
        %v5212 = vsub.f32 %v347, %v5211
        %v5213 = vand.u32 %v5212, 4294901760
        %5214 = vmatpush1.msra.mxu0 %v5213
        %v5215 = vand.u32 %v352, 4294901760
        %v5216 = vsub.f32 %v352, %v5215
        %v5217 = vand.u32 %v5216, 4294901760
        %5218 = vmatprep.subr.mxu0 %v5217
        %v5219 = vand.u32 %v351, 4294901760
        %v5220 = vsub.f32 %v351, %v5219
        %v5221 = vand.u32 %v5220, 4294901760
        %5222 = vmatpush1.msra.mxu0 %v5221
        %v5223 = vand.u32 %v356, 4294901760
        %v5224 = vsub.f32 %v356, %v5223
        %v5225 = vand.u32 %v5224, 4294901760
        %5226 = vmatprep.subr.mxu0 %v5225
        %v5227 = vand.u32 %v355, 4294901760
        %v5228 = vsub.f32 %v355, %v5227
        %v5229 = vand.u32 %v5228, 4294901760
        %5230 = vmatpush1.msra.mxu0 %v5229
        %v5231 = vand.u32 %v360, 4294901760
        %v5232 = vsub.f32 %v360, %v5231
        %v5233 = vand.u32 %v5232, 4294901760
        %5234 = vmatprep.subr.mxu0 %v5233
        %v5235 = vand.u32 %v359, 4294901760
        %v5236 = vsub.f32 %v359, %v5235
        %v5237 = vand.u32 %v5236, 4294901760
        %5238 = vmatpush1.msra.mxu0 %v5237
        %v5239 = vand.u32 %v364, 4294901760
        %v5240 = vsub.f32 %v364, %v5239
        %v5241 = vand.u32 %v5240, 4294901760
        %5242 = vmatprep.subr.mxu0 %v5241
        %v5243 = vand.u32 %v363, 4294901760
        %v5244 = vsub.f32 %v363, %v5243
        %v5245 = vand.u32 %v5244, 4294901760
        %5246 = vmatpush1.msra.mxu0 %v5245
        %v5247 = vand.u32 %v368, 4294901760
        %v5248 = vsub.f32 %v368, %v5247
        %v5249 = vand.u32 %v5248, 4294901760
        %5250 = vmatprep.subr.mxu0 %v5249
        %v5251 = vand.u32 %v367, 4294901760
        %v5252 = vsub.f32 %v367, %v5251
        %v5253 = vand.u32 %v5252, 4294901760
        %5254 = vmatpush1.msra.mxu0 %v5253
        %v5255 = vand.u32 %v372, 4294901760
        %v5256 = vsub.f32 %v372, %v5255
        %v5257 = vand.u32 %v5256, 4294901760
        %5258 = vmatprep.subr.mxu0 %v5257
        %v5259 = vand.u32 %v371, 4294901760
        %v5260 = vsub.f32 %v371, %v5259
        %v5261 = vand.u32 %v5260, 4294901760
        %5262 = vmatpush1.msra.mxu0 %v5261
        %v5263 = vand.u32 %v376, 4294901760
        %v5264 = vsub.f32 %v376, %v5263
        %v5265 = vand.u32 %v5264, 4294901760
        %5266 = vmatprep.subr.mxu0 %v5265
        %v5267 = vand.u32 %v375, 4294901760
        %v5268 = vsub.f32 %v375, %v5267
        %v5269 = vand.u32 %v5268, 4294901760
        %5270 = vmatpush1.msra.mxu0 %v5269
        %v5271 = vand.u32 %v380, 4294901760
        %v5272 = vsub.f32 %v380, %v5271
        %v5273 = vand.u32 %v5272, 4294901760
        %5274 = vmatprep.subr.mxu0 %v5273
        %v5275 = vand.u32 %v379, 4294901760
        %v5276 = vsub.f32 %v379, %v5275
        %v5277 = vand.u32 %v5276, 4294901760
        %5278 = vmatpush1.msra.mxu0 %v5277
        %v5279 = vand.u32 %v384, 4294901760
        %v5280 = vsub.f32 %v384, %v5279
        %v5281 = vand.u32 %v5280, 4294901760
        %5282 = vmatprep.subr.mxu0 %v5281
        %v5283 = vand.u32 %v383, 4294901760
        %v5284 = vsub.f32 %v383, %v5283
        %v5285 = vand.u32 %v5284, 4294901760
        %5286 = vmatpush1.msra.mxu0 %v5285
        %v5287 = vand.u32 %v388, 4294901760
        %v5288 = vsub.f32 %v388, %v5287
        %v5289 = vand.u32 %v5288, 4294901760
        %5290 = vmatprep.subr.mxu0 %v5289
        %v5291 = vand.u32 %v387, 4294901760
        %v5292 = vsub.f32 %v387, %v5291
        %v5293 = vand.u32 %v5292, 4294901760
        %5294 = vmatpush1.msra.mxu0 %v5293
        %v5295 = vand.u32 %v392, 4294901760
        %v5296 = vsub.f32 %v392, %v5295
        %v5297 = vand.u32 %v5296, 4294901760
        %5298 = vmatprep.subr.mxu0 %v5297
        %v5299 = vand.u32 %v391, 4294901760
        %v5300 = vsub.f32 %v391, %v5299
        %v5301 = vand.u32 %v5300, 4294901760
        %5302 = vmatpush1.msra.mxu0 %v5301
        %v5303 = vand.u32 %v396, 4294901760
        %v5304 = vsub.f32 %v396, %v5303
        %v5305 = vand.u32 %v5304, 4294901760
        %5306 = vmatprep.subr.mxu0 %v5305
        %v5307 = vand.u32 %v395, 4294901760
        %v5308 = vsub.f32 %v395, %v5307
        %v5309 = vand.u32 %v5308, 4294901760
        %5310 = vmatpush1.msra.mxu0 %v5309
        %v5311 = vand.u32 %v400, 4294901760
        %v5312 = vsub.f32 %v400, %v5311
        %v5313 = vand.u32 %v5312, 4294901760
        %5314 = vmatprep.subr.mxu0 %v5313
        %v5315 = vand.u32 %v399, 4294901760
        %v5316 = vsub.f32 %v399, %v5315
        %v5317 = vand.u32 %v5316, 4294901760
        %5318 = vmatpush1.msra.mxu0 %v5317
        %v5319 = vand.u32 %v404, 4294901760
        %v5320 = vsub.f32 %v404, %v5319
        %v5321 = vand.u32 %v5320, 4294901760
        %5322 = vmatprep.subr.mxu0 %v5321
        %v5323 = vand.u32 %v403, 4294901760
        %v5324 = vsub.f32 %v403, %v5323
        %v5325 = vand.u32 %v5324, 4294901760
        %5326 = vmatpush1.msra.mxu0 %v5325
        %v5327 = vand.u32 %v408, 4294901760
        %v5328 = vsub.f32 %v408, %v5327
        %v5329 = vand.u32 %v5328, 4294901760
        %5330 = vmatprep.subr.mxu0 %v5329
        %v5331 = vand.u32 %v407, 4294901760
        %v5332 = vsub.f32 %v407, %v5331
        %v5333 = vand.u32 %v5332, 4294901760
        %5334 = vmatpush1.msra.mxu0 %v5333
        %v5335 = vand.u32 %v412, 4294901760
        %v5336 = vsub.f32 %v412, %v5335
        %v5337 = vand.u32 %v5336, 4294901760
        %5338 = vmatprep.subr.mxu0 %v5337
        %v5339 = vand.u32 %v411, 4294901760
        %v5340 = vsub.f32 %v411, %v5339
        %v5341 = vand.u32 %v5340, 4294901760
        %5342 = vmatpush1.msra.mxu0 %v5341
        %v5343 = vand.u32 %v416, 4294901760
        %v5344 = vsub.f32 %v416, %v5343
        %v5345 = vand.u32 %v5344, 4294901760
        %5346 = vmatprep.subr.mxu0 %v5345
        %v5347 = vand.u32 %v415, 4294901760
        %v5348 = vsub.f32 %v415, %v5347
        %v5349 = vand.u32 %v5348, 4294901760
        %5350 = vmatpush1.msra.mxu0 %v5349
        %v5351 = vand.u32 %v420, 4294901760
        %v5352 = vsub.f32 %v420, %v5351
        %v5353 = vand.u32 %v5352, 4294901760
        %5354 = vmatprep.subr.mxu0 %v5353
        %v5355 = vand.u32 %v419, 4294901760
        %v5356 = vsub.f32 %v419, %v5355
        %v5357 = vand.u32 %v5356, 4294901760
        %5358 = vmatpush1.msra.mxu0 %v5357
        %v5359 = vand.u32 %v424, 4294901760
        %v5360 = vsub.f32 %v424, %v5359
        %v5361 = vand.u32 %v5360, 4294901760
        %5362 = vmatprep.subr.mxu0 %v5361
        %v5363 = vand.u32 %v423, 4294901760
        %v5364 = vsub.f32 %v423, %v5363
        %v5365 = vand.u32 %v5364, 4294901760
        %5366 = vmatpush1.msra.mxu0 %v5365
        %v5367 = vand.u32 %v428, 4294901760
        %v5368 = vsub.f32 %v428, %v5367
        %v5369 = vand.u32 %v5368, 4294901760
        %5370 = vmatprep.subr.mxu0 %v5369
        %v5371 = vand.u32 %v427, 4294901760
        %v5372 = vsub.f32 %v427, %v5371
        %v5373 = vand.u32 %v5372, 4294901760
        %5374 = vmatpush1.msra.mxu0 %v5373
        %v5375 = vand.u32 %v432, 4294901760
        %v5376 = vsub.f32 %v432, %v5375
        %v5377 = vand.u32 %v5376, 4294901760
        %5378 = vmatprep.subr.mxu0 %v5377
        %v5379 = vand.u32 %v431, 4294901760
        %v5380 = vsub.f32 %v431, %v5379
        %v5381 = vand.u32 %v5380, 4294901760
        %5382 = vmatpush1.msra.mxu0 %v5381
        %v5383 = vand.u32 %v436, 4294901760
        %v5384 = vsub.f32 %v436, %v5383
        %v5385 = vand.u32 %v5384, 4294901760
        %5386 = vmatprep.subr.mxu0 %v5385
        %v5387 = vand.u32 %v435, 4294901760
        %v5388 = vsub.f32 %v435, %v5387
        %v5389 = vand.u32 %v5388, 4294901760
        %5390 = vmatpush1.msra.mxu0 %v5389
        %v5391 = vand.u32 %v440, 4294901760
        %v5392 = vsub.f32 %v440, %v5391
        %v5393 = vand.u32 %v5392, 4294901760
        %5394 = vmatprep.subr.mxu0 %v5393
        %v5395 = vand.u32 %v439, 4294901760
        %v5396 = vsub.f32 %v439, %v5395
        %v5397 = vand.u32 %v5396, 4294901760
        %5398 = vmatpush1.msra.mxu0 %v5397
        %v5399 = vand.u32 %v444, 4294901760
        %v5400 = vsub.f32 %v444, %v5399
        %v5401 = vand.u32 %v5400, 4294901760
        %5402 = vmatprep.subr.mxu0 %v5401
        %v5403 = vand.u32 %v443, 4294901760
        %v5404 = vsub.f32 %v443, %v5403
        %v5405 = vand.u32 %v5404, 4294901760
        %5406 = vmatpush1.msra.mxu0 %v5405
        %v5407 = vand.u32 %v448, 4294901760
        %v5408 = vsub.f32 %v448, %v5407
        %v5409 = vand.u32 %v5408, 4294901760
        %5410 = vmatprep.subr.mxu0 %v5409
        %v5411 = vand.u32 %v447, 4294901760
        %v5412 = vsub.f32 %v447, %v5411
        %v5413 = vand.u32 %v5412, 4294901760
        %5414 = vmatpush1.msra.mxu0 %v5413
        %v5415 = vand.u32 %v452, 4294901760
        %v5416 = vsub.f32 %v452, %v5415
        %v5417 = vand.u32 %v5416, 4294901760
        %5418 = vmatprep.subr.mxu0 %v5417
        %v5419 = vand.u32 %v451, 4294901760
        %v5420 = vsub.f32 %v451, %v5419
        %v5421 = vand.u32 %v5420, 4294901760
        %5422 = vmatpush1.msra.mxu0 %v5421
        %v5423 = vand.u32 %v456, 4294901760
        %v5424 = vsub.f32 %v456, %v5423
        %v5425 = vand.u32 %v5424, 4294901760
        %5426 = vmatprep.subr.mxu0 %v5425
        %v5427 = vand.u32 %v455, 4294901760
        %v5428 = vsub.f32 %v455, %v5427
        %v5429 = vand.u32 %v5428, 4294901760
        %5430 = vmatpush1.msra.mxu0 %v5429
        %v5431 = vand.u32 %v460, 4294901760
        %v5432 = vsub.f32 %v460, %v5431
        %v5433 = vand.u32 %v5432, 4294901760
        %5434 = vmatprep.subr.mxu0 %v5433
        %v5435 = vand.u32 %v459, 4294901760
        %v5436 = vsub.f32 %v459, %v5435
        %v5437 = vand.u32 %v5436, 4294901760
        %5438 = vmatpush1.msra.mxu0 %v5437
        %v5439 = vand.u32 %v464, 4294901760
        %v5440 = vsub.f32 %v464, %v5439
        %v5441 = vand.u32 %v5440, 4294901760
        %5442 = vmatprep.subr.mxu0 %v5441
        %v5443 = vand.u32 %v463, 4294901760
        %v5444 = vsub.f32 %v463, %v5443
        %v5445 = vand.u32 %v5444, 4294901760
        %5446 = vmatpush1.msra.mxu0 %v5445
        %v5447 = vand.u32 %v468, 4294901760
        %v5448 = vsub.f32 %v468, %v5447
        %v5449 = vand.u32 %v5448, 4294901760
        %5450 = vmatprep.subr.mxu0 %v5449
        %v5451 = vand.u32 %v467, 4294901760
        %v5452 = vsub.f32 %v467, %v5451
        %v5453 = vand.u32 %v5452, 4294901760
        %5454 = vmatpush1.msra.mxu0 %v5453
        %v5455 = vand.u32 %v472, 4294901760
        %v5456 = vsub.f32 %v472, %v5455
        %v5457 = vand.u32 %v5456, 4294901760
        %5458 = vmatprep.subr.mxu0 %v5457
        %v5459 = vand.u32 %v471, 4294901760
        %v5460 = vsub.f32 %v471, %v5459
        %v5461 = vand.u32 %v5460, 4294901760
        %5462 = vmatpush1.msra.mxu0 %v5461
        %v5463 = vand.u32 %v216, 4294901760
        %5464 = vmatprep.mubr.f32.mxu0 %v5463
        %v5465 = vand.u32 %v215, 4294901760
        %5466 = vmatmul.mubr.f32.gmra.mrb[0].mxu0 %v5465
        %v5467 = vpop.f32.mrb[0].mxu0
        %v5468 = vadd.f32 %v5203, %v5467
        %v5469 = vpop.f32.mrb[0].mxu0
        %v5470 = vadd.f32 %v5205, %v5469
        %5471 = vdwg.mxu0
        %v5472 = vand.u32 %v348, 4294901760
        %5473 = vmatprep.subr.mxu0 %v5472
        %v5474 = vand.u32 %v347, 4294901760
        %5475 = vmatpush1.msra.mxu0 %v5474
        %v5476 = vand.u32 %v352, 4294901760
        %5477 = vmatprep.subr.mxu0 %v5476
        %v5478 = vand.u32 %v351, 4294901760
        %5479 = vmatpush1.msra.mxu0 %v5478
        %v5480 = vand.u32 %v356, 4294901760
        %5481 = vmatprep.subr.mxu0 %v5480
        %v5482 = vand.u32 %v355, 4294901760
        %5483 = vmatpush1.msra.mxu0 %v5482
        %v5484 = vand.u32 %v360, 4294901760
        %5485 = vmatprep.subr.mxu0 %v5484
        %v5486 = vand.u32 %v359, 4294901760
        %5487 = vmatpush1.msra.mxu0 %v5486
        %v5488 = vand.u32 %v364, 4294901760
        %5489 = vmatprep.subr.mxu0 %v5488
        %v5490 = vand.u32 %v363, 4294901760
        %5491 = vmatpush1.msra.mxu0 %v5490
        %v5492 = vand.u32 %v368, 4294901760
        %5493 = vmatprep.subr.mxu0 %v5492
        %v5494 = vand.u32 %v367, 4294901760
        %5495 = vmatpush1.msra.mxu0 %v5494
        %v5496 = vand.u32 %v372, 4294901760
        %5497 = vmatprep.subr.mxu0 %v5496
        %v5498 = vand.u32 %v371, 4294901760
        %5499 = vmatpush1.msra.mxu0 %v5498
        %v5500 = vand.u32 %v376, 4294901760
        %5501 = vmatprep.subr.mxu0 %v5500
        %v5502 = vand.u32 %v375, 4294901760
        %5503 = vmatpush1.msra.mxu0 %v5502
        %v5504 = vand.u32 %v380, 4294901760
        %5505 = vmatprep.subr.mxu0 %v5504
        %v5506 = vand.u32 %v379, 4294901760
        %5507 = vmatpush1.msra.mxu0 %v5506
        %v5508 = vand.u32 %v384, 4294901760
        %5509 = vmatprep.subr.mxu0 %v5508
        %v5510 = vand.u32 %v383, 4294901760
        %5511 = vmatpush1.msra.mxu0 %v5510
        %v5512 = vand.u32 %v388, 4294901760
        %5513 = vmatprep.subr.mxu0 %v5512
        %v5514 = vand.u32 %v387, 4294901760
        %5515 = vmatpush1.msra.mxu0 %v5514
        %v5516 = vand.u32 %v392, 4294901760
        %5517 = vmatprep.subr.mxu0 %v5516
        %v5518 = vand.u32 %v391, 4294901760
        %5519 = vmatpush1.msra.mxu0 %v5518
        %v5520 = vand.u32 %v396, 4294901760
        %5521 = vmatprep.subr.mxu0 %v5520
        %v5522 = vand.u32 %v395, 4294901760
        %5523 = vmatpush1.msra.mxu0 %v5522
        %v5524 = vand.u32 %v400, 4294901760
        %5525 = vmatprep.subr.mxu0 %v5524
        %v5526 = vand.u32 %v399, 4294901760
        %5527 = vmatpush1.msra.mxu0 %v5526
        %v5528 = vand.u32 %v404, 4294901760
        %5529 = vmatprep.subr.mxu0 %v5528
        %v5530 = vand.u32 %v403, 4294901760
        %5531 = vmatpush1.msra.mxu0 %v5530
        %v5532 = vand.u32 %v408, 4294901760
        %5533 = vmatprep.subr.mxu0 %v5532
        %v5534 = vand.u32 %v407, 4294901760
        %5535 = vmatpush1.msra.mxu0 %v5534
        %v5536 = vand.u32 %v412, 4294901760
        %5537 = vmatprep.subr.mxu0 %v5536
        %v5538 = vand.u32 %v411, 4294901760
        %5539 = vmatpush1.msra.mxu0 %v5538
        %v5540 = vand.u32 %v416, 4294901760
        %5541 = vmatprep.subr.mxu0 %v5540
        %v5542 = vand.u32 %v415, 4294901760
        %5543 = vmatpush1.msra.mxu0 %v5542
        %v5544 = vand.u32 %v420, 4294901760
        %5545 = vmatprep.subr.mxu0 %v5544
        %v5546 = vand.u32 %v419, 4294901760
        %5547 = vmatpush1.msra.mxu0 %v5546
        %v5548 = vand.u32 %v424, 4294901760
        %5549 = vmatprep.subr.mxu0 %v5548
        %v5550 = vand.u32 %v423, 4294901760
        %5551 = vmatpush1.msra.mxu0 %v5550
        %v5552 = vand.u32 %v428, 4294901760
        %5553 = vmatprep.subr.mxu0 %v5552
        %v5554 = vand.u32 %v427, 4294901760
        %5555 = vmatpush1.msra.mxu0 %v5554
        %v5556 = vand.u32 %v432, 4294901760
        %5557 = vmatprep.subr.mxu0 %v5556
        %v5558 = vand.u32 %v431, 4294901760
        %5559 = vmatpush1.msra.mxu0 %v5558
        %v5560 = vand.u32 %v436, 4294901760
        %5561 = vmatprep.subr.mxu0 %v5560
        %v5562 = vand.u32 %v435, 4294901760
        %5563 = vmatpush1.msra.mxu0 %v5562
        %v5564 = vand.u32 %v440, 4294901760
        %5565 = vmatprep.subr.mxu0 %v5564
        %v5566 = vand.u32 %v439, 4294901760
        %5567 = vmatpush1.msra.mxu0 %v5566
        %v5568 = vand.u32 %v444, 4294901760
        %5569 = vmatprep.subr.mxu0 %v5568
        %v5570 = vand.u32 %v443, 4294901760
        %5571 = vmatpush1.msra.mxu0 %v5570
        %v5572 = vand.u32 %v448, 4294901760
        %5573 = vmatprep.subr.mxu0 %v5572
        %v5574 = vand.u32 %v447, 4294901760
        %5575 = vmatpush1.msra.mxu0 %v5574
        %v5576 = vand.u32 %v452, 4294901760
        %5577 = vmatprep.subr.mxu0 %v5576
        %v5578 = vand.u32 %v451, 4294901760
        %5579 = vmatpush1.msra.mxu0 %v5578
        %v5580 = vand.u32 %v456, 4294901760
        %5581 = vmatprep.subr.mxu0 %v5580
        %v5582 = vand.u32 %v455, 4294901760
        %5583 = vmatpush1.msra.mxu0 %v5582
        %v5584 = vand.u32 %v460, 4294901760
        %5585 = vmatprep.subr.mxu0 %v5584
        %v5586 = vand.u32 %v459, 4294901760
        %5587 = vmatpush1.msra.mxu0 %v5586
        %v5588 = vand.u32 %v464, 4294901760
        %5589 = vmatprep.subr.mxu0 %v5588
        %v5590 = vand.u32 %v463, 4294901760
        %5591 = vmatpush1.msra.mxu0 %v5590
        %v5592 = vand.u32 %v468, 4294901760
        %5593 = vmatprep.subr.mxu0 %v5592
        %v5594 = vand.u32 %v467, 4294901760
        %5595 = vmatpush1.msra.mxu0 %v5594
        %v5596 = vand.u32 %v472, 4294901760
        %5597 = vmatprep.subr.mxu0 %v5596
        %v5598 = vand.u32 %v471, 4294901760
        %5599 = vmatpush1.msra.mxu0 %v5598
        %v5600 = vand.u32 %v216, 4294901760
        %5601 = vmatprep.mubr.f32.mxu0 %v5600
        %v5602 = vand.u32 %v215, 4294901760
        %5603 = vmatmul.mubr.f32.gmra.mrb[0].mxu0 %v5602
        %v5604 = vpop.f32.mrb[0].mxu0
        %v5605 = vadd.f32 %v5468, %v5604
        %v5606 = vpop.f32.mrb[0].mxu0
        %v5607 = vadd.f32 %v5470, %v5606
        %5608 = vdwg.mxu0
        %5609 = vst [vmem:[%s193] sm:$0xff] %v3037
        %5610 = vst [vmem:[%s193 + $0x8] sm:$0xff] %v3039
        %5611 = vst [vmem:[%s193 + $0x10] sm:$0xff] %v5605
        %5612 = vst [vmem:[%s193 + $0x18] sm:$0xff] %v5607
        %s5613 = sand.u32 %s91, 1
        %s5614 = scalar_lea.sflag [#allocation5], %s5613
        %s5615 = sand.u32 %s91, 1
        %s5616 = smul.addr %s5615, 32
        %s5617 = scalar_lea.vmem [#allocation8], %s5616
        // Predicated region
        $region37: #{tpu_custom_call.1} parent=27 // pred_check
          %p5618 = pneg %p101
        $region38: #{tpu_custom_call.1} parent=27 // pred_check_branch
          %5620 = sbr.rel (%p5618) target = $region40
        $region39: #{tpu_custom_call.1} parent=27 // pred_region
          %s5622 = ssub.s32 512, 512
          %5623 = vsyncadd %s5614, %s5622
          %s5624 = smul.addr %s25, 4
          %s5625 = smul.addr %s24, 4
          %s5626 = sadd.s32 %s5624, %s5625
          %s5627 = smul.addr %s5626, 128
          %s5628 = scalar_lea.hbm %s2, %s5627
          %s5630 = sshll.u32 %s5617, 4
          %s5631 = int_to_ptr.vmem [resolvable:$true] %s5630
          %5633 = dma.vmem_to_hbm [thread:$0]  %s5631, 512, %s5628, %s5614
        $region40: #{tpu_custom_call.1} parent=27 // pred_fallthru
          _
      $region28: #{tpu_custom_call.1} parent=5 // pred_fallthru
        _
      %p5634 = scmp.le.s32.totalorder 2, %s15
      // Predicated region
      $region41: #{tpu_custom_call.1} parent=5 // pred_check
        %p5635 = pneg %p5634
      $region42: #{tpu_custom_call.1} parent=5 // pred_check_branch
        %5637 = sbr.rel (%p5635) target = $region44
      $region43: #{tpu_custom_call.1} parent=5 // pred_region
        %s5638 = ssub.s32 %s15, 2
        // Predicated region
        $region45: #{tpu_custom_call.1} parent=43 // pred_check
          %p5639 = pneg %p107
        $region46: #{tpu_custom_call.1} parent=43 // pred_check_branch
          %5641 = sbr.rel (%p5639) target = $region48
        $region47: #{tpu_custom_call.1} parent=43 // pred_region
          %s5642 = sand.u32 %s92, 1
          %s5643 = scalar_lea.sflag [#allocation5], %s5642
          %s5644 = sand.u32 %s92, 1
          %s5645 = smul.addr %s5644, 32
          %s5646 = scalar_lea.vmem [#allocation8], %s5645
          %5647 = dma.done %s5643, 512
        $region48: #{tpu_custom_call.1} parent=43 // pred_fallthru
          _
      $region44: #{tpu_custom_call.1} parent=5 // pred_fallthru
        _
    $region6: #{tpu_custom_call.1} parent=1 // loop_footer
      %s19 = sadd.s32 1, %s15
    $region7: #{tpu_custom_call.1} parent=1 // loop_footer_branch
      %14 = sbr.rel target = $region3
    $region8: #{tpu_custom_call.1} parent=1 // loop_exit
      _
    %5648 = vsyncpa [#allocation4], 1
    %s5649 = scalar_lea.sflag [#allocation4], 1
    %5650 = vsyncpa %s5649, 1
    %5651 = vsyncpa [#allocation7], 1
    %5652 = vsyncpa [#allocation5], 1
    %s5653 = scalar_lea.sflag [#allocation5], 1
    %5654 = vsyncpa %s5653, 1

</llo_original>
